<compile_context>
chip_gen: v7x
topology: tpu7x:2x2x1
jax: 0.10.0
libtpu: 0.0.40
codegen_flags: <defaults>
</compile_context>

<pallas_src>
import jax
import jax.numpy as jnp
import numpy as np
from jax.experimental import pallas as pl
from jax.experimental.pallas import tpu as pltpu


# -----------------------------------------------------------------------------
# Fused Pallas kernel: conv1+relu, conv2+relu, fc1+relu, fc2 — all as 2-D matmuls
# -----------------------------------------------------------------------------
def _dqn_fused_kernel(x_ref, t1_ref, b1_ref, t2_ref, b2_ref,
                      w3_ref, b3_ref, w4_ref, b4_ref, o_ref):
    """x_ref: (TB, H*W*Cin) in compute dtype.  Weights pre-matricized (see prep).

    Every matmul accumulates in f32 (preferred_element_type); biases and ReLU are
    f32 on the VPU.  Intermediates never leave the kernel.
    """
    x = x_ref[...]

    # conv1 (+bias, ReLU) as a single MXU matmul against the block-Toeplitz weight.
    h = jnp.dot(x, t1_ref[...], preferred_element_type=jnp.float32)
    h = jnp.maximum(h + b1_ref[...], 0.0)                      # (TB, H1*W1*16) f32

    # conv2 (+bias, ReLU).
    h = jnp.dot(h.astype(t2_ref.dtype), t2_ref[...],
                preferred_element_type=jnp.float32)
    h = jnp.maximum(h + b2_ref[...], 0.0)                      # (TB, H2*W2*32) f32

    # fc1 (+bias, ReLU).  NCHW-flatten permutation is baked into w3's rows.
    h = jnp.dot(h.astype(w3_ref.dtype), w3_ref[...],
                preferred_element_type=jnp.float32)
    h = jnp.maximum(h + b3_ref[...], 0.0)                      # (TB, 64) f32

    # fc2 (Q-head, no activation).
    q = jnp.dot(h.astype(w4_ref.dtype), w4_ref[...],
                preferred_element_type=jnp.float32)
    o_ref[...] = (q + b4_ref[...]).astype(o_ref.dtype)         # (TB, n_actions)


# -----------------------------------------------------------------------------
# Wrapper
# -----------------------------------------------------------------------------
def dqn_forward(x_nhwc, prep):
    """x_nhwc: (B, board, board, n_frames) f32 -> Q-values (B, n_actions)."""
    B = x_nhwc.shape[0]
    f_in = prep["t1"].shape[0]
    n_actions = prep["b4"].shape[1]
    cdt = prep["t1"].dtype

    # NHWC per-batch flatten is row-major contiguous -> a free bitcast reshape in
    # XLA on the raw input (no intermediate activation traffic is introduced).
    x2d = x_nhwc.reshape(B, f_in).astype(cdt)

    tb = min(B, 128)                       # batch tile; grid shards it ("parallel")
    grid = (pl.cdiv(B, tb),)

    weights = [prep[k] for k in ("t1", "b1", "t2", "b2", "w3", "b3", "w4", "b4")]
    full_spec = lambda a: pl.BlockSpec(a.shape, lambda i: (0, 0))

    return pl.pallas_call(
        _dqn_fused_kernel,
        out_shape=jax.ShapeDtypeStruct((B, n_actions), jnp.float32),
        grid=grid,
        in_specs=[pl.BlockSpec((tb, f_in), lambda i: (i, 0))]
                 + [full_spec(a) for a in weights],
        out_specs=pl.BlockSpec((tb, n_actions), lambda i: (i, 0)),
        compiler_params=pltpu.CompilerParams(
            dimension_semantics=("parallel",),
            vmem_limit_bytes=48 * 1024 * 1024,
        ),
    )(x2d, *weights)


# -----------------------------------------------------------------------------
# Parameter preparation (one-time, outside the hot kernel):
#   * conv weights (OIHW) -> dense block-Toeplitz matrices (im2col folded in)
#   * fc1 rows permuted from torch's NCHW-flatten order to our HWC lane order
#   * biases broadcast to lane rows
# -----------------------------------------------------------------------------
def _conv_to_matrix(w_oihw, h_in, w_in):
    """(Cout,Cin,KH,KW) valid/stride-1 conv -> (Hin*Win*Cin, Hout*Wout*Cout)."""
    c_out, c_in, kh_n, kw_n = w_oihw.shape
    h_out, w_out = h_in - kh_n + 1, w_in - kw_n + 1
    f_in, f_out = h_in * w_in * c_in, h_out * w_out * c_out

    i = jnp.arange(f_in)
    hi, wi, ci = i // (w_in * c_in), (i // c_in) % w_in, i % c_in
    j = jnp.arange(f_out)
    ho, wo, co = j // (w_out * c_out), (j // c_out) % w_out, j % c_out

    kh = hi[:, None] - ho[None, :]
    kw = wi[:, None] - wo[None, :]
    valid = (kh >= 0) & (kh < kh_n) & (kw >= 0) & (kw < kw_n)
    vals = w_oihw[co[None, :], ci[:, None],
                  jnp.clip(kh, 0, kh_n - 1), jnp.clip(kw, 0, kw_n - 1)]
    return jnp.where(valid, vals, 0.0)


def prepare_params(params, board_size, compute_dtype=jnp.float32):
    c1 = params["conv1_w"].shape[0]
    c2 = params["conv2_w"].shape[0]
    h0 = w0 = board_size
    h1 = w1 = board_size - 2
    h2 = w2 = board_size - 4

    t1 = _conv_to_matrix(params["conv1_w"], h0, w0)            # (H0*W0*Cin, H1*W1*16)
    t2 = _conv_to_matrix(params["conv2_w"], h1, w1)            # (H1*W1*16, H2*W2*32)

    # fc1: torch rows are indexed c*(H2*W2)+h*W2+w (NCHW flatten); our conv2 output
    # lane index is (h*W2+w)*C2+c.  Permute once here -> zero runtime cost.
    w3 = (params["fc1_w"].T
          .reshape(c2, h2, w2, -1)
          .transpose(1, 2, 0, 3)
          .reshape(h2 * w2 * c2, -1))
    w4 = params["fc2_w"].T

    return {
        "t1": t1.astype(compute_dtype),
        "b1": jnp.tile(params["conv1_b"], h1 * w1)[None, :].astype(jnp.float32),
        "t2": t2.astype(compute_dtype),
        "b2": jnp.tile(params["conv2_b"], h2 * w2)[None, :].astype(jnp.float32),
        "w3": w3.astype(compute_dtype),
        "b3": params["fc1_b"][None, :].astype(jnp.float32),
        "w4": w4.astype(compute_dtype),
        "b4": params["fc2_b"][None, :].astype(jnp.float32),
    }


# -----------------------------------------------------------------------------
# Pure-JAX reference with exact torch semantics (NCHW conv, NCHW flatten, x@W.T)
# -----------------------------------------------------------------------------
def reference_forward(x_nhwc, params):
    x = jnp.transpose(x_nhwc, (0, 3, 1, 2))                    # NCHW, like .permute

    def conv(x, w, b):
        y = jax.lax.conv_general_dilated(
            x, w, window_strides=(1, 1), padding="VALID",
            dimension_numbers=("NCHW", "OIHW", "NCHW"))
        return jnp.maximum(y + b[None, :, None, None], 0.0)

    h = conv(x, params["conv1_w"], params["conv1_b"])
    h = conv(h, params["conv2_w"], params["conv2_b"])
    h = h.reshape(h.shape[0], -1)                               # NCHW flatten
    h = jnp.maximum(h @ params["fc1_w"].T + params["fc1_b"], 0.0)
    return h @ params["fc2_w"].T + params["fc2_b"]


# -----------------------------------------------------------------------------
# Deterministic init (torch-style layouts) + driver
# -----------------------------------------------------------------------------
def init_params(key, board_size, n_frames, n_actions):
    c1, c2, hidden = 16, 32, 64
    flat = c2 * (board_size - 4) * (board_size - 4)
    ks = jax.random.split(key, 8)
    mk = lambda k, shape, s: (s * jax.random.normal(k, shape)).astype(jnp.float32)
    return {
        "conv1_w": mk(ks[0], (c1, n_frames, 3, 3), 0.1),
        "conv1_b": mk(ks[1], (c1,), 0.1),
        "conv2_w": mk(ks[2], (c2, c1, 3, 3), 0.1),
        "conv2_b": mk(ks[3], (c2,), 0.1),
        "fc1_w":   mk(ks[4], (hidden, flat), 0.05),
        "fc1_b":   mk(ks[5], (hidden,), 0.05),
        "fc2_w":   mk(ks[6], (n_actions, hidden), 0.05),
        "fc2_b":   mk(ks[7], (n_actions,), 0.05),
    }


if __name__ == "__main__":
    board_size, n_frames, n_actions, batch = 10, 2, 4, 2

    root = jax.random.PRNGKey(0)
    k_params, k_x = jax.random.split(root)
    params = init_params(k_params, board_size, n_frames, n_actions)
    x = jax.random.uniform(k_x, (batch, board_size, board_size, n_frames),
                           dtype=jnp.float32)

    q_ref = reference_forward(x, params)

    # f32 path (v5e-safe), tight tolerance.
    prep_f32 = prepare_params(params, board_size, compute_dtype=jnp.float32)
    q = jax.block_until_ready(jax.jit(dqn_forward)(x, prep_f32))
    np.testing.assert_allclose(np.asarray(q), np.asarray(q_ref),
                               rtol=1e-4, atol=1e-4)

    # bf16 MXU operands (v6e/v7x), f32 accumulation — looser tolerance.
    prep_bf16 = prepare_params(params, board_size, compute_dtype=jnp.bfloat16)
    q16 = jax.block_until_ready(jax.jit(dqn_forward)(x, prep_bf16))
    np.testing.assert_allclose(np.asarray(q16), np.asarray(q_ref),
                               rtol=5e-2, atol=5e-2)

    assert q.shape == (batch, n_actions)
    print("KERNEL_OK")
</pallas_src>

<mosaic_0001>
module attributes {stable_mosaic.version = 11 : i64} {
  func.func @_dqn_fused_kernel(%arg0: i32, %arg1: memref<2x200xf32, #tpu.memory_space<vmem>>, %arg2: memref<200x1024xf32, #tpu.memory_space<vmem>>, %arg3: memref<1x1024xf32, #tpu.memory_space<vmem>>, %arg4: memref<1024x1152xf32, #tpu.memory_space<vmem>>, %arg5: memref<1x1152xf32, #tpu.memory_space<vmem>>, %arg6: memref<1152x64xf32, #tpu.memory_space<vmem>>, %arg7: memref<1x64xf32, #tpu.memory_space<vmem>>, %arg8: memref<64x4xf32, #tpu.memory_space<vmem>>, %arg9: memref<1x4xf32, #tpu.memory_space<vmem>>, %arg10: memref<2x4xf32, #tpu.memory_space<vmem>>) attributes {dimension_semantics = [#tpu.dimension_semantics<parallel>], iteration_bounds = array<i64: 1>, scalar_prefetch = 0 : i64, scratch_operands = 0 : i64, tpu.core_type = #tpu.core_type<tc>, window_params = [{transform_indices = @transform_0, window_bounds = array<i64: 2, 200>}, {pipeline_mode = #tpu.pipeline_mode<synchronous>, transform_indices = @transform_1, window_bounds = array<i64: 200, 1024>}, {pipeline_mode = #tpu.pipeline_mode<synchronous>, transform_indices = @transform_2, window_bounds = array<i64: 1, 1024>}, {pipeline_mode = #tpu.pipeline_mode<synchronous>, transform_indices = @transform_3, window_bounds = array<i64: 1024, 1152>}, {pipeline_mode = #tpu.pipeline_mode<synchronous>, transform_indices = @transform_4, window_bounds = array<i64: 1, 1152>}, {pipeline_mode = #tpu.pipeline_mode<synchronous>, transform_indices = @transform_5, window_bounds = array<i64: 1152, 64>}, {pipeline_mode = #tpu.pipeline_mode<synchronous>, transform_indices = @transform_6, window_bounds = array<i64: 1, 64>}, {pipeline_mode = #tpu.pipeline_mode<synchronous>, transform_indices = @transform_7, window_bounds = array<i64: 64, 4>}, {pipeline_mode = #tpu.pipeline_mode<synchronous>, transform_indices = @transform_8, window_bounds = array<i64: 1, 4>}, {transform_indices = @transform_9, window_bounds = array<i64: 2, 4>}]} {
    %c0 = arith.constant 0 : index
    %c0_0 = arith.constant 0 : index
    %0 = vector.load %arg1[%c0, %c0_0] : memref<2x200xf32, #tpu.memory_space<vmem>>, vector<2x200xf32>
    %c0_1 = arith.constant 0 : index
    %c0_2 = arith.constant 0 : index
    %1 = vector.load %arg2[%c0_1, %c0_2] : memref<200x1024xf32, #tpu.memory_space<vmem>>, vector<200x1024xf32>
    %cst = arith.constant dense<0.000000e+00> : vector<2x1024xf32>
    %2 = tpu.matmul %0, %1, %cst {dimension_numbers = #tpu.dot_dimension_numbers<[1], [0], [0], [1], [0, 0, 1, 1], [], []>} : vector<2x200xf32>, vector<200x1024xf32>, vector<2x1024xf32> -> vector<2x1024xf32>
    %c0_3 = arith.constant 0 : index
    %c0_4 = arith.constant 0 : index
    %3 = vector.load %arg3[%c0_3, %c0_4] : memref<1x1024xf32, #tpu.memory_space<vmem>>, vector<1x1024xf32>
    %4 = vector.broadcast %3 : vector<1x1024xf32> to vector<2x1024xf32>
    %5 = arith.addf %2, %4 : vector<2x1024xf32>
    %cst_5 = arith.constant 0.000000e+00 : f32
    %6 = vector.broadcast %cst_5 : f32 to vector<2x1024xf32>
    %7 = arith.maximumf %5, %6 : vector<2x1024xf32>
    %c0_6 = arith.constant 0 : index
    %c0_7 = arith.constant 0 : index
    %8 = vector.load %arg4[%c0_6, %c0_7] : memref<1024x1152xf32, #tpu.memory_space<vmem>>, vector<1024x1152xf32>
    %cst_8 = arith.constant dense<0.000000e+00> : vector<2x1152xf32>
    %9 = tpu.matmul %7, %8, %cst_8 {dimension_numbers = #tpu.dot_dimension_numbers<[1], [0], [0], [1], [0, 0, 1, 1], [], []>} : vector<2x1024xf32>, vector<1024x1152xf32>, vector<2x1152xf32> -> vector<2x1152xf32>
    %c0_9 = arith.constant 0 : index
    %c0_10 = arith.constant 0 : index
    %10 = vector.load %arg5[%c0_9, %c0_10] : memref<1x1152xf32, #tpu.memory_space<vmem>>, vector<1x1152xf32>
    %11 = vector.broadcast %10 : vector<1x1152xf32> to vector<2x1152xf32>
    %12 = arith.addf %9, %11 : vector<2x1152xf32>
    %cst_11 = arith.constant 0.000000e+00 : f32
    %13 = vector.broadcast %cst_11 : f32 to vector<2x1152xf32>
    %14 = arith.maximumf %12, %13 : vector<2x1152xf32>
    %c0_12 = arith.constant 0 : index
    %c0_13 = arith.constant 0 : index
    %15 = vector.load %arg6[%c0_12, %c0_13] : memref<1152x64xf32, #tpu.memory_space<vmem>>, vector<1152x64xf32>
    %cst_14 = arith.constant dense<0.000000e+00> : vector<2x64xf32>
    %16 = tpu.matmul %14, %15, %cst_14 {dimension_numbers = #tpu.dot_dimension_numbers<[1], [0], [0], [1], [0, 0, 1, 1], [], []>} : vector<2x1152xf32>, vector<1152x64xf32>, vector<2x64xf32> -> vector<2x64xf32>
    %c0_15 = arith.constant 0 : index
    %c0_16 = arith.constant 0 : index
    %17 = vector.load %arg7[%c0_15, %c0_16] : memref<1x64xf32, #tpu.memory_space<vmem>>, vector<1x64xf32>
    %18 = vector.broadcast %17 : vector<1x64xf32> to vector<2x64xf32>
    %19 = arith.addf %16, %18 : vector<2x64xf32>
    %cst_17 = arith.constant 0.000000e+00 : f32
    %20 = vector.broadcast %cst_17 : f32 to vector<2x64xf32>
    %21 = arith.maximumf %19, %20 : vector<2x64xf32>
    %c0_18 = arith.constant 0 : index
    %c0_19 = arith.constant 0 : index
    %22 = vector.load %arg8[%c0_18, %c0_19] : memref<64x4xf32, #tpu.memory_space<vmem>>, vector<64x4xf32>
    %cst_20 = arith.constant dense<0.000000e+00> : vector<2x4xf32>
    %23 = tpu.matmul %21, %22, %cst_20 {dimension_numbers = #tpu.dot_dimension_numbers<[1], [0], [0], [1], [0, 0, 1, 1], [], []>} : vector<2x64xf32>, vector<64x4xf32>, vector<2x4xf32> -> vector<2x4xf32>
    %c0_21 = arith.constant 0 : index
    %c0_22 = arith.constant 0 : index
    %24 = vector.load %arg9[%c0_21, %c0_22] : memref<1x4xf32, #tpu.memory_space<vmem>>, vector<1x4xf32>
    %25 = vector.broadcast %24 : vector<1x4xf32> to vector<2x4xf32>
    %26 = arith.addf %23, %25 : vector<2x4xf32>
    %c0_23 = arith.constant 0 : index
    %c0_24 = arith.constant 0 : index
    %27 = vector.load %arg10[%c0_23, %c0_24] : memref<2x4xf32, #tpu.memory_space<vmem>>, vector<2x4xf32>
    tpu.vector_store %arg10[%c0_23, %c0_24], %26 {strides = array<i32>} : memref<2x4xf32, #tpu.memory_space<vmem>>, vector<2x4xf32>,
    return
  }
  func.func @transform_0(%arg0: i32) -> (i32, i32) {
    %c0_i32 = arith.constant 0 : i32
    %c0_i32_0 = arith.constant 0 : i32
    return %arg0, %c0_i32 : i32, i32
  }
  func.func @transform_1(%arg0: i32) -> (i32, i32) {
    %c0_i32 = arith.constant 0 : i32
    %c0_i32_0 = arith.constant 0 : i32
    %c0_i32_1 = arith.constant 0 : i32
    return %c0_i32, %c0_i32_0 : i32, i32
  }
  func.func @transform_2(%arg0: i32) -> (i32, i32) {
    %c0_i32 = arith.constant 0 : i32
    %c0_i32_0 = arith.constant 0 : i32
    %c0_i32_1 = arith.constant 0 : i32
    return %c0_i32, %c0_i32_0 : i32, i32
  }
  func.func @transform_3(%arg0: i32) -> (i32, i32) {
    %c0_i32 = arith.constant 0 : i32
    %c0_i32_0 = arith.constant 0 : i32
    %c0_i32_1 = arith.constant 0 : i32
    return %c0_i32, %c0_i32_0 : i32, i32
  }
  func.func @transform_4(%arg0: i32) -> (i32, i32) {
    %c0_i32 = arith.constant 0 : i32
    %c0_i32_0 = arith.constant 0 : i32
    %c0_i32_1 = arith.constant 0 : i32
    return %c0_i32, %c0_i32_0 : i32, i32
  }
  func.func @transform_5(%arg0: i32) -> (i32, i32) {
    %c0_i32 = arith.constant 0 : i32
    %c0_i32_0 = arith.constant 0 : i32
    %c0_i32_1 = arith.constant 0 : i32
    return %c0_i32, %c0_i32_0 : i32, i32
  }
  func.func @transform_6(%arg0: i32) -> (i32, i32) {
    %c0_i32 = arith.constant 0 : i32
    %c0_i32_0 = arith.constant 0 : i32
    %c0_i32_1 = arith.constant 0 : i32
    return %c0_i32, %c0_i32_0 : i32, i32
  }
  func.func @transform_7(%arg0: i32) -> (i32, i32) {
    %c0_i32 = arith.constant 0 : i32
    %c0_i32_0 = arith.constant 0 : i32
    %c0_i32_1 = arith.constant 0 : i32
    return %c0_i32, %c0_i32_0 : i32, i32
  }
  func.func @transform_8(%arg0: i32) -> (i32, i32) {
    %c0_i32 = arith.constant 0 : i32
    %c0_i32_0 = arith.constant 0 : i32
    %c0_i32_1 = arith.constant 0 : i32
    return %c0_i32, %c0_i32_0 : i32, i32
  }
  func.func @transform_9(%arg0: i32) -> (i32, i32) {
    %c0_i32 = arith.constant 0 : i32
    %c0_i32_0 = arith.constant 0 : i32
    return %arg0, %c0_i32 : i32, i32
  }
}

</mosaic_0001>

<llo_original>
// kernel: dqn_forward.1
$region0: #{dqn_forward.1}
  #allocation0 [shape = 'u32[]', space=smem, size = 0x4, offset = 0x4, fixed_abs, tag = 'smem constant byte address 0x4 - core index']
  #allocation1 [shape = 'u32[144,128]{1,0:T(1,128)}', space=vmem, size = 0x12000, scoped, tag = 'internal scratch']
  %s0 = inlined_call_operand.vmem [shape: f32[2,200], index: 0, kind: input, shape index: {}]
  %s1 = inlined_call_operand.hbm [shape: f32[200,1024], index: 1, kind: input, shape index: {}]
  %s2 = inlined_call_operand.hbm [shape: f32[1,1024], index: 2, kind: input, shape index: {}]
  %s3 = inlined_call_operand.hbm [shape: f32[1024,1152], index: 3, kind: input, shape index: {}]
  %s4 = inlined_call_operand.hbm [shape: f32[1,1152], index: 4, kind: input, shape index: {}]
  %s5 = inlined_call_operand.vmem [shape: f32[1152,64], index: 5, kind: input, shape index: {}]
  %s6 = inlined_call_operand.hbm [shape: f32[1,64], index: 6, kind: input, shape index: {}]
  %s7 = inlined_call_operand.vmem [shape: f32[64,4], index: 7, kind: input, shape index: {}]
  %s8 = inlined_call_operand.hbm [shape: f32[1,4], index: 8, kind: input, shape index: {}]
  %s9 = inlined_call_operand.hbm [shape: f32[2,4], index: 9, kind: output, shape index: {}]
  %s10 = sld [smem:[#allocation0]]
  $region70: #{dqn_forward.1} parent=0
    _
  %s12 = ssub.s32 1, %s10
  %s13 = scalar_select 0, %s12, %s10
  $region1: #{dqn_forward.1} parent=0
    #allocation2 [shape = 'u8[819200]{0}', space=vmem, size = 0xc8000, scoped, tag = 'input window, operand 1, single buffered']
    #allocation3 [shape = 's32[1]{0}', space=sflag, size = 0x4, scoped, tag = 'scoped memory for dqn_forward.1']
    #allocation4 [shape = 's32[1]{0}', space=sflag, size = 0x4, scoped, tag = 'scoped memory for dqn_forward.1']
    #allocation5 [shape = 'u8[4096]{0}', space=vmem, size = 0x1000, scoped, tag = 'input window, operand 2, single buffered']
    #allocation6 [shape = 's32[1]{0}', space=sflag, size = 0x4, scoped, tag = 'scoped memory for dqn_forward.1']
    #allocation7 [shape = 'u8[4718592]{0}', space=vmem, size = 0x480000, scoped, tag = 'input window, operand 3, single buffered']
    #allocation8 [shape = 'u8[4608]{0}', space=vmem, size = 0x1400, scoped, tag = 'input window, operand 4, single buffered']
    #allocation9 [shape = 's32[1]{0}', space=sflag, size = 0x4, scoped, tag = 'scoped memory for dqn_forward.1']
    #allocation10 [shape = 'u8[512]{0}', space=vmem, size = 0x400, scoped, tag = 'input window, operand 6, single buffered']
    #allocation11 [shape = 'u8[512]{0}', space=vmem, size = 0x400, scoped, tag = 'input window, operand 8, single buffered']
    #allocation12 [shape = 's32[1]{0}', space=sflag, size = 0x4, scoped, tag = 'scoped memory for dqn_forward.1']
    #allocation13 [shape = 'u8[1024]{0}', space=vmem, size = 0x400, scoped, tag = 'output window, operand 0, single buffered']
    %14 = vsyncpa [#allocation3], 0
    %15 = vsyncpa [#allocation6], 0
    %16 = vsyncpa [#allocation9], 0
    %17 = vsyncpa [#allocation12], 0
    %18 = vsyncpa [#allocation4], 0
    // Predicated region
    $region2: #{dqn_forward.1} parent=1 // pred_check
      _
    $region3: #{dqn_forward.1} parent=1 // pred_check_branch
      %20 = sbr.rel (0) target = $region5
    $region4: #{dqn_forward.1} parent=1 // pred_region
      _
    $region5: #{dqn_forward.1} parent=1 // pred_fallthru
      _
    // Predicated region
    $region6: #{dqn_forward.1} parent=1 // pred_check
      _
    $region7: #{dqn_forward.1} parent=1 // pred_check_branch
      %22 = sbr.rel (0) target = $region9
    $region8: #{dqn_forward.1} parent=1 // pred_region
      %s24 = ssub.s32 25600, 25600
      %25 = vsyncadd [#allocation3], %s24
      %s26 = sshll.u32 [#allocation2], 4
      %s27 = int_to_ptr.vmem [resolvable:$true] %s26
      %32 = dma.hbm_to_vmem [thread:$0]  %s1, 25600, %s27, [#allocation3], 1024, 1024, 64
    $region9: #{dqn_forward.1} parent=1 // pred_fallthru
      _
    // Predicated region
    $region10: #{dqn_forward.1} parent=1 // pred_check
      _
    $region11: #{dqn_forward.1} parent=1 // pred_check_branch
      %34 = sbr.rel (0) target = $region13
    $region12: #{dqn_forward.1} parent=1 // pred_region
      %s36 = ssub.s32 128, 128
      %37 = vsyncadd [#allocation6], %s36
      %s39 = sshll.u32 [#allocation5], 4
      %s40 = int_to_ptr.vmem [resolvable:$true] %s39
      %42 = dma.hbm_to_vmem [thread:$0]  %s2, 128, %s40, [#allocation6]
    $region13: #{dqn_forward.1} parent=1 // pred_fallthru
      _
    // Predicated region
    $region14: #{dqn_forward.1} parent=1 // pred_check
      _
    $region15: #{dqn_forward.1} parent=1 // pred_check_branch
      %44 = sbr.rel (0) target = $region17
    $region16: #{dqn_forward.1} parent=1 // pred_region
      %s46 = ssub.s32 147456, 147456
      %47 = vsyncadd [#allocation6], %s46
      %s48 = sshll.u32 [#allocation7], 4
      %s49 = int_to_ptr.vmem [resolvable:$true] %s48
      %54 = dma.hbm_to_vmem [thread:$0]  %s3, 147456, %s49, [#allocation6], 1152, 1152, 72
    $region17: #{dqn_forward.1} parent=1 // pred_fallthru
      _
    // Predicated region
    $region18: #{dqn_forward.1} parent=1 // pred_check
      _
    $region19: #{dqn_forward.1} parent=1 // pred_check_branch
      %56 = sbr.rel (0) target = $region21
    $region20: #{dqn_forward.1} parent=1 // pred_region
      %s58 = ssub.s32 144, 144
      %59 = vsyncadd [#allocation9], %s58
      %s61 = sshll.u32 [#allocation8], 4
      %s62 = int_to_ptr.vmem [resolvable:$true] %s61
      %64 = dma.hbm_to_vmem [thread:$0]  %s4, 144, %s62, [#allocation9]
    $region21: #{dqn_forward.1} parent=1 // pred_fallthru
      _
    // Predicated region
    $region22: #{dqn_forward.1} parent=1 // pred_check
      _
    $region23: #{dqn_forward.1} parent=1 // pred_check_branch
      %66 = sbr.rel (0) target = $region25
    $region24: #{dqn_forward.1} parent=1 // pred_region
      _
    $region25: #{dqn_forward.1} parent=1 // pred_fallthru
      _
    // Predicated region
    $region26: #{dqn_forward.1} parent=1 // pred_check
      _
    $region27: #{dqn_forward.1} parent=1 // pred_check_branch
      %68 = sbr.rel (0) target = $region29
    $region28: #{dqn_forward.1} parent=1 // pred_region
      %s70 = ssub.s32 16, 16
      %71 = vsyncadd [#allocation9], %s70
      %s73 = sshll.u32 [#allocation10], 4
      %s74 = int_to_ptr.vmem [resolvable:$true] %s73
      %76 = dma.hbm_to_vmem [thread:$0]  %s6, 16, %s74, [#allocation9]
    $region29: #{dqn_forward.1} parent=1 // pred_fallthru
      _
    // Predicated region
    $region30: #{dqn_forward.1} parent=1 // pred_check
      _
    $region31: #{dqn_forward.1} parent=1 // pred_check_branch
      %78 = sbr.rel (0) target = $region33
    $region32: #{dqn_forward.1} parent=1 // pred_region
      _
    $region33: #{dqn_forward.1} parent=1 // pred_fallthru
      _
    // Predicated region
    $region34: #{dqn_forward.1} parent=1 // pred_check
      _
    $region35: #{dqn_forward.1} parent=1 // pred_check_branch
      %80 = sbr.rel (0) target = $region37
    $region36: #{dqn_forward.1} parent=1 // pred_region
      %s82 = ssub.s32 16, 16
      %83 = vsyncadd [#allocation12], %s82
      %s85 = sshll.u32 [#allocation11], 4
      %s86 = int_to_ptr.vmem [resolvable:$true] %s85
      %88 = dma.hbm_to_vmem [thread:$0]  %s8, 16, %s86, [#allocation12]
    $region37: #{dqn_forward.1} parent=1 // pred_fallthru
      _
    // Predicated region
    $region38: #{dqn_forward.1} parent=1 // pred_check
      _
    $region39: #{dqn_forward.1} parent=1 // pred_check_branch
      %90 = sbr.rel (0) target = $region41
    $region40: #{dqn_forward.1} parent=1 // pred_region
      %91 = dma.done [#allocation3], 25600
    $region41: #{dqn_forward.1} parent=1 // pred_fallthru
      _
    // Predicated region
    $region42: #{dqn_forward.1} parent=1 // pred_check
      _
    $region43: #{dqn_forward.1} parent=1 // pred_check_branch
      %93 = sbr.rel (0) target = $region45
    $region44: #{dqn_forward.1} parent=1 // pred_region
      %94 = dma.done [#allocation6], 128
    $region45: #{dqn_forward.1} parent=1 // pred_fallthru
      _
    // Predicated region
    $region46: #{dqn_forward.1} parent=1 // pred_check
      _
    $region47: #{dqn_forward.1} parent=1 // pred_check_branch
      %96 = sbr.rel (0) target = $region49
    $region48: #{dqn_forward.1} parent=1 // pred_region
      %97 = dma.done [#allocation6], 147456
    $region49: #{dqn_forward.1} parent=1 // pred_fallthru
      _
    // Predicated region
    $region50: #{dqn_forward.1} parent=1 // pred_check
      _
    $region51: #{dqn_forward.1} parent=1 // pred_check_branch
      %99 = sbr.rel (0) target = $region53
    $region52: #{dqn_forward.1} parent=1 // pred_region
      %100 = dma.done [#allocation9], 144
    $region53: #{dqn_forward.1} parent=1 // pred_fallthru
      _
    // Predicated region
    $region54: #{dqn_forward.1} parent=1 // pred_check
      _
    $region55: #{dqn_forward.1} parent=1 // pred_check_branch
      %102 = sbr.rel (0) target = $region57
    $region56: #{dqn_forward.1} parent=1 // pred_region
      %103 = dma.done [#allocation9], 16
    $region57: #{dqn_forward.1} parent=1 // pred_fallthru
      _
    // Predicated region
    $region58: #{dqn_forward.1} parent=1 // pred_check
      _
    $region59: #{dqn_forward.1} parent=1 // pred_check_branch
      %105 = sbr.rel (0) target = $region61
    $region60: #{dqn_forward.1} parent=1 // pred_region
      %106 = dma.done [#allocation12], 16
    $region61: #{dqn_forward.1} parent=1 // pred_fallthru
      _
    %v107 = vld [vmem:[%s0] sm:$0xf]
    %v108 = vld [vmem:[#allocation2] sm:$0xff]
    %v109 = vld [vmem:[#allocation2 + $0x8] sm:$0xff]
    %v110 = vld [vmem:[#allocation2 + $0x10] sm:$0xff]
    %v111 = vld [vmem:[#allocation2 + $0x18] sm:$0xff]
    %v112 = vld [vmem:[#allocation2 + $0x20] sm:$0xff]
    %v113 = vld [vmem:[#allocation2 + $0x28] sm:$0xff]
    %v114 = vld [vmem:[#allocation2 + $0x30] sm:$0xff]
    %v115 = vld [vmem:[#allocation2 + $0x38] sm:$0xff]
    %v116 = vld [vmem:[#allocation2 + $0x40] sm:$0xff]
    %v117 = vld [vmem:[#allocation2 + $0x48] sm:$0xff]
    %v118 = vld [vmem:[#allocation2 + $0x50] sm:$0xff]
    %v119 = vld [vmem:[#allocation2 + $0x58] sm:$0xff]
    %v120 = vld [vmem:[#allocation2 + $0x60] sm:$0xff]
    %v121 = vld [vmem:[#allocation2 + $0x68] sm:$0xff]
    %v122 = vld [vmem:[#allocation2 + $0x70] sm:$0xff]
    %v123 = vld [vmem:[#allocation2 + $0x78] sm:$0xff]
    %v124 = vld [vmem:[#allocation2 + $0x80] sm:$0xff]
    %v125 = vld [vmem:[#allocation2 + $0x88] sm:$0xff]
    %v126 = vld [vmem:[#allocation2 + $0x90] sm:$0xff]
    %v127 = vld [vmem:[#allocation2 + $0x98] sm:$0xff]
    %v128 = vld [vmem:[#allocation2 + $0xa0] sm:$0xff]
    %v129 = vld [vmem:[#allocation2 + $0xa8] sm:$0xff]
    %v130 = vld [vmem:[#allocation2 + $0xb0] sm:$0xff]
    %v131 = vld [vmem:[#allocation2 + $0xb8] sm:$0xff]
    %v132 = vld [vmem:[#allocation2 + $0xc0] sm:$0xff]
    %v133 = vld [vmem:[#allocation2 + $0xc8] sm:$0xff]
    %v134 = vld [vmem:[#allocation2 + $0xd0] sm:$0xff]
    %v135 = vld [vmem:[#allocation2 + $0xd8] sm:$0xff]
    %v136 = vld [vmem:[#allocation2 + $0xe0] sm:$0xff]
    %v137 = vld [vmem:[#allocation2 + $0xe8] sm:$0xff]
    %v138 = vld [vmem:[#allocation2 + $0xf0] sm:$0xff]
    %v139 = vld [vmem:[#allocation2 + $0xf8] sm:$0xff]
    %v140 = vld [vmem:[#allocation2 + $0x100] sm:$0xff]
    %v141 = vld [vmem:[#allocation2 + $0x108] sm:$0xff]
    %v142 = vld [vmem:[#allocation2 + $0x110] sm:$0xff]
    %v143 = vld [vmem:[#allocation2 + $0x118] sm:$0xff]
    %v144 = vld [vmem:[#allocation2 + $0x120] sm:$0xff]
    %v145 = vld [vmem:[#allocation2 + $0x128] sm:$0xff]
    %v146 = vld [vmem:[#allocation2 + $0x130] sm:$0xff]
    %v147 = vld [vmem:[#allocation2 + $0x138] sm:$0xff]
    %v148 = vld [vmem:[#allocation2 + $0x140] sm:$0xff]
    %v149 = vld [vmem:[#allocation2 + $0x148] sm:$0xff]
    %v150 = vld [vmem:[#allocation2 + $0x150] sm:$0xff]
    %v151 = vld [vmem:[#allocation2 + $0x158] sm:$0xff]
    %v152 = vld [vmem:[#allocation2 + $0x160] sm:$0xff]
    %v153 = vld [vmem:[#allocation2 + $0x168] sm:$0xff]
    %v154 = vld [vmem:[#allocation2 + $0x170] sm:$0xff]
    %v155 = vld [vmem:[#allocation2 + $0x178] sm:$0xff]
    %v156 = vld [vmem:[#allocation2 + $0x180] sm:$0xff]
    %v157 = vld [vmem:[#allocation2 + $0x188] sm:$0xff]
    %v158 = vld [vmem:[#allocation2 + $0x190] sm:$0xff]
    %v159 = vld [vmem:[#allocation2 + $0x198] sm:$0xff]
    %v160 = vld [vmem:[#allocation2 + $0x1a0] sm:$0xff]
    %v161 = vld [vmem:[#allocation2 + $0x1a8] sm:$0xff]
    %v162 = vld [vmem:[#allocation2 + $0x1b0] sm:$0xff]
    %v163 = vld [vmem:[#allocation2 + $0x1b8] sm:$0xff]
    %v164 = vld [vmem:[#allocation2 + $0x1c0] sm:$0xff]
    %v165 = vld [vmem:[#allocation2 + $0x1c8] sm:$0xff]
    %v166 = vld [vmem:[#allocation2 + $0x1d0] sm:$0xff]
    %v167 = vld [vmem:[#allocation2 + $0x1d8] sm:$0xff]
    %v168 = vld [vmem:[#allocation2 + $0x1e0] sm:$0xff]
    %v169 = vld [vmem:[#allocation2 + $0x1e8] sm:$0xff]
    %v170 = vld [vmem:[#allocation2 + $0x1f0] sm:$0xff]
    %v171 = vld [vmem:[#allocation2 + $0x1f8] sm:$0xff]
    %v172 = vld [vmem:[#allocation2 + $0x200] sm:$0xff]
    %v173 = vld [vmem:[#allocation2 + $0x208] sm:$0xff]
    %v174 = vld [vmem:[#allocation2 + $0x210] sm:$0xff]
    %v175 = vld [vmem:[#allocation2 + $0x218] sm:$0xff]
    %v176 = vld [vmem:[#allocation2 + $0x220] sm:$0xff]
    %v177 = vld [vmem:[#allocation2 + $0x228] sm:$0xff]
    %v178 = vld [vmem:[#allocation2 + $0x230] sm:$0xff]
    %v179 = vld [vmem:[#allocation2 + $0x238] sm:$0xff]
    %v180 = vld [vmem:[#allocation2 + $0x240] sm:$0xff]
    %v181 = vld [vmem:[#allocation2 + $0x248] sm:$0xff]
    %v182 = vld [vmem:[#allocation2 + $0x250] sm:$0xff]
    %v183 = vld [vmem:[#allocation2 + $0x258] sm:$0xff]
    %v184 = vld [vmem:[#allocation2 + $0x260] sm:$0xff]
    %v185 = vld [vmem:[#allocation2 + $0x268] sm:$0xff]
    %v186 = vld [vmem:[#allocation2 + $0x270] sm:$0xff]
    %v187 = vld [vmem:[#allocation2 + $0x278] sm:$0xff]
    %v188 = vld [vmem:[#allocation2 + $0x280] sm:$0xff]
    %v189 = vld [vmem:[#allocation2 + $0x288] sm:$0xff]
    %v190 = vld [vmem:[#allocation2 + $0x290] sm:$0xff]
    %v191 = vld [vmem:[#allocation2 + $0x298] sm:$0xff]
    %v192 = vld [vmem:[#allocation2 + $0x2a0] sm:$0xff]
    %v193 = vld [vmem:[#allocation2 + $0x2a8] sm:$0xff]
    %v194 = vld [vmem:[#allocation2 + $0x2b0] sm:$0xff]
    %v195 = vld [vmem:[#allocation2 + $0x2b8] sm:$0xff]
    %v196 = vld [vmem:[#allocation2 + $0x2c0] sm:$0xff]
    %v197 = vld [vmem:[#allocation2 + $0x2c8] sm:$0xff]
    %v198 = vld [vmem:[#allocation2 + $0x2d0] sm:$0xff]
    %v199 = vld [vmem:[#allocation2 + $0x2d8] sm:$0xff]
    %v200 = vld [vmem:[#allocation2 + $0x2e0] sm:$0xff]
    %v201 = vld [vmem:[#allocation2 + $0x2e8] sm:$0xff]
    %v202 = vld [vmem:[#allocation2 + $0x2f0] sm:$0xff]
    %v203 = vld [vmem:[#allocation2 + $0x2f8] sm:$0xff]
    %v204 = vld [vmem:[#allocation2 + $0x300] sm:$0xff]
    %v205 = vld [vmem:[#allocation2 + $0x308] sm:$0xff]
    %v206 = vld [vmem:[#allocation2 + $0x310] sm:$0xff]
    %v207 = vld [vmem:[#allocation2 + $0x318] sm:$0xff]
    %v208 = vld [vmem:[#allocation2 + $0x320] sm:$0xff]
    %v209 = vld [vmem:[#allocation2 + $0x328] sm:$0xff]
    %v210 = vld [vmem:[#allocation2 + $0x330] sm:$0xff]
    %v211 = vld [vmem:[#allocation2 + $0x338] sm:$0xff]
    %v212 = vld [vmem:[#allocation2 + $0x340] sm:$0xff]
    %v213 = vld [vmem:[#allocation2 + $0x348] sm:$0xff]
    %v214 = vld [vmem:[#allocation2 + $0x350] sm:$0xff]
    %v215 = vld [vmem:[#allocation2 + $0x358] sm:$0xff]
    %v216 = vld [vmem:[#allocation2 + $0x360] sm:$0xff]
    %v217 = vld [vmem:[#allocation2 + $0x368] sm:$0xff]
    %v218 = vld [vmem:[#allocation2 + $0x370] sm:$0xff]
    %v219 = vld [vmem:[#allocation2 + $0x378] sm:$0xff]
    %v220 = vld [vmem:[#allocation2 + $0x380] sm:$0xff]
    %v221 = vld [vmem:[#allocation2 + $0x388] sm:$0xff]
    %v222 = vld [vmem:[#allocation2 + $0x390] sm:$0xff]
    %v223 = vld [vmem:[#allocation2 + $0x398] sm:$0xff]
    %v224 = vld [vmem:[#allocation2 + $0x3a0] sm:$0xff]
    %v225 = vld [vmem:[#allocation2 + $0x3a8] sm:$0xff]
    %v226 = vld [vmem:[#allocation2 + $0x3b0] sm:$0xff]
    %v227 = vld [vmem:[#allocation2 + $0x3b8] sm:$0xff]
    %v228 = vld [vmem:[#allocation2 + $0x3c0] sm:$0xff]
    %v229 = vld [vmem:[#allocation2 + $0x3c8] sm:$0xff]
    %v230 = vld [vmem:[#allocation2 + $0x3d0] sm:$0xff]
    %v231 = vld [vmem:[#allocation2 + $0x3d8] sm:$0xff]
    %v232 = vld [vmem:[#allocation2 + $0x3e0] sm:$0xff]
    %v233 = vld [vmem:[#allocation2 + $0x3e8] sm:$0xff]
    %v234 = vld [vmem:[#allocation2 + $0x3f0] sm:$0xff]
    %v235 = vld [vmem:[#allocation2 + $0x3f8] sm:$0xff]
    %v236 = vld [vmem:[#allocation2 + $0x400] sm:$0xff]
    %v237 = vld [vmem:[#allocation2 + $0x408] sm:$0xff]
    %v238 = vld [vmem:[#allocation2 + $0x410] sm:$0xff]
    %v239 = vld [vmem:[#allocation2 + $0x418] sm:$0xff]
    %v240 = vld [vmem:[#allocation2 + $0x420] sm:$0xff]
    %v241 = vld [vmem:[#allocation2 + $0x428] sm:$0xff]
    %v242 = vld [vmem:[#allocation2 + $0x430] sm:$0xff]
    %v243 = vld [vmem:[#allocation2 + $0x438] sm:$0xff]
    %v244 = vld [vmem:[#allocation2 + $0x440] sm:$0xff]
    %v245 = vld [vmem:[#allocation2 + $0x448] sm:$0xff]
    %v246 = vld [vmem:[#allocation2 + $0x450] sm:$0xff]
    %v247 = vld [vmem:[#allocation2 + $0x458] sm:$0xff]
    %v248 = vld [vmem:[#allocation2 + $0x460] sm:$0xff]
    %v249 = vld [vmem:[#allocation2 + $0x468] sm:$0xff]
    %v250 = vld [vmem:[#allocation2 + $0x470] sm:$0xff]
    %v251 = vld [vmem:[#allocation2 + $0x478] sm:$0xff]
    %v252 = vld [vmem:[#allocation2 + $0x480] sm:$0xff]
    %v253 = vld [vmem:[#allocation2 + $0x488] sm:$0xff]
    %v254 = vld [vmem:[#allocation2 + $0x490] sm:$0xff]
    %v255 = vld [vmem:[#allocation2 + $0x498] sm:$0xff]
    %v256 = vld [vmem:[#allocation2 + $0x4a0] sm:$0xff]
    %v257 = vld [vmem:[#allocation2 + $0x4a8] sm:$0xff]
    %v258 = vld [vmem:[#allocation2 + $0x4b0] sm:$0xff]
    %v259 = vld [vmem:[#allocation2 + $0x4b8] sm:$0xff]
    %v260 = vld [vmem:[#allocation2 + $0x4c0] sm:$0xff]
    %v261 = vld [vmem:[#allocation2 + $0x4c8] sm:$0xff]
    %v262 = vld [vmem:[#allocation2 + $0x4d0] sm:$0xff]
    %v263 = vld [vmem:[#allocation2 + $0x4d8] sm:$0xff]
    %v264 = vld [vmem:[#allocation2 + $0x4e0] sm:$0xff]
    %v265 = vld [vmem:[#allocation2 + $0x4e8] sm:$0xff]
    %v266 = vld [vmem:[#allocation2 + $0x4f0] sm:$0xff]
    %v267 = vld [vmem:[#allocation2 + $0x4f8] sm:$0xff]
    %v268 = vld [vmem:[#allocation2 + $0x500] sm:$0xff]
    %v269 = vld [vmem:[#allocation2 + $0x508] sm:$0xff]
    %v270 = vld [vmem:[#allocation2 + $0x510] sm:$0xff]
    %v271 = vld [vmem:[#allocation2 + $0x518] sm:$0xff]
    %v272 = vld [vmem:[#allocation2 + $0x520] sm:$0xff]
    %v273 = vld [vmem:[#allocation2 + $0x528] sm:$0xff]
    %v274 = vld [vmem:[#allocation2 + $0x530] sm:$0xff]
    %v275 = vld [vmem:[#allocation2 + $0x538] sm:$0xff]
    %v276 = vld [vmem:[#allocation2 + $0x540] sm:$0xff]
    %v277 = vld [vmem:[#allocation2 + $0x548] sm:$0xff]
    %v278 = vld [vmem:[#allocation2 + $0x550] sm:$0xff]
    %v279 = vld [vmem:[#allocation2 + $0x558] sm:$0xff]
    %v280 = vld [vmem:[#allocation2 + $0x560] sm:$0xff]
    %v281 = vld [vmem:[#allocation2 + $0x568] sm:$0xff]
    %v282 = vld [vmem:[#allocation2 + $0x570] sm:$0xff]
    %v283 = vld [vmem:[#allocation2 + $0x578] sm:$0xff]
    %v284 = vld [vmem:[#allocation2 + $0x580] sm:$0xff]
    %v285 = vld [vmem:[#allocation2 + $0x588] sm:$0xff]
    %v286 = vld [vmem:[#allocation2 + $0x590] sm:$0xff]
    %v287 = vld [vmem:[#allocation2 + $0x598] sm:$0xff]
    %v288 = vld [vmem:[#allocation2 + $0x5a0] sm:$0xff]
    %v289 = vld [vmem:[#allocation2 + $0x5a8] sm:$0xff]
    %v290 = vld [vmem:[#allocation2 + $0x5b0] sm:$0xff]
    %v291 = vld [vmem:[#allocation2 + $0x5b8] sm:$0xff]
    %v292 = vld [vmem:[#allocation2 + $0x5c0] sm:$0xff]
    %v293 = vld [vmem:[#allocation2 + $0x5c8] sm:$0xff]
    %v294 = vld [vmem:[#allocation2 + $0x5d0] sm:$0xff]
    %v295 = vld [vmem:[#allocation2 + $0x5d8] sm:$0xff]
    %v296 = vld [vmem:[#allocation2 + $0x5e0] sm:$0xff]
    %v297 = vld [vmem:[#allocation2 + $0x5e8] sm:$0xff]
    %v298 = vld [vmem:[#allocation2 + $0x5f0] sm:$0xff]
    %v299 = vld [vmem:[#allocation2 + $0x5f8] sm:$0xff]
    %v300 = vld [vmem:[#allocation2 + $0x600] sm:$0xff]
    %v301 = vld [vmem:[#allocation2 + $0x608] sm:$0xff]
    %v302 = vld [vmem:[#allocation2 + $0x610] sm:$0xff]
    %v303 = vld [vmem:[#allocation2 + $0x618] sm:$0xff]
    %v304 = vld [vmem:[#allocation2 + $0x620] sm:$0xff]
    %v305 = vld [vmem:[#allocation2 + $0x628] sm:$0xff]
    %v306 = vld [vmem:[#allocation2 + $0x630] sm:$0xff]
    %v307 = vld [vmem:[#allocation2 + $0x638] sm:$0xff]
    %v308 = vld [vmem:[#allocation5] sm:$0xff]
    %v310 = vlaneseq
    %v311 = vshrl.u32 %v310, 7
    %v312 = vsub.s32 0, %v311
    %v313 = vrot.slane %v308, %v312
    %v314 = vlaneseq
    %v315 = vshrl.u32 %v314, 7
    %v316 = vsub.s32 1, %v315
    %v317 = vrot.slane %v308, %v316
    %v318 = vlaneseq
    %v319 = vshrl.u32 %v318, 7
    %v320 = vsub.s32 2, %v319
    %v321 = vrot.slane %v308, %v320
    %v322 = vlaneseq
    %v323 = vshrl.u32 %v322, 7
    %v324 = vsub.s32 3, %v323
    %v325 = vrot.slane %v308, %v324
    %v326 = vlaneseq
    %v327 = vshrl.u32 %v326, 7
    %v328 = vsub.s32 4, %v327
    %v329 = vrot.slane %v308, %v328
    %v330 = vlaneseq
    %v331 = vshrl.u32 %v330, 7
    %v332 = vsub.s32 5, %v331
    %v333 = vrot.slane %v308, %v332
    %v334 = vlaneseq
    %v335 = vshrl.u32 %v334, 7
    %v336 = vsub.s32 6, %v335
    %v337 = vrot.slane %v308, %v336
    %v338 = vlaneseq
    %v339 = vshrl.u32 %v338, 7
    %v340 = vsub.s32 7, %v339
    %v341 = vrot.slane %v308, %v340
    %v352 = vunpack.c.l.s4 1983009808
    %v353 = vunpack.c.0.s8 %v352
    %v354 = vlaneseq
    %v355 = vshrl.u32 %v354, 7
    %v356 = vsub.s32 %v353, %v355
    %v357 = vrot.slane %v107, %v356
    %v358 = vcombine.high %v357, %v357
    %vm360 = vcmask 588800
    %v361 = vsel %vm360, %v358, 0
    %363 = vmatprep.subr.mxu0 %v109
    %364 = vmatpush1.msra.mxu0 %v108
    %365 = vmatprep.subr.mxu0 %v117
    %366 = vmatpush1.msra.mxu0 %v116
    %367 = vmatprep.subr.mxu0 %v125
    %368 = vmatpush1.msra.mxu0 %v124
    %369 = vmatprep.subr.mxu0 %v133
    %370 = vmatpush1.msra.mxu0 %v132
    %371 = vmatprep.subr.mxu0 %v141
    %372 = vmatpush1.msra.mxu0 %v140
    %373 = vmatprep.subr.mxu0 %v149
    %374 = vmatpush1.msra.mxu0 %v148
    %375 = vmatprep.subr.mxu0 %v157
    %376 = vmatpush1.msra.mxu0 %v156
    %377 = vmatprep.subr.mxu0 %v165
    %378 = vmatpush1.msra.mxu0 %v164
    %379 = vmatprep.subr.mxu0 %v173
    %380 = vmatpush1.msra.mxu0 %v172
    %381 = vmatprep.subr.mxu0 %v181
    %382 = vmatpush1.msra.mxu0 %v180
    %383 = vmatprep.subr.mxu0 %v189
    %384 = vmatpush1.msra.mxu0 %v188
    %385 = vmatprep.subr.mxu0 %v197
    %386 = vmatpush1.msra.mxu0 %v196
    %387 = vmatprep.subr.mxu0 %v205
    %388 = vmatpush1.msra.mxu0 %v204
    %389 = vmatprep.subr.mxu0 %v213
    %390 = vmatpush1.msra.mxu0 %v212
    %391 = vmatprep.subr.mxu0 %v221
    %392 = vmatpush1.msra.mxu0 %v220
    %393 = vmatprep.subr.mxu0 %v229
    %394 = vmatpush1.msra.mxu0 %v228
    %395 = vmatprep.subr.mxu0 %v237
    %396 = vmatpush1.msra.mxu0 %v236
    %397 = vmatprep.subr.mxu0 %v245
    %398 = vmatpush1.msra.mxu0 %v244
    %399 = vmatprep.subr.mxu0 %v253
    %400 = vmatpush1.msra.mxu0 %v252
    %401 = vmatprep.subr.mxu0 %v261
    %402 = vmatpush1.msra.mxu0 %v260
    %403 = vmatprep.subr.mxu0 %v269
    %404 = vmatpush1.msra.mxu0 %v268
    %405 = vmatprep.subr.mxu0 %v277
    %406 = vmatpush1.msra.mxu0 %v276
    %407 = vmatprep.subr.mxu0 %v285
    %408 = vmatpush1.msra.mxu0 %v284
    %409 = vmatprep.subr.mxu0 %v293
    %410 = vmatpush1.msra.mxu0 %v292
    %411 = vmatprep.subr.mxu0 %v301
    %412 = vmatpush1.msra.mxu0 %v300
    %413 = vmatprep.subr.mxu0 0.0
    %414 = vmatpush1.msra.mxu0 0.0
    %415 = vmatprep.subr.mxu0 0.0
    %416 = vmatpush1.msra.mxu0 0.0
    %417 = vmatprep.subr.mxu0 0.0
    %418 = vmatpush1.msra.mxu0 0.0
    %419 = vmatprep.subr.mxu0 0.0
    %420 = vmatpush1.msra.mxu0 0.0
    %421 = vmatprep.subr.mxu0 0.0
    %422 = vmatpush1.msra.mxu0 0.0
    %423 = vmatprep.subr.mxu0 0.0
    %424 = vmatpush1.msra.mxu0 0.0
    %425 = vmatprep.subr.mxu0 0.0
    %426 = vmatpush1.msra.mxu0 0.0
    %427 = vmatprep.mubr.f32.mxu0 %v361
    %428 = vmatmul.mubr.f32.gmra.mrb[0].mxu0 %v357
    %v429 = vpop.f32.mrb[0].mxu0
    %v430 = vadd.f32 %v313, %v429
    %v431 = vpop.f32.mrb[0].mxu0
    %v432 = vadd.f32 %v317, %v431
    %433 = vdwg.mxu0
    %434 = vmatprep.subr.mxu0 %v111
    %435 = vmatpush1.msra.mxu0 %v110
    %436 = vmatprep.subr.mxu0 %v119
    %437 = vmatpush1.msra.mxu0 %v118
    %438 = vmatprep.subr.mxu0 %v127
    %439 = vmatpush1.msra.mxu0 %v126
    %440 = vmatprep.subr.mxu0 %v135
    %441 = vmatpush1.msra.mxu0 %v134
    %442 = vmatprep.subr.mxu0 %v143
    %443 = vmatpush1.msra.mxu0 %v142
    %444 = vmatprep.subr.mxu0 %v151
    %445 = vmatpush1.msra.mxu0 %v150
    %446 = vmatprep.subr.mxu0 %v159
    %447 = vmatpush1.msra.mxu0 %v158
    %448 = vmatprep.subr.mxu0 %v167
    %449 = vmatpush1.msra.mxu0 %v166
    %450 = vmatprep.subr.mxu0 %v175
    %451 = vmatpush1.msra.mxu0 %v174
    %452 = vmatprep.subr.mxu0 %v183
    %453 = vmatpush1.msra.mxu0 %v182
    %454 = vmatprep.subr.mxu0 %v191
    %455 = vmatpush1.msra.mxu0 %v190
    %456 = vmatprep.subr.mxu0 %v199
    %457 = vmatpush1.msra.mxu0 %v198
    %458 = vmatprep.subr.mxu0 %v207
    %459 = vmatpush1.msra.mxu0 %v206
    %460 = vmatprep.subr.mxu0 %v215
    %461 = vmatpush1.msra.mxu0 %v214
    %462 = vmatprep.subr.mxu0 %v223
    %463 = vmatpush1.msra.mxu0 %v222
    %464 = vmatprep.subr.mxu0 %v231
    %465 = vmatpush1.msra.mxu0 %v230
    %466 = vmatprep.subr.mxu0 %v239
    %467 = vmatpush1.msra.mxu0 %v238
    %468 = vmatprep.subr.mxu0 %v247
    %469 = vmatpush1.msra.mxu0 %v246
    %470 = vmatprep.subr.mxu0 %v255
    %471 = vmatpush1.msra.mxu0 %v254
    %472 = vmatprep.subr.mxu0 %v263
    %473 = vmatpush1.msra.mxu0 %v262
    %474 = vmatprep.subr.mxu0 %v271
    %475 = vmatpush1.msra.mxu0 %v270
    %476 = vmatprep.subr.mxu0 %v279
    %477 = vmatpush1.msra.mxu0 %v278
    %478 = vmatprep.subr.mxu0 %v287
    %479 = vmatpush1.msra.mxu0 %v286
    %480 = vmatprep.subr.mxu0 %v295
    %481 = vmatpush1.msra.mxu0 %v294
    %482 = vmatprep.subr.mxu0 %v303
    %483 = vmatpush1.msra.mxu0 %v302
    %484 = vmatprep.subr.mxu0 0.0
    %485 = vmatpush1.msra.mxu0 0.0
    %486 = vmatprep.subr.mxu0 0.0
    %487 = vmatpush1.msra.mxu0 0.0
    %488 = vmatprep.subr.mxu0 0.0
    %489 = vmatpush1.msra.mxu0 0.0
    %490 = vmatprep.subr.mxu0 0.0
    %491 = vmatpush1.msra.mxu0 0.0
    %492 = vmatprep.subr.mxu0 0.0
    %493 = vmatpush1.msra.mxu0 0.0
    %494 = vmatprep.subr.mxu0 0.0
    %495 = vmatpush1.msra.mxu0 0.0
    %496 = vmatprep.subr.mxu0 0.0
    %497 = vmatpush1.msra.mxu0 0.0
    %498 = vmatprep.mubr.f32.mxu0 %v361
    %499 = vmatmul.mubr.f32.gmra.mrb[0].mxu0 %v357
    %v500 = vpop.f32.mrb[0].mxu0
    %v501 = vadd.f32 %v321, %v500
    %v502 = vpop.f32.mrb[0].mxu0
    %v503 = vadd.f32 %v325, %v502
    %504 = vdwg.mxu0
    %505 = vmatprep.subr.mxu0 %v113
    %506 = vmatpush1.msra.mxu0 %v112
    %507 = vmatprep.subr.mxu0 %v121
    %508 = vmatpush1.msra.mxu0 %v120
    %509 = vmatprep.subr.mxu0 %v129
    %510 = vmatpush1.msra.mxu0 %v128
    %511 = vmatprep.subr.mxu0 %v137
    %512 = vmatpush1.msra.mxu0 %v136
    %513 = vmatprep.subr.mxu0 %v145
    %514 = vmatpush1.msra.mxu0 %v144
    %515 = vmatprep.subr.mxu0 %v153
    %516 = vmatpush1.msra.mxu0 %v152
    %517 = vmatprep.subr.mxu0 %v161
    %518 = vmatpush1.msra.mxu0 %v160
    %519 = vmatprep.subr.mxu0 %v169
    %520 = vmatpush1.msra.mxu0 %v168
    %521 = vmatprep.subr.mxu0 %v177
    %522 = vmatpush1.msra.mxu0 %v176
    %523 = vmatprep.subr.mxu0 %v185
    %524 = vmatpush1.msra.mxu0 %v184
    %525 = vmatprep.subr.mxu0 %v193
    %526 = vmatpush1.msra.mxu0 %v192
    %527 = vmatprep.subr.mxu0 %v201
    %528 = vmatpush1.msra.mxu0 %v200
    %529 = vmatprep.subr.mxu0 %v209
    %530 = vmatpush1.msra.mxu0 %v208
    %531 = vmatprep.subr.mxu0 %v217
    %532 = vmatpush1.msra.mxu0 %v216
    %533 = vmatprep.subr.mxu0 %v225
    %534 = vmatpush1.msra.mxu0 %v224
    %535 = vmatprep.subr.mxu0 %v233
    %536 = vmatpush1.msra.mxu0 %v232
    %537 = vmatprep.subr.mxu0 %v241
    %538 = vmatpush1.msra.mxu0 %v240
    %539 = vmatprep.subr.mxu0 %v249
    %540 = vmatpush1.msra.mxu0 %v248
    %541 = vmatprep.subr.mxu0 %v257
    %542 = vmatpush1.msra.mxu0 %v256
    %543 = vmatprep.subr.mxu0 %v265
    %544 = vmatpush1.msra.mxu0 %v264
    %545 = vmatprep.subr.mxu0 %v273
    %546 = vmatpush1.msra.mxu0 %v272
    %547 = vmatprep.subr.mxu0 %v281
    %548 = vmatpush1.msra.mxu0 %v280
    %549 = vmatprep.subr.mxu0 %v289
    %550 = vmatpush1.msra.mxu0 %v288
    %551 = vmatprep.subr.mxu0 %v297
    %552 = vmatpush1.msra.mxu0 %v296
    %553 = vmatprep.subr.mxu0 %v305
    %554 = vmatpush1.msra.mxu0 %v304
    %555 = vmatprep.subr.mxu0 0.0
    %556 = vmatpush1.msra.mxu0 0.0
    %557 = vmatprep.subr.mxu0 0.0
    %558 = vmatpush1.msra.mxu0 0.0
    %559 = vmatprep.subr.mxu0 0.0
    %560 = vmatpush1.msra.mxu0 0.0
    %561 = vmatprep.subr.mxu0 0.0
    %562 = vmatpush1.msra.mxu0 0.0
    %563 = vmatprep.subr.mxu0 0.0
    %564 = vmatpush1.msra.mxu0 0.0
    %565 = vmatprep.subr.mxu0 0.0
    %566 = vmatpush1.msra.mxu0 0.0
    %567 = vmatprep.subr.mxu0 0.0
    %568 = vmatpush1.msra.mxu0 0.0
    %569 = vmatprep.mubr.f32.mxu0 %v361
    %570 = vmatmul.mubr.f32.gmra.mrb[0].mxu0 %v357
    %v571 = vpop.f32.mrb[0].mxu0
    %v572 = vadd.f32 %v329, %v571
    %v573 = vpop.f32.mrb[0].mxu0
    %v574 = vadd.f32 %v333, %v573
    %575 = vdwg.mxu0
    %576 = vmatprep.subr.mxu0 %v115
    %577 = vmatpush1.msra.mxu0 %v114
    %578 = vmatprep.subr.mxu0 %v123
    %579 = vmatpush1.msra.mxu0 %v122
    %580 = vmatprep.subr.mxu0 %v131
    %581 = vmatpush1.msra.mxu0 %v130
    %582 = vmatprep.subr.mxu0 %v139
    %583 = vmatpush1.msra.mxu0 %v138
    %584 = vmatprep.subr.mxu0 %v147
    %585 = vmatpush1.msra.mxu0 %v146
    %586 = vmatprep.subr.mxu0 %v155
    %587 = vmatpush1.msra.mxu0 %v154
    %588 = vmatprep.subr.mxu0 %v163
    %589 = vmatpush1.msra.mxu0 %v162
    %590 = vmatprep.subr.mxu0 %v171
    %591 = vmatpush1.msra.mxu0 %v170
    %592 = vmatprep.subr.mxu0 %v179
    %593 = vmatpush1.msra.mxu0 %v178
    %594 = vmatprep.subr.mxu0 %v187
    %595 = vmatpush1.msra.mxu0 %v186
    %596 = vmatprep.subr.mxu0 %v195
    %597 = vmatpush1.msra.mxu0 %v194
    %598 = vmatprep.subr.mxu0 %v203
    %599 = vmatpush1.msra.mxu0 %v202
    %600 = vmatprep.subr.mxu0 %v211
    %601 = vmatpush1.msra.mxu0 %v210
    %602 = vmatprep.subr.mxu0 %v219
    %603 = vmatpush1.msra.mxu0 %v218
    %604 = vmatprep.subr.mxu0 %v227
    %605 = vmatpush1.msra.mxu0 %v226
    %606 = vmatprep.subr.mxu0 %v235
    %607 = vmatpush1.msra.mxu0 %v234
    %608 = vmatprep.subr.mxu0 %v243
    %609 = vmatpush1.msra.mxu0 %v242
    %610 = vmatprep.subr.mxu0 %v251
    %611 = vmatpush1.msra.mxu0 %v250
    %612 = vmatprep.subr.mxu0 %v259
    %613 = vmatpush1.msra.mxu0 %v258
    %614 = vmatprep.subr.mxu0 %v267
    %615 = vmatpush1.msra.mxu0 %v266
    %616 = vmatprep.subr.mxu0 %v275
    %617 = vmatpush1.msra.mxu0 %v274
    %618 = vmatprep.subr.mxu0 %v283
    %619 = vmatpush1.msra.mxu0 %v282
    %620 = vmatprep.subr.mxu0 %v291
    %621 = vmatpush1.msra.mxu0 %v290
    %622 = vmatprep.subr.mxu0 %v299
    %623 = vmatpush1.msra.mxu0 %v298
    %624 = vmatprep.subr.mxu0 %v307
    %625 = vmatpush1.msra.mxu0 %v306
    %626 = vmatprep.subr.mxu0 0.0
    %627 = vmatpush1.msra.mxu0 0.0
    %628 = vmatprep.subr.mxu0 0.0
    %629 = vmatpush1.msra.mxu0 0.0
    %630 = vmatprep.subr.mxu0 0.0
    %631 = vmatpush1.msra.mxu0 0.0
    %632 = vmatprep.subr.mxu0 0.0
    %633 = vmatpush1.msra.mxu0 0.0
    %634 = vmatprep.subr.mxu0 0.0
    %635 = vmatpush1.msra.mxu0 0.0
    %636 = vmatprep.subr.mxu0 0.0
    %637 = vmatpush1.msra.mxu0 0.0
    %638 = vmatprep.subr.mxu0 0.0
    %639 = vmatpush1.msra.mxu0 0.0
    %640 = vmatprep.mubr.f32.mxu0 %v361
    %641 = vmatmul.mubr.f32.gmra.mrb[0].mxu0 %v357
    %v642 = vpop.f32.mrb[0].mxu0
    %v643 = vadd.f32 %v337, %v642
    %v644 = vpop.f32.mrb[0].mxu0
    %v645 = vadd.f32 %v341, %v644
    %646 = vdwg.mxu0
    %v647 = vmax.f32 %v430, 0.0
    %v648 = vmax.f32 %v432, 0.0
    %v649 = vmax.f32 %v501, 0.0
    %v650 = vmax.f32 %v503, 0.0
    %v651 = vmax.f32 %v572, 0.0
    %v652 = vmax.f32 %v574, 0.0
    %v653 = vmax.f32 %v643, 0.0
    %v654 = vmax.f32 %v645, 0.0
    %v655 = vld [vmem:[#allocation7] sm:$0xff]
    %v656 = vld [vmem:[#allocation7 + $0x8] sm:$0xff]
    %v657 = vld [vmem:[#allocation7 + $0x10] sm:$0xff]
    %v658 = vld [vmem:[#allocation7 + $0x18] sm:$0xff]
    %v659 = vld [vmem:[#allocation7 + $0x20] sm:$0xff]
    %v660 = vld [vmem:[#allocation7 + $0x28] sm:$0xff]
    %v661 = vld [vmem:[#allocation7 + $0x30] sm:$0xff]
    %v662 = vld [vmem:[#allocation7 + $0x38] sm:$0xff]
    %v663 = vld [vmem:[#allocation7 + $0x40] sm:$0xff]
    %v664 = vld [vmem:[#allocation7 + $0x48] sm:$0xff]
    %v665 = vld [vmem:[#allocation7 + $0x50] sm:$0xff]
    %v666 = vld [vmem:[#allocation7 + $0x58] sm:$0xff]
    %v667 = vld [vmem:[#allocation7 + $0x60] sm:$0xff]
    %v668 = vld [vmem:[#allocation7 + $0x68] sm:$0xff]
    %v669 = vld [vmem:[#allocation7 + $0x70] sm:$0xff]
    %v670 = vld [vmem:[#allocation7 + $0x78] sm:$0xff]
    %v671 = vld [vmem:[#allocation7 + $0x80] sm:$0xff]
    %v672 = vld [vmem:[#allocation7 + $0x88] sm:$0xff]
    %v673 = vld [vmem:[#allocation7 + $0x90] sm:$0xff]
    %v674 = vld [vmem:[#allocation7 + $0x98] sm:$0xff]
    %v675 = vld [vmem:[#allocation7 + $0xa0] sm:$0xff]
    %v676 = vld [vmem:[#allocation7 + $0xa8] sm:$0xff]
    %v677 = vld [vmem:[#allocation7 + $0xb0] sm:$0xff]
    %v678 = vld [vmem:[#allocation7 + $0xb8] sm:$0xff]
    %v679 = vld [vmem:[#allocation7 + $0xc0] sm:$0xff]
    %v680 = vld [vmem:[#allocation7 + $0xc8] sm:$0xff]
    %v681 = vld [vmem:[#allocation7 + $0xd0] sm:$0xff]
    %v682 = vld [vmem:[#allocation7 + $0xd8] sm:$0xff]
    %v683 = vld [vmem:[#allocation7 + $0xe0] sm:$0xff]
    %v684 = vld [vmem:[#allocation7 + $0xe8] sm:$0xff]
    %v685 = vld [vmem:[#allocation7 + $0xf0] sm:$0xff]
    %v686 = vld [vmem:[#allocation7 + $0xf8] sm:$0xff]
    %v687 = vld [vmem:[#allocation7 + $0x100] sm:$0xff]
    %v688 = vld [vmem:[#allocation7 + $0x108] sm:$0xff]
    %v689 = vld [vmem:[#allocation7 + $0x110] sm:$0xff]
    %v690 = vld [vmem:[#allocation7 + $0x118] sm:$0xff]
    %v691 = vld [vmem:[#allocation7 + $0x120] sm:$0xff]
    %v692 = vld [vmem:[#allocation7 + $0x128] sm:$0xff]
    %v693 = vld [vmem:[#allocation7 + $0x130] sm:$0xff]
    %v694 = vld [vmem:[#allocation7 + $0x138] sm:$0xff]
    %v695 = vld [vmem:[#allocation7 + $0x140] sm:$0xff]
    %v696 = vld [vmem:[#allocation7 + $0x148] sm:$0xff]
    %v697 = vld [vmem:[#allocation7 + $0x150] sm:$0xff]
    %v698 = vld [vmem:[#allocation7 + $0x158] sm:$0xff]
    %v699 = vld [vmem:[#allocation7 + $0x160] sm:$0xff]
    %v700 = vld [vmem:[#allocation7 + $0x168] sm:$0xff]
    %v701 = vld [vmem:[#allocation7 + $0x170] sm:$0xff]
    %v702 = vld [vmem:[#allocation7 + $0x178] sm:$0xff]
    %v703 = vld [vmem:[#allocation7 + $0x180] sm:$0xff]
    %v704 = vld [vmem:[#allocation7 + $0x188] sm:$0xff]
    %v705 = vld [vmem:[#allocation7 + $0x190] sm:$0xff]
    %v706 = vld [vmem:[#allocation7 + $0x198] sm:$0xff]
    %v707 = vld [vmem:[#allocation7 + $0x1a0] sm:$0xff]
    %v708 = vld [vmem:[#allocation7 + $0x1a8] sm:$0xff]
    %v709 = vld [vmem:[#allocation7 + $0x1b0] sm:$0xff]
    %v710 = vld [vmem:[#allocation7 + $0x1b8] sm:$0xff]
    %v711 = vld [vmem:[#allocation7 + $0x1c0] sm:$0xff]
    %v712 = vld [vmem:[#allocation7 + $0x1c8] sm:$0xff]
    %v713 = vld [vmem:[#allocation7 + $0x1d0] sm:$0xff]
    %v714 = vld [vmem:[#allocation7 + $0x1d8] sm:$0xff]
    %v715 = vld [vmem:[#allocation7 + $0x1e0] sm:$0xff]
    %v716 = vld [vmem:[#allocation7 + $0x1e8] sm:$0xff]
    %v717 = vld [vmem:[#allocation7 + $0x1f0] sm:$0xff]
    %v718 = vld [vmem:[#allocation7 + $0x1f8] sm:$0xff]
    %v719 = vld [vmem:[#allocation7 + $0x200] sm:$0xff]
    %v720 = vld [vmem:[#allocation7 + $0x208] sm:$0xff]
    %v721 = vld [vmem:[#allocation7 + $0x210] sm:$0xff]
    %v722 = vld [vmem:[#allocation7 + $0x218] sm:$0xff]
    %v723 = vld [vmem:[#allocation7 + $0x220] sm:$0xff]
    %v724 = vld [vmem:[#allocation7 + $0x228] sm:$0xff]
    %v725 = vld [vmem:[#allocation7 + $0x230] sm:$0xff]
    %v726 = vld [vmem:[#allocation7 + $0x238] sm:$0xff]
    %v727 = vld [vmem:[#allocation7 + $0x240] sm:$0xff]
    %v728 = vld [vmem:[#allocation7 + $0x248] sm:$0xff]
    %v729 = vld [vmem:[#allocation7 + $0x250] sm:$0xff]
    %v730 = vld [vmem:[#allocation7 + $0x258] sm:$0xff]
    %v731 = vld [vmem:[#allocation7 + $0x260] sm:$0xff]
    %v732 = vld [vmem:[#allocation7 + $0x268] sm:$0xff]
    %v733 = vld [vmem:[#allocation7 + $0x270] sm:$0xff]
    %v734 = vld [vmem:[#allocation7 + $0x278] sm:$0xff]
    %v735 = vld [vmem:[#allocation7 + $0x280] sm:$0xff]
    %v736 = vld [vmem:[#allocation7 + $0x288] sm:$0xff]
    %v737 = vld [vmem:[#allocation7 + $0x290] sm:$0xff]
    %v738 = vld [vmem:[#allocation7 + $0x298] sm:$0xff]
    %v739 = vld [vmem:[#allocation7 + $0x2a0] sm:$0xff]
    %v740 = vld [vmem:[#allocation7 + $0x2a8] sm:$0xff]
    %v741 = vld [vmem:[#allocation7 + $0x2b0] sm:$0xff]
    %v742 = vld [vmem:[#allocation7 + $0x2b8] sm:$0xff]
    %v743 = vld [vmem:[#allocation7 + $0x2c0] sm:$0xff]
    %v744 = vld [vmem:[#allocation7 + $0x2c8] sm:$0xff]
    %v745 = vld [vmem:[#allocation7 + $0x2d0] sm:$0xff]
    %v746 = vld [vmem:[#allocation7 + $0x2d8] sm:$0xff]
    %v747 = vld [vmem:[#allocation7 + $0x2e0] sm:$0xff]
    %v748 = vld [vmem:[#allocation7 + $0x2e8] sm:$0xff]
    %v749 = vld [vmem:[#allocation7 + $0x2f0] sm:$0xff]
    %v750 = vld [vmem:[#allocation7 + $0x2f8] sm:$0xff]
    %v751 = vld [vmem:[#allocation7 + $0x300] sm:$0xff]
    %v752 = vld [vmem:[#allocation7 + $0x308] sm:$0xff]
    %v753 = vld [vmem:[#allocation7 + $0x310] sm:$0xff]
    %v754 = vld [vmem:[#allocation7 + $0x318] sm:$0xff]
    %v755 = vld [vmem:[#allocation7 + $0x320] sm:$0xff]
    %v756 = vld [vmem:[#allocation7 + $0x328] sm:$0xff]
    %v757 = vld [vmem:[#allocation7 + $0x330] sm:$0xff]
    %v758 = vld [vmem:[#allocation7 + $0x338] sm:$0xff]
    %v759 = vld [vmem:[#allocation7 + $0x340] sm:$0xff]
    %v760 = vld [vmem:[#allocation7 + $0x348] sm:$0xff]
    %v761 = vld [vmem:[#allocation7 + $0x350] sm:$0xff]
    %v762 = vld [vmem:[#allocation7 + $0x358] sm:$0xff]
    %v763 = vld [vmem:[#allocation7 + $0x360] sm:$0xff]
    %v764 = vld [vmem:[#allocation7 + $0x368] sm:$0xff]
    %v765 = vld [vmem:[#allocation7 + $0x370] sm:$0xff]
    %v766 = vld [vmem:[#allocation7 + $0x378] sm:$0xff]
    %v767 = vld [vmem:[#allocation7 + $0x380] sm:$0xff]
    %v768 = vld [vmem:[#allocation7 + $0x388] sm:$0xff]
    %v769 = vld [vmem:[#allocation7 + $0x390] sm:$0xff]
    %v770 = vld [vmem:[#allocation7 + $0x398] sm:$0xff]
    %v771 = vld [vmem:[#allocation7 + $0x3a0] sm:$0xff]
    %v772 = vld [vmem:[#allocation7 + $0x3a8] sm:$0xff]
    %v773 = vld [vmem:[#allocation7 + $0x3b0] sm:$0xff]
    %v774 = vld [vmem:[#allocation7 + $0x3b8] sm:$0xff]
    %v775 = vld [vmem:[#allocation7 + $0x3c0] sm:$0xff]
    %v776 = vld [vmem:[#allocation7 + $0x3c8] sm:$0xff]
    %v777 = vld [vmem:[#allocation7 + $0x3d0] sm:$0xff]
    %v778 = vld [vmem:[#allocation7 + $0x3d8] sm:$0xff]
    %v779 = vld [vmem:[#allocation7 + $0x3e0] sm:$0xff]
    %v780 = vld [vmem:[#allocation7 + $0x3e8] sm:$0xff]
    %v781 = vld [vmem:[#allocation7 + $0x3f0] sm:$0xff]
    %v782 = vld [vmem:[#allocation7 + $0x3f8] sm:$0xff]
    %v783 = vld [vmem:[#allocation7 + $0x400] sm:$0xff]
    %v784 = vld [vmem:[#allocation7 + $0x408] sm:$0xff]
    %v785 = vld [vmem:[#allocation7 + $0x410] sm:$0xff]
    %v786 = vld [vmem:[#allocation7 + $0x418] sm:$0xff]
    %v787 = vld [vmem:[#allocation7 + $0x420] sm:$0xff]
    %v788 = vld [vmem:[#allocation7 + $0x428] sm:$0xff]
    %v789 = vld [vmem:[#allocation7 + $0x430] sm:$0xff]
    %v790 = vld [vmem:[#allocation7 + $0x438] sm:$0xff]
    %v791 = vld [vmem:[#allocation7 + $0x440] sm:$0xff]
    %v792 = vld [vmem:[#allocation7 + $0x448] sm:$0xff]
    %v793 = vld [vmem:[#allocation7 + $0x450] sm:$0xff]
    %v794 = vld [vmem:[#allocation7 + $0x458] sm:$0xff]
    %v795 = vld [vmem:[#allocation7 + $0x460] sm:$0xff]
    %v796 = vld [vmem:[#allocation7 + $0x468] sm:$0xff]
    %v797 = vld [vmem:[#allocation7 + $0x470] sm:$0xff]
    %v798 = vld [vmem:[#allocation7 + $0x478] sm:$0xff]
    %v799 = vld [vmem:[#allocation7 + $0x480] sm:$0xff]
    %v800 = vld [vmem:[#allocation7 + $0x488] sm:$0xff]
    %v801 = vld [vmem:[#allocation7 + $0x490] sm:$0xff]
    %v802 = vld [vmem:[#allocation7 + $0x498] sm:$0xff]
    %v803 = vld [vmem:[#allocation7 + $0x4a0] sm:$0xff]
    %v804 = vld [vmem:[#allocation7 + $0x4a8] sm:$0xff]
    %v805 = vld [vmem:[#allocation7 + $0x4b0] sm:$0xff]
    %v806 = vld [vmem:[#allocation7 + $0x4b8] sm:$0xff]
    %v807 = vld [vmem:[#allocation7 + $0x4c0] sm:$0xff]
    %v808 = vld [vmem:[#allocation7 + $0x4c8] sm:$0xff]
    %v809 = vld [vmem:[#allocation7 + $0x4d0] sm:$0xff]
    %v810 = vld [vmem:[#allocation7 + $0x4d8] sm:$0xff]
    %v811 = vld [vmem:[#allocation7 + $0x4e0] sm:$0xff]
    %v812 = vld [vmem:[#allocation7 + $0x4e8] sm:$0xff]
    %v813 = vld [vmem:[#allocation7 + $0x4f0] sm:$0xff]
    %v814 = vld [vmem:[#allocation7 + $0x4f8] sm:$0xff]
    %v815 = vld [vmem:[#allocation7 + $0x500] sm:$0xff]
    %v816 = vld [vmem:[#allocation7 + $0x508] sm:$0xff]
    %v817 = vld [vmem:[#allocation7 + $0x510] sm:$0xff]
    %v818 = vld [vmem:[#allocation7 + $0x518] sm:$0xff]
    %v819 = vld [vmem:[#allocation7 + $0x520] sm:$0xff]
    %v820 = vld [vmem:[#allocation7 + $0x528] sm:$0xff]
    %v821 = vld [vmem:[#allocation7 + $0x530] sm:$0xff]
    %v822 = vld [vmem:[#allocation7 + $0x538] sm:$0xff]
    %v823 = vld [vmem:[#allocation7 + $0x540] sm:$0xff]
    %v824 = vld [vmem:[#allocation7 + $0x548] sm:$0xff]
    %v825 = vld [vmem:[#allocation7 + $0x550] sm:$0xff]
    %v826 = vld [vmem:[#allocation7 + $0x558] sm:$0xff]
    %v827 = vld [vmem:[#allocation7 + $0x560] sm:$0xff]
    %v828 = vld [vmem:[#allocation7 + $0x568] sm:$0xff]
    %v829 = vld [vmem:[#allocation7 + $0x570] sm:$0xff]
    %v830 = vld [vmem:[#allocation7 + $0x578] sm:$0xff]
    %v831 = vld [vmem:[#allocation7 + $0x580] sm:$0xff]
    %v832 = vld [vmem:[#allocation7 + $0x588] sm:$0xff]
    %v833 = vld [vmem:[#allocation7 + $0x590] sm:$0xff]
    %v834 = vld [vmem:[#allocation7 + $0x598] sm:$0xff]
    %v835 = vld [vmem:[#allocation7 + $0x5a0] sm:$0xff]
    %v836 = vld [vmem:[#allocation7 + $0x5a8] sm:$0xff]
    %v837 = vld [vmem:[#allocation7 + $0x5b0] sm:$0xff]
    %v838 = vld [vmem:[#allocation7 + $0x5b8] sm:$0xff]
    %v839 = vld [vmem:[#allocation7 + $0x5c0] sm:$0xff]
    %v840 = vld [vmem:[#allocation7 + $0x5c8] sm:$0xff]
    %v841 = vld [vmem:[#allocation7 + $0x5d0] sm:$0xff]
    %v842 = vld [vmem:[#allocation7 + $0x5d8] sm:$0xff]
    %v843 = vld [vmem:[#allocation7 + $0x5e0] sm:$0xff]
    %v844 = vld [vmem:[#allocation7 + $0x5e8] sm:$0xff]
    %v845 = vld [vmem:[#allocation7 + $0x5f0] sm:$0xff]
    %v846 = vld [vmem:[#allocation7 + $0x5f8] sm:$0xff]
    %v847 = vld [vmem:[#allocation7 + $0x600] sm:$0xff]
    %v848 = vld [vmem:[#allocation7 + $0x608] sm:$0xff]
    %v849 = vld [vmem:[#allocation7 + $0x610] sm:$0xff]
    %v850 = vld [vmem:[#allocation7 + $0x618] sm:$0xff]
    %v851 = vld [vmem:[#allocation7 + $0x620] sm:$0xff]
    %v852 = vld [vmem:[#allocation7 + $0x628] sm:$0xff]
    %v853 = vld [vmem:[#allocation7 + $0x630] sm:$0xff]
    %v854 = vld [vmem:[#allocation7 + $0x638] sm:$0xff]
    %v855 = vld [vmem:[#allocation7 + $0x640] sm:$0xff]
    %v856 = vld [vmem:[#allocation7 + $0x648] sm:$0xff]
    %v857 = vld [vmem:[#allocation7 + $0x650] sm:$0xff]
    %v858 = vld [vmem:[#allocation7 + $0x658] sm:$0xff]
    %v859 = vld [vmem:[#allocation7 + $0x660] sm:$0xff]
    %v860 = vld [vmem:[#allocation7 + $0x668] sm:$0xff]
    %v861 = vld [vmem:[#allocation7 + $0x670] sm:$0xff]
    %v862 = vld [vmem:[#allocation7 + $0x678] sm:$0xff]
    %v863 = vld [vmem:[#allocation7 + $0x680] sm:$0xff]
    %v864 = vld [vmem:[#allocation7 + $0x688] sm:$0xff]
    %v865 = vld [vmem:[#allocation7 + $0x690] sm:$0xff]
    %v866 = vld [vmem:[#allocation7 + $0x698] sm:$0xff]
    %v867 = vld [vmem:[#allocation7 + $0x6a0] sm:$0xff]
    %v868 = vld [vmem:[#allocation7 + $0x6a8] sm:$0xff]
    %v869 = vld [vmem:[#allocation7 + $0x6b0] sm:$0xff]
    %v870 = vld [vmem:[#allocation7 + $0x6b8] sm:$0xff]
    %v871 = vld [vmem:[#allocation7 + $0x6c0] sm:$0xff]
    %v872 = vld [vmem:[#allocation7 + $0x6c8] sm:$0xff]
    %v873 = vld [vmem:[#allocation7 + $0x6d0] sm:$0xff]
    %v874 = vld [vmem:[#allocation7 + $0x6d8] sm:$0xff]
    %v875 = vld [vmem:[#allocation7 + $0x6e0] sm:$0xff]
    %v876 = vld [vmem:[#allocation7 + $0x6e8] sm:$0xff]
    %v877 = vld [vmem:[#allocation7 + $0x6f0] sm:$0xff]
    %v878 = vld [vmem:[#allocation7 + $0x6f8] sm:$0xff]
    %v879 = vld [vmem:[#allocation7 + $0x700] sm:$0xff]
    %v880 = vld [vmem:[#allocation7 + $0x708] sm:$0xff]
    %v881 = vld [vmem:[#allocation7 + $0x710] sm:$0xff]
    %v882 = vld [vmem:[#allocation7 + $0x718] sm:$0xff]
    %v883 = vld [vmem:[#allocation7 + $0x720] sm:$0xff]
    %v884 = vld [vmem:[#allocation7 + $0x728] sm:$0xff]
    %v885 = vld [vmem:[#allocation7 + $0x730] sm:$0xff]
    %v886 = vld [vmem:[#allocation7 + $0x738] sm:$0xff]
    %v887 = vld [vmem:[#allocation7 + $0x740] sm:$0xff]
    %v888 = vld [vmem:[#allocation7 + $0x748] sm:$0xff]
    %v889 = vld [vmem:[#allocation7 + $0x750] sm:$0xff]
    %v890 = vld [vmem:[#allocation7 + $0x758] sm:$0xff]
    %v891 = vld [vmem:[#allocation7 + $0x760] sm:$0xff]
    %v892 = vld [vmem:[#allocation7 + $0x768] sm:$0xff]
    %v893 = vld [vmem:[#allocation7 + $0x770] sm:$0xff]
    %v894 = vld [vmem:[#allocation7 + $0x778] sm:$0xff]
    %v895 = vld [vmem:[#allocation7 + $0x780] sm:$0xff]
    %v896 = vld [vmem:[#allocation7 + $0x788] sm:$0xff]
    %v897 = vld [vmem:[#allocation7 + $0x790] sm:$0xff]
    %v898 = vld [vmem:[#allocation7 + $0x798] sm:$0xff]
    %v899 = vld [vmem:[#allocation7 + $0x7a0] sm:$0xff]
    %v900 = vld [vmem:[#allocation7 + $0x7a8] sm:$0xff]
    %v901 = vld [vmem:[#allocation7 + $0x7b0] sm:$0xff]
    %v902 = vld [vmem:[#allocation7 + $0x7b8] sm:$0xff]
    %v903 = vld [vmem:[#allocation7 + $0x7c0] sm:$0xff]
    %v904 = vld [vmem:[#allocation7 + $0x7c8] sm:$0xff]
    %v905 = vld [vmem:[#allocation7 + $0x7d0] sm:$0xff]
    %v906 = vld [vmem:[#allocation7 + $0x7d8] sm:$0xff]
    %v907 = vld [vmem:[#allocation7 + $0x7e0] sm:$0xff]
    %v908 = vld [vmem:[#allocation7 + $0x7e8] sm:$0xff]
    %v909 = vld [vmem:[#allocation7 + $0x7f0] sm:$0xff]
    %v910 = vld [vmem:[#allocation7 + $0x7f8] sm:$0xff]
    %v911 = vld [vmem:[#allocation7 + $0x800] sm:$0xff]
    %v912 = vld [vmem:[#allocation7 + $0x808] sm:$0xff]
    %v913 = vld [vmem:[#allocation7 + $0x810] sm:$0xff]
    %v914 = vld [vmem:[#allocation7 + $0x818] sm:$0xff]
    %v915 = vld [vmem:[#allocation7 + $0x820] sm:$0xff]
    %v916 = vld [vmem:[#allocation7 + $0x828] sm:$0xff]
    %v917 = vld [vmem:[#allocation7 + $0x830] sm:$0xff]
    %v918 = vld [vmem:[#allocation7 + $0x838] sm:$0xff]
    %v919 = vld [vmem:[#allocation7 + $0x840] sm:$0xff]
    %v920 = vld [vmem:[#allocation7 + $0x848] sm:$0xff]
    %v921 = vld [vmem:[#allocation7 + $0x850] sm:$0xff]
    %v922 = vld [vmem:[#allocation7 + $0x858] sm:$0xff]
    %v923 = vld [vmem:[#allocation7 + $0x860] sm:$0xff]
    %v924 = vld [vmem:[#allocation7 + $0x868] sm:$0xff]
    %v925 = vld [vmem:[#allocation7 + $0x870] sm:$0xff]
    %v926 = vld [vmem:[#allocation7 + $0x878] sm:$0xff]
    %v927 = vld [vmem:[#allocation7 + $0x880] sm:$0xff]
    %v928 = vld [vmem:[#allocation7 + $0x888] sm:$0xff]
    %v929 = vld [vmem:[#allocation7 + $0x890] sm:$0xff]
    %v930 = vld [vmem:[#allocation7 + $0x898] sm:$0xff]
    %v931 = vld [vmem:[#allocation7 + $0x8a0] sm:$0xff]
    %v932 = vld [vmem:[#allocation7 + $0x8a8] sm:$0xff]
    %v933 = vld [vmem:[#allocation7 + $0x8b0] sm:$0xff]
    %v934 = vld [vmem:[#allocation7 + $0x8b8] sm:$0xff]
    %v935 = vld [vmem:[#allocation7 + $0x8c0] sm:$0xff]
    %v936 = vld [vmem:[#allocation7 + $0x8c8] sm:$0xff]
    %v937 = vld [vmem:[#allocation7 + $0x8d0] sm:$0xff]
    %v938 = vld [vmem:[#allocation7 + $0x8d8] sm:$0xff]
    %v939 = vld [vmem:[#allocation7 + $0x8e0] sm:$0xff]
    %v940 = vld [vmem:[#allocation7 + $0x8e8] sm:$0xff]
    %v941 = vld [vmem:[#allocation7 + $0x8f0] sm:$0xff]
    %v942 = vld [vmem:[#allocation7 + $0x8f8] sm:$0xff]
    %v943 = vld [vmem:[#allocation7 + $0x900] sm:$0xff]
    %v944 = vld [vmem:[#allocation7 + $0x908] sm:$0xff]
    %v945 = vld [vmem:[#allocation7 + $0x910] sm:$0xff]
    %v946 = vld [vmem:[#allocation7 + $0x918] sm:$0xff]
    %v947 = vld [vmem:[#allocation7 + $0x920] sm:$0xff]
    %v948 = vld [vmem:[#allocation7 + $0x928] sm:$0xff]
    %v949 = vld [vmem:[#allocation7 + $0x930] sm:$0xff]
    %v950 = vld [vmem:[#allocation7 + $0x938] sm:$0xff]
    %v951 = vld [vmem:[#allocation7 + $0x940] sm:$0xff]
    %v952 = vld [vmem:[#allocation7 + $0x948] sm:$0xff]
    %v953 = vld [vmem:[#allocation7 + $0x950] sm:$0xff]
    %v954 = vld [vmem:[#allocation7 + $0x958] sm:$0xff]
    %v955 = vld [vmem:[#allocation7 + $0x960] sm:$0xff]
    %v956 = vld [vmem:[#allocation7 + $0x968] sm:$0xff]
    %v957 = vld [vmem:[#allocation7 + $0x970] sm:$0xff]
    %v958 = vld [vmem:[#allocation7 + $0x978] sm:$0xff]
    %v959 = vld [vmem:[#allocation7 + $0x980] sm:$0xff]
    %v960 = vld [vmem:[#allocation7 + $0x988] sm:$0xff]
    %v961 = vld [vmem:[#allocation7 + $0x990] sm:$0xff]
    %v962 = vld [vmem:[#allocation7 + $0x998] sm:$0xff]
    %v963 = vld [vmem:[#allocation7 + $0x9a0] sm:$0xff]
    %v964 = vld [vmem:[#allocation7 + $0x9a8] sm:$0xff]
    %v965 = vld [vmem:[#allocation7 + $0x9b0] sm:$0xff]
    %v966 = vld [vmem:[#allocation7 + $0x9b8] sm:$0xff]
    %v967 = vld [vmem:[#allocation7 + $0x9c0] sm:$0xff]
    %v968 = vld [vmem:[#allocation7 + $0x9c8] sm:$0xff]
    %v969 = vld [vmem:[#allocation7 + $0x9d0] sm:$0xff]
    %v970 = vld [vmem:[#allocation7 + $0x9d8] sm:$0xff]
    %v971 = vld [vmem:[#allocation7 + $0x9e0] sm:$0xff]
    %v972 = vld [vmem:[#allocation7 + $0x9e8] sm:$0xff]
    %v973 = vld [vmem:[#allocation7 + $0x9f0] sm:$0xff]
    %v974 = vld [vmem:[#allocation7 + $0x9f8] sm:$0xff]
    %v975 = vld [vmem:[#allocation7 + $0xa00] sm:$0xff]
    %v976 = vld [vmem:[#allocation7 + $0xa08] sm:$0xff]
    %v977 = vld [vmem:[#allocation7 + $0xa10] sm:$0xff]
    %v978 = vld [vmem:[#allocation7 + $0xa18] sm:$0xff]
    %v979 = vld [vmem:[#allocation7 + $0xa20] sm:$0xff]
    %v980 = vld [vmem:[#allocation7 + $0xa28] sm:$0xff]
    %v981 = vld [vmem:[#allocation7 + $0xa30] sm:$0xff]
    %v982 = vld [vmem:[#allocation7 + $0xa38] sm:$0xff]
    %v983 = vld [vmem:[#allocation7 + $0xa40] sm:$0xff]
    %v984 = vld [vmem:[#allocation7 + $0xa48] sm:$0xff]
    %v985 = vld [vmem:[#allocation7 + $0xa50] sm:$0xff]
    %v986 = vld [vmem:[#allocation7 + $0xa58] sm:$0xff]
    %v987 = vld [vmem:[#allocation7 + $0xa60] sm:$0xff]
    %v988 = vld [vmem:[#allocation7 + $0xa68] sm:$0xff]
    %v989 = vld [vmem:[#allocation7 + $0xa70] sm:$0xff]
    %v990 = vld [vmem:[#allocation7 + $0xa78] sm:$0xff]
    %v991 = vld [vmem:[#allocation7 + $0xa80] sm:$0xff]
    %v992 = vld [vmem:[#allocation7 + $0xa88] sm:$0xff]
    %v993 = vld [vmem:[#allocation7 + $0xa90] sm:$0xff]
    %v994 = vld [vmem:[#allocation7 + $0xa98] sm:$0xff]
    %v995 = vld [vmem:[#allocation7 + $0xaa0] sm:$0xff]
    %v996 = vld [vmem:[#allocation7 + $0xaa8] sm:$0xff]
    %v997 = vld [vmem:[#allocation7 + $0xab0] sm:$0xff]
    %v998 = vld [vmem:[#allocation7 + $0xab8] sm:$0xff]
    %v999 = vld [vmem:[#allocation7 + $0xac0] sm:$0xff]
    %v1000 = vld [vmem:[#allocation7 + $0xac8] sm:$0xff]
    %v1001 = vld [vmem:[#allocation7 + $0xad0] sm:$0xff]
    %v1002 = vld [vmem:[#allocation7 + $0xad8] sm:$0xff]
    %v1003 = vld [vmem:[#allocation7 + $0xae0] sm:$0xff]
    %v1004 = vld [vmem:[#allocation7 + $0xae8] sm:$0xff]
    %v1005 = vld [vmem:[#allocation7 + $0xaf0] sm:$0xff]
    %v1006 = vld [vmem:[#allocation7 + $0xaf8] sm:$0xff]
    %v1007 = vld [vmem:[#allocation7 + $0xb00] sm:$0xff]
    %v1008 = vld [vmem:[#allocation7 + $0xb08] sm:$0xff]
    %v1009 = vld [vmem:[#allocation7 + $0xb10] sm:$0xff]
    %v1010 = vld [vmem:[#allocation7 + $0xb18] sm:$0xff]
    %v1011 = vld [vmem:[#allocation7 + $0xb20] sm:$0xff]
    %v1012 = vld [vmem:[#allocation7 + $0xb28] sm:$0xff]
    %v1013 = vld [vmem:[#allocation7 + $0xb30] sm:$0xff]
    %v1014 = vld [vmem:[#allocation7 + $0xb38] sm:$0xff]
    %v1015 = vld [vmem:[#allocation7 + $0xb40] sm:$0xff]
    %v1016 = vld [vmem:[#allocation7 + $0xb48] sm:$0xff]
    %v1017 = vld [vmem:[#allocation7 + $0xb50] sm:$0xff]
    %v1018 = vld [vmem:[#allocation7 + $0xb58] sm:$0xff]
    %v1019 = vld [vmem:[#allocation7 + $0xb60] sm:$0xff]
    %v1020 = vld [vmem:[#allocation7 + $0xb68] sm:$0xff]
    %v1021 = vld [vmem:[#allocation7 + $0xb70] sm:$0xff]
    %v1022 = vld [vmem:[#allocation7 + $0xb78] sm:$0xff]
    %v1023 = vld [vmem:[#allocation7 + $0xb80] sm:$0xff]
    %v1024 = vld [vmem:[#allocation7 + $0xb88] sm:$0xff]
    %v1025 = vld [vmem:[#allocation7 + $0xb90] sm:$0xff]
    %v1026 = vld [vmem:[#allocation7 + $0xb98] sm:$0xff]
    %v1027 = vld [vmem:[#allocation7 + $0xba0] sm:$0xff]
    %v1028 = vld [vmem:[#allocation7 + $0xba8] sm:$0xff]
    %v1029 = vld [vmem:[#allocation7 + $0xbb0] sm:$0xff]
    %v1030 = vld [vmem:[#allocation7 + $0xbb8] sm:$0xff]
    %v1031 = vld [vmem:[#allocation7 + $0xbc0] sm:$0xff]
    %v1032 = vld [vmem:[#allocation7 + $0xbc8] sm:$0xff]
    %v1033 = vld [vmem:[#allocation7 + $0xbd0] sm:$0xff]
    %v1034 = vld [vmem:[#allocation7 + $0xbd8] sm:$0xff]
    %v1035 = vld [vmem:[#allocation7 + $0xbe0] sm:$0xff]
    %v1036 = vld [vmem:[#allocation7 + $0xbe8] sm:$0xff]
    %v1037 = vld [vmem:[#allocation7 + $0xbf0] sm:$0xff]
    %v1038 = vld [vmem:[#allocation7 + $0xbf8] sm:$0xff]
    %v1039 = vld [vmem:[#allocation7 + $0xc00] sm:$0xff]
    %v1040 = vld [vmem:[#allocation7 + $0xc08] sm:$0xff]
    %v1041 = vld [vmem:[#allocation7 + $0xc10] sm:$0xff]
    %v1042 = vld [vmem:[#allocation7 + $0xc18] sm:$0xff]
    %v1043 = vld [vmem:[#allocation7 + $0xc20] sm:$0xff]
    %v1044 = vld [vmem:[#allocation7 + $0xc28] sm:$0xff]
    %v1045 = vld [vmem:[#allocation7 + $0xc30] sm:$0xff]
    %v1046 = vld [vmem:[#allocation7 + $0xc38] sm:$0xff]
    %v1047 = vld [vmem:[#allocation7 + $0xc40] sm:$0xff]
    %v1048 = vld [vmem:[#allocation7 + $0xc48] sm:$0xff]
    %v1049 = vld [vmem:[#allocation7 + $0xc50] sm:$0xff]
    %v1050 = vld [vmem:[#allocation7 + $0xc58] sm:$0xff]
    %v1051 = vld [vmem:[#allocation7 + $0xc60] sm:$0xff]
    %v1052 = vld [vmem:[#allocation7 + $0xc68] sm:$0xff]
    %v1053 = vld [vmem:[#allocation7 + $0xc70] sm:$0xff]
    %v1054 = vld [vmem:[#allocation7 + $0xc78] sm:$0xff]
    %v1055 = vld [vmem:[#allocation7 + $0xc80] sm:$0xff]
    %v1056 = vld [vmem:[#allocation7 + $0xc88] sm:$0xff]
    %v1057 = vld [vmem:[#allocation7 + $0xc90] sm:$0xff]
    %v1058 = vld [vmem:[#allocation7 + $0xc98] sm:$0xff]
    %v1059 = vld [vmem:[#allocation7 + $0xca0] sm:$0xff]
    %v1060 = vld [vmem:[#allocation7 + $0xca8] sm:$0xff]
    %v1061 = vld [vmem:[#allocation7 + $0xcb0] sm:$0xff]
    %v1062 = vld [vmem:[#allocation7 + $0xcb8] sm:$0xff]
    %v1063 = vld [vmem:[#allocation7 + $0xcc0] sm:$0xff]
    %v1064 = vld [vmem:[#allocation7 + $0xcc8] sm:$0xff]
    %v1065 = vld [vmem:[#allocation7 + $0xcd0] sm:$0xff]
    %v1066 = vld [vmem:[#allocation7 + $0xcd8] sm:$0xff]
    %v1067 = vld [vmem:[#allocation7 + $0xce0] sm:$0xff]
    %v1068 = vld [vmem:[#allocation7 + $0xce8] sm:$0xff]
    %v1069 = vld [vmem:[#allocation7 + $0xcf0] sm:$0xff]
    %v1070 = vld [vmem:[#allocation7 + $0xcf8] sm:$0xff]
    %v1071 = vld [vmem:[#allocation7 + $0xd00] sm:$0xff]
    %v1072 = vld [vmem:[#allocation7 + $0xd08] sm:$0xff]
    %v1073 = vld [vmem:[#allocation7 + $0xd10] sm:$0xff]
    %v1074 = vld [vmem:[#allocation7 + $0xd18] sm:$0xff]
    %v1075 = vld [vmem:[#allocation7 + $0xd20] sm:$0xff]
    %v1076 = vld [vmem:[#allocation7 + $0xd28] sm:$0xff]
    %v1077 = vld [vmem:[#allocation7 + $0xd30] sm:$0xff]
    %v1078 = vld [vmem:[#allocation7 + $0xd38] sm:$0xff]
    %v1079 = vld [vmem:[#allocation7 + $0xd40] sm:$0xff]
    %v1080 = vld [vmem:[#allocation7 + $0xd48] sm:$0xff]
    %v1081 = vld [vmem:[#allocation7 + $0xd50] sm:$0xff]
    %v1082 = vld [vmem:[#allocation7 + $0xd58] sm:$0xff]
    %v1083 = vld [vmem:[#allocation7 + $0xd60] sm:$0xff]
    %v1084 = vld [vmem:[#allocation7 + $0xd68] sm:$0xff]
    %v1085 = vld [vmem:[#allocation7 + $0xd70] sm:$0xff]
    %v1086 = vld [vmem:[#allocation7 + $0xd78] sm:$0xff]
    %v1087 = vld [vmem:[#allocation7 + $0xd80] sm:$0xff]
    %v1088 = vld [vmem:[#allocation7 + $0xd88] sm:$0xff]
    %v1089 = vld [vmem:[#allocation7 + $0xd90] sm:$0xff]
    %v1090 = vld [vmem:[#allocation7 + $0xd98] sm:$0xff]
    %v1091 = vld [vmem:[#allocation7 + $0xda0] sm:$0xff]
    %v1092 = vld [vmem:[#allocation7 + $0xda8] sm:$0xff]
    %v1093 = vld [vmem:[#allocation7 + $0xdb0] sm:$0xff]
    %v1094 = vld [vmem:[#allocation7 + $0xdb8] sm:$0xff]
    %v1095 = vld [vmem:[#allocation7 + $0xdc0] sm:$0xff]
    %v1096 = vld [vmem:[#allocation7 + $0xdc8] sm:$0xff]
    %v1097 = vld [vmem:[#allocation7 + $0xdd0] sm:$0xff]
    %v1098 = vld [vmem:[#allocation7 + $0xdd8] sm:$0xff]
    %v1099 = vld [vmem:[#allocation7 + $0xde0] sm:$0xff]
    %v1100 = vld [vmem:[#allocation7 + $0xde8] sm:$0xff]
    %v1101 = vld [vmem:[#allocation7 + $0xdf0] sm:$0xff]
    %v1102 = vld [vmem:[#allocation7 + $0xdf8] sm:$0xff]
    %v1103 = vld [vmem:[#allocation7 + $0xe00] sm:$0xff]
    %v1104 = vld [vmem:[#allocation7 + $0xe08] sm:$0xff]
    %v1105 = vld [vmem:[#allocation7 + $0xe10] sm:$0xff]
    %v1106 = vld [vmem:[#allocation7 + $0xe18] sm:$0xff]
    %v1107 = vld [vmem:[#allocation7 + $0xe20] sm:$0xff]
    %v1108 = vld [vmem:[#allocation7 + $0xe28] sm:$0xff]
    %v1109 = vld [vmem:[#allocation7 + $0xe30] sm:$0xff]
    %v1110 = vld [vmem:[#allocation7 + $0xe38] sm:$0xff]
    %v1111 = vld [vmem:[#allocation7 + $0xe40] sm:$0xff]
    %v1112 = vld [vmem:[#allocation7 + $0xe48] sm:$0xff]
    %v1113 = vld [vmem:[#allocation7 + $0xe50] sm:$0xff]
    %v1114 = vld [vmem:[#allocation7 + $0xe58] sm:$0xff]
    %v1115 = vld [vmem:[#allocation7 + $0xe60] sm:$0xff]
    %v1116 = vld [vmem:[#allocation7 + $0xe68] sm:$0xff]
    %v1117 = vld [vmem:[#allocation7 + $0xe70] sm:$0xff]
    %v1118 = vld [vmem:[#allocation7 + $0xe78] sm:$0xff]
    %v1119 = vld [vmem:[#allocation7 + $0xe80] sm:$0xff]
    %v1120 = vld [vmem:[#allocation7 + $0xe88] sm:$0xff]
    %v1121 = vld [vmem:[#allocation7 + $0xe90] sm:$0xff]
    %v1122 = vld [vmem:[#allocation7 + $0xe98] sm:$0xff]
    %v1123 = vld [vmem:[#allocation7 + $0xea0] sm:$0xff]
    %v1124 = vld [vmem:[#allocation7 + $0xea8] sm:$0xff]
    %v1125 = vld [vmem:[#allocation7 + $0xeb0] sm:$0xff]
    %v1126 = vld [vmem:[#allocation7 + $0xeb8] sm:$0xff]
    %v1127 = vld [vmem:[#allocation7 + $0xec0] sm:$0xff]
    %v1128 = vld [vmem:[#allocation7 + $0xec8] sm:$0xff]
    %v1129 = vld [vmem:[#allocation7 + $0xed0] sm:$0xff]
    %v1130 = vld [vmem:[#allocation7 + $0xed8] sm:$0xff]
    %v1131 = vld [vmem:[#allocation7 + $0xee0] sm:$0xff]
    %v1132 = vld [vmem:[#allocation7 + $0xee8] sm:$0xff]
    %v1133 = vld [vmem:[#allocation7 + $0xef0] sm:$0xff]
    %v1134 = vld [vmem:[#allocation7 + $0xef8] sm:$0xff]
    %v1135 = vld [vmem:[#allocation7 + $0xf00] sm:$0xff]
    %v1136 = vld [vmem:[#allocation7 + $0xf08] sm:$0xff]
    %v1137 = vld [vmem:[#allocation7 + $0xf10] sm:$0xff]
    %v1138 = vld [vmem:[#allocation7 + $0xf18] sm:$0xff]
    %v1139 = vld [vmem:[#allocation7 + $0xf20] sm:$0xff]
    %v1140 = vld [vmem:[#allocation7 + $0xf28] sm:$0xff]
    %v1141 = vld [vmem:[#allocation7 + $0xf30] sm:$0xff]
    %v1142 = vld [vmem:[#allocation7 + $0xf38] sm:$0xff]
    %v1143 = vld [vmem:[#allocation7 + $0xf40] sm:$0xff]
    %v1144 = vld [vmem:[#allocation7 + $0xf48] sm:$0xff]
    %v1145 = vld [vmem:[#allocation7 + $0xf50] sm:$0xff]
    %v1146 = vld [vmem:[#allocation7 + $0xf58] sm:$0xff]
    %v1147 = vld [vmem:[#allocation7 + $0xf60] sm:$0xff]
    %v1148 = vld [vmem:[#allocation7 + $0xf68] sm:$0xff]
    %v1149 = vld [vmem:[#allocation7 + $0xf70] sm:$0xff]
    %v1150 = vld [vmem:[#allocation7 + $0xf78] sm:$0xff]
    %v1151 = vld [vmem:[#allocation7 + $0xf80] sm:$0xff]
    %v1152 = vld [vmem:[#allocation7 + $0xf88] sm:$0xff]
    %v1153 = vld [vmem:[#allocation7 + $0xf90] sm:$0xff]
    %v1154 = vld [vmem:[#allocation7 + $0xf98] sm:$0xff]
    %v1155 = vld [vmem:[#allocation7 + $0xfa0] sm:$0xff]
    %v1156 = vld [vmem:[#allocation7 + $0xfa8] sm:$0xff]
    %v1157 = vld [vmem:[#allocation7 + $0xfb0] sm:$0xff]
    %v1158 = vld [vmem:[#allocation7 + $0xfb8] sm:$0xff]
    %v1159 = vld [vmem:[#allocation7 + $0xfc0] sm:$0xff]
    %v1160 = vld [vmem:[#allocation7 + $0xfc8] sm:$0xff]
    %v1161 = vld [vmem:[#allocation7 + $0xfd0] sm:$0xff]
    %v1162 = vld [vmem:[#allocation7 + $0xfd8] sm:$0xff]
    %v1163 = vld [vmem:[#allocation7 + $0xfe0] sm:$0xff]
    %v1164 = vld [vmem:[#allocation7 + $0xfe8] sm:$0xff]
    %v1165 = vld [vmem:[#allocation7 + $0xff0] sm:$0xff]
    %v1166 = vld [vmem:[#allocation7 + $0xff8] sm:$0xff]
    %v1167 = vld [vmem:[#allocation7 + $0x1000] sm:$0xff]
    %v1168 = vld [vmem:[#allocation7 + $0x1008] sm:$0xff]
    %v1169 = vld [vmem:[#allocation7 + $0x1010] sm:$0xff]
    %v1170 = vld [vmem:[#allocation7 + $0x1018] sm:$0xff]
    %v1171 = vld [vmem:[#allocation7 + $0x1020] sm:$0xff]
    %v1172 = vld [vmem:[#allocation7 + $0x1028] sm:$0xff]
    %v1173 = vld [vmem:[#allocation7 + $0x1030] sm:$0xff]
    %v1174 = vld [vmem:[#allocation7 + $0x1038] sm:$0xff]
    %v1175 = vld [vmem:[#allocation7 + $0x1040] sm:$0xff]
    %v1176 = vld [vmem:[#allocation7 + $0x1048] sm:$0xff]
    %v1177 = vld [vmem:[#allocation7 + $0x1050] sm:$0xff]
    %v1178 = vld [vmem:[#allocation7 + $0x1058] sm:$0xff]
    %v1179 = vld [vmem:[#allocation7 + $0x1060] sm:$0xff]
    %v1180 = vld [vmem:[#allocation7 + $0x1068] sm:$0xff]
    %v1181 = vld [vmem:[#allocation7 + $0x1070] sm:$0xff]
    %v1182 = vld [vmem:[#allocation7 + $0x1078] sm:$0xff]
    %v1183 = vld [vmem:[#allocation7 + $0x1080] sm:$0xff]
    %v1184 = vld [vmem:[#allocation7 + $0x1088] sm:$0xff]
    %v1185 = vld [vmem:[#allocation7 + $0x1090] sm:$0xff]
    %v1186 = vld [vmem:[#allocation7 + $0x1098] sm:$0xff]
    %v1187 = vld [vmem:[#allocation7 + $0x10a0] sm:$0xff]
    %v1188 = vld [vmem:[#allocation7 + $0x10a8] sm:$0xff]
    %v1189 = vld [vmem:[#allocation7 + $0x10b0] sm:$0xff]
    %v1190 = vld [vmem:[#allocation7 + $0x10b8] sm:$0xff]
    %v1191 = vld [vmem:[#allocation7 + $0x10c0] sm:$0xff]
    %v1192 = vld [vmem:[#allocation7 + $0x10c8] sm:$0xff]
    %v1193 = vld [vmem:[#allocation7 + $0x10d0] sm:$0xff]
    %v1194 = vld [vmem:[#allocation7 + $0x10d8] sm:$0xff]
    %v1195 = vld [vmem:[#allocation7 + $0x10e0] sm:$0xff]
    %v1196 = vld [vmem:[#allocation7 + $0x10e8] sm:$0xff]
    %v1197 = vld [vmem:[#allocation7 + $0x10f0] sm:$0xff]
    %v1198 = vld [vmem:[#allocation7 + $0x10f8] sm:$0xff]
    %v1199 = vld [vmem:[#allocation7 + $0x1100] sm:$0xff]
    %v1200 = vld [vmem:[#allocation7 + $0x1108] sm:$0xff]
    %v1201 = vld [vmem:[#allocation7 + $0x1110] sm:$0xff]
    %v1202 = vld [vmem:[#allocation7 + $0x1118] sm:$0xff]
    %v1203 = vld [vmem:[#allocation7 + $0x1120] sm:$0xff]
    %v1204 = vld [vmem:[#allocation7 + $0x1128] sm:$0xff]
    %v1205 = vld [vmem:[#allocation7 + $0x1130] sm:$0xff]
    %v1206 = vld [vmem:[#allocation7 + $0x1138] sm:$0xff]
    %v1207 = vld [vmem:[#allocation7 + $0x1140] sm:$0xff]
    %v1208 = vld [vmem:[#allocation7 + $0x1148] sm:$0xff]
    %v1209 = vld [vmem:[#allocation7 + $0x1150] sm:$0xff]
    %v1210 = vld [vmem:[#allocation7 + $0x1158] sm:$0xff]
    %v1211 = vld [vmem:[#allocation7 + $0x1160] sm:$0xff]
    %v1212 = vld [vmem:[#allocation7 + $0x1168] sm:$0xff]
    %v1213 = vld [vmem:[#allocation7 + $0x1170] sm:$0xff]
    %v1214 = vld [vmem:[#allocation7 + $0x1178] sm:$0xff]
    %v1215 = vld [vmem:[#allocation7 + $0x1180] sm:$0xff]
    %v1216 = vld [vmem:[#allocation7 + $0x1188] sm:$0xff]
    %v1217 = vld [vmem:[#allocation7 + $0x1190] sm:$0xff]
    %v1218 = vld [vmem:[#allocation7 + $0x1198] sm:$0xff]
    %v1219 = vld [vmem:[#allocation7 + $0x11a0] sm:$0xff]
    %v1220 = vld [vmem:[#allocation7 + $0x11a8] sm:$0xff]
    %v1221 = vld [vmem:[#allocation7 + $0x11b0] sm:$0xff]
    %v1222 = vld [vmem:[#allocation7 + $0x11b8] sm:$0xff]
    %v1223 = vld [vmem:[#allocation7 + $0x11c0] sm:$0xff]
    %v1224 = vld [vmem:[#allocation7 + $0x11c8] sm:$0xff]
    %v1225 = vld [vmem:[#allocation7 + $0x11d0] sm:$0xff]
    %v1226 = vld [vmem:[#allocation7 + $0x11d8] sm:$0xff]
    %v1227 = vld [vmem:[#allocation7 + $0x11e0] sm:$0xff]
    %v1228 = vld [vmem:[#allocation7 + $0x11e8] sm:$0xff]
    %v1229 = vld [vmem:[#allocation7 + $0x11f0] sm:$0xff]
    %v1230 = vld [vmem:[#allocation7 + $0x11f8] sm:$0xff]
    %v1231 = vld [vmem:[#allocation7 + $0x1200] sm:$0xff]
    %v1232 = vld [vmem:[#allocation7 + $0x1208] sm:$0xff]
    %v1233 = vld [vmem:[#allocation7 + $0x1210] sm:$0xff]
    %v1234 = vld [vmem:[#allocation7 + $0x1218] sm:$0xff]
    %v1235 = vld [vmem:[#allocation7 + $0x1220] sm:$0xff]
    %v1236 = vld [vmem:[#allocation7 + $0x1228] sm:$0xff]
    %v1237 = vld [vmem:[#allocation7 + $0x1230] sm:$0xff]
    %v1238 = vld [vmem:[#allocation7 + $0x1238] sm:$0xff]
    %v1239 = vld [vmem:[#allocation7 + $0x1240] sm:$0xff]
    %v1240 = vld [vmem:[#allocation7 + $0x1248] sm:$0xff]
    %v1241 = vld [vmem:[#allocation7 + $0x1250] sm:$0xff]
    %v1242 = vld [vmem:[#allocation7 + $0x1258] sm:$0xff]
    %v1243 = vld [vmem:[#allocation7 + $0x1260] sm:$0xff]
    %v1244 = vld [vmem:[#allocation7 + $0x1268] sm:$0xff]
    %v1245 = vld [vmem:[#allocation7 + $0x1270] sm:$0xff]
    %v1246 = vld [vmem:[#allocation7 + $0x1278] sm:$0xff]
    %v1247 = vld [vmem:[#allocation7 + $0x1280] sm:$0xff]
    %v1248 = vld [vmem:[#allocation7 + $0x1288] sm:$0xff]
    %v1249 = vld [vmem:[#allocation7 + $0x1290] sm:$0xff]
    %v1250 = vld [vmem:[#allocation7 + $0x1298] sm:$0xff]
    %v1251 = vld [vmem:[#allocation7 + $0x12a0] sm:$0xff]
    %v1252 = vld [vmem:[#allocation7 + $0x12a8] sm:$0xff]
    %v1253 = vld [vmem:[#allocation7 + $0x12b0] sm:$0xff]
    %v1254 = vld [vmem:[#allocation7 + $0x12b8] sm:$0xff]
    %v1255 = vld [vmem:[#allocation7 + $0x12c0] sm:$0xff]
    %v1256 = vld [vmem:[#allocation7 + $0x12c8] sm:$0xff]
    %v1257 = vld [vmem:[#allocation7 + $0x12d0] sm:$0xff]
    %v1258 = vld [vmem:[#allocation7 + $0x12d8] sm:$0xff]
    %v1259 = vld [vmem:[#allocation7 + $0x12e0] sm:$0xff]
    %v1260 = vld [vmem:[#allocation7 + $0x12e8] sm:$0xff]
    %v1261 = vld [vmem:[#allocation7 + $0x12f0] sm:$0xff]
    %v1262 = vld [vmem:[#allocation7 + $0x12f8] sm:$0xff]
    %v1263 = vld [vmem:[#allocation7 + $0x1300] sm:$0xff]
    %v1264 = vld [vmem:[#allocation7 + $0x1308] sm:$0xff]
    %v1265 = vld [vmem:[#allocation7 + $0x1310] sm:$0xff]
    %v1266 = vld [vmem:[#allocation7 + $0x1318] sm:$0xff]
    %v1267 = vld [vmem:[#allocation7 + $0x1320] sm:$0xff]
    %v1268 = vld [vmem:[#allocation7 + $0x1328] sm:$0xff]
    %v1269 = vld [vmem:[#allocation7 + $0x1330] sm:$0xff]
    %v1270 = vld [vmem:[#allocation7 + $0x1338] sm:$0xff]
    %v1271 = vld [vmem:[#allocation7 + $0x1340] sm:$0xff]
    %v1272 = vld [vmem:[#allocation7 + $0x1348] sm:$0xff]
    %v1273 = vld [vmem:[#allocation7 + $0x1350] sm:$0xff]
    %v1274 = vld [vmem:[#allocation7 + $0x1358] sm:$0xff]
    %v1275 = vld [vmem:[#allocation7 + $0x1360] sm:$0xff]
    %v1276 = vld [vmem:[#allocation7 + $0x1368] sm:$0xff]
    %v1277 = vld [vmem:[#allocation7 + $0x1370] sm:$0xff]
    %v1278 = vld [vmem:[#allocation7 + $0x1378] sm:$0xff]
    %v1279 = vld [vmem:[#allocation7 + $0x1380] sm:$0xff]
    %v1280 = vld [vmem:[#allocation7 + $0x1388] sm:$0xff]
    %v1281 = vld [vmem:[#allocation7 + $0x1390] sm:$0xff]
    %v1282 = vld [vmem:[#allocation7 + $0x1398] sm:$0xff]
    %v1283 = vld [vmem:[#allocation7 + $0x13a0] sm:$0xff]
    %v1284 = vld [vmem:[#allocation7 + $0x13a8] sm:$0xff]
    %v1285 = vld [vmem:[#allocation7 + $0x13b0] sm:$0xff]
    %v1286 = vld [vmem:[#allocation7 + $0x13b8] sm:$0xff]
    %v1287 = vld [vmem:[#allocation7 + $0x13c0] sm:$0xff]
    %v1288 = vld [vmem:[#allocation7 + $0x13c8] sm:$0xff]
    %v1289 = vld [vmem:[#allocation7 + $0x13d0] sm:$0xff]
    %v1290 = vld [vmem:[#allocation7 + $0x13d8] sm:$0xff]
    %v1291 = vld [vmem:[#allocation7 + $0x13e0] sm:$0xff]
    %v1292 = vld [vmem:[#allocation7 + $0x13e8] sm:$0xff]
    %v1293 = vld [vmem:[#allocation7 + $0x13f0] sm:$0xff]
    %v1294 = vld [vmem:[#allocation7 + $0x13f8] sm:$0xff]
    %v1295 = vld [vmem:[#allocation7 + $0x1400] sm:$0xff]
    %v1296 = vld [vmem:[#allocation7 + $0x1408] sm:$0xff]
    %v1297 = vld [vmem:[#allocation7 + $0x1410] sm:$0xff]
    %v1298 = vld [vmem:[#allocation7 + $0x1418] sm:$0xff]
    %v1299 = vld [vmem:[#allocation7 + $0x1420] sm:$0xff]
    %v1300 = vld [vmem:[#allocation7 + $0x1428] sm:$0xff]
    %v1301 = vld [vmem:[#allocation7 + $0x1430] sm:$0xff]
    %v1302 = vld [vmem:[#allocation7 + $0x1438] sm:$0xff]
    %v1303 = vld [vmem:[#allocation7 + $0x1440] sm:$0xff]
    %v1304 = vld [vmem:[#allocation7 + $0x1448] sm:$0xff]
    %v1305 = vld [vmem:[#allocation7 + $0x1450] sm:$0xff]
    %v1306 = vld [vmem:[#allocation7 + $0x1458] sm:$0xff]
    %v1307 = vld [vmem:[#allocation7 + $0x1460] sm:$0xff]
    %v1308 = vld [vmem:[#allocation7 + $0x1468] sm:$0xff]
    %v1309 = vld [vmem:[#allocation7 + $0x1470] sm:$0xff]
    %v1310 = vld [vmem:[#allocation7 + $0x1478] sm:$0xff]
    %v1311 = vld [vmem:[#allocation7 + $0x1480] sm:$0xff]
    %v1312 = vld [vmem:[#allocation7 + $0x1488] sm:$0xff]
    %v1313 = vld [vmem:[#allocation7 + $0x1490] sm:$0xff]
    %v1314 = vld [vmem:[#allocation7 + $0x1498] sm:$0xff]
    %v1315 = vld [vmem:[#allocation7 + $0x14a0] sm:$0xff]
    %v1316 = vld [vmem:[#allocation7 + $0x14a8] sm:$0xff]
    %v1317 = vld [vmem:[#allocation7 + $0x14b0] sm:$0xff]
    %v1318 = vld [vmem:[#allocation7 + $0x14b8] sm:$0xff]
    %v1319 = vld [vmem:[#allocation7 + $0x14c0] sm:$0xff]
    %v1320 = vld [vmem:[#allocation7 + $0x14c8] sm:$0xff]
    %v1321 = vld [vmem:[#allocation7 + $0x14d0] sm:$0xff]
    %v1322 = vld [vmem:[#allocation7 + $0x14d8] sm:$0xff]
    %v1323 = vld [vmem:[#allocation7 + $0x14e0] sm:$0xff]
    %v1324 = vld [vmem:[#allocation7 + $0x14e8] sm:$0xff]
    %v1325 = vld [vmem:[#allocation7 + $0x14f0] sm:$0xff]
    %v1326 = vld [vmem:[#allocation7 + $0x14f8] sm:$0xff]
    %v1327 = vld [vmem:[#allocation7 + $0x1500] sm:$0xff]
    %v1328 = vld [vmem:[#allocation7 + $0x1508] sm:$0xff]
    %v1329 = vld [vmem:[#allocation7 + $0x1510] sm:$0xff]
    %v1330 = vld [vmem:[#allocation7 + $0x1518] sm:$0xff]
    %v1331 = vld [vmem:[#allocation7 + $0x1520] sm:$0xff]
    %v1332 = vld [vmem:[#allocation7 + $0x1528] sm:$0xff]
    %v1333 = vld [vmem:[#allocation7 + $0x1530] sm:$0xff]
    %v1334 = vld [vmem:[#allocation7 + $0x1538] sm:$0xff]
    %v1335 = vld [vmem:[#allocation7 + $0x1540] sm:$0xff]
    %v1336 = vld [vmem:[#allocation7 + $0x1548] sm:$0xff]
    %v1337 = vld [vmem:[#allocation7 + $0x1550] sm:$0xff]
    %v1338 = vld [vmem:[#allocation7 + $0x1558] sm:$0xff]
    %v1339 = vld [vmem:[#allocation7 + $0x1560] sm:$0xff]
    %v1340 = vld [vmem:[#allocation7 + $0x1568] sm:$0xff]
    %v1341 = vld [vmem:[#allocation7 + $0x1570] sm:$0xff]
    %v1342 = vld [vmem:[#allocation7 + $0x1578] sm:$0xff]
    %v1343 = vld [vmem:[#allocation7 + $0x1580] sm:$0xff]
    %v1344 = vld [vmem:[#allocation7 + $0x1588] sm:$0xff]
    %v1345 = vld [vmem:[#allocation7 + $0x1590] sm:$0xff]
    %v1346 = vld [vmem:[#allocation7 + $0x1598] sm:$0xff]
    %v1347 = vld [vmem:[#allocation7 + $0x15a0] sm:$0xff]
    %v1348 = vld [vmem:[#allocation7 + $0x15a8] sm:$0xff]
    %v1349 = vld [vmem:[#allocation7 + $0x15b0] sm:$0xff]
    %v1350 = vld [vmem:[#allocation7 + $0x15b8] sm:$0xff]
    %v1351 = vld [vmem:[#allocation7 + $0x15c0] sm:$0xff]
    %v1352 = vld [vmem:[#allocation7 + $0x15c8] sm:$0xff]
    %v1353 = vld [vmem:[#allocation7 + $0x15d0] sm:$0xff]
    %v1354 = vld [vmem:[#allocation7 + $0x15d8] sm:$0xff]
    %v1355 = vld [vmem:[#allocation7 + $0x15e0] sm:$0xff]
    %v1356 = vld [vmem:[#allocation7 + $0x15e8] sm:$0xff]
    %v1357 = vld [vmem:[#allocation7 + $0x15f0] sm:$0xff]
    %v1358 = vld [vmem:[#allocation7 + $0x15f8] sm:$0xff]
    %v1359 = vld [vmem:[#allocation7 + $0x1600] sm:$0xff]
    %v1360 = vld [vmem:[#allocation7 + $0x1608] sm:$0xff]
    %v1361 = vld [vmem:[#allocation7 + $0x1610] sm:$0xff]
    %v1362 = vld [vmem:[#allocation7 + $0x1618] sm:$0xff]
    %v1363 = vld [vmem:[#allocation7 + $0x1620] sm:$0xff]
    %v1364 = vld [vmem:[#allocation7 + $0x1628] sm:$0xff]
    %v1365 = vld [vmem:[#allocation7 + $0x1630] sm:$0xff]
    %v1366 = vld [vmem:[#allocation7 + $0x1638] sm:$0xff]
    %v1367 = vld [vmem:[#allocation7 + $0x1640] sm:$0xff]
    %v1368 = vld [vmem:[#allocation7 + $0x1648] sm:$0xff]
    %v1369 = vld [vmem:[#allocation7 + $0x1650] sm:$0xff]
    %v1370 = vld [vmem:[#allocation7 + $0x1658] sm:$0xff]
    %v1371 = vld [vmem:[#allocation7 + $0x1660] sm:$0xff]
    %v1372 = vld [vmem:[#allocation7 + $0x1668] sm:$0xff]
    %v1373 = vld [vmem:[#allocation7 + $0x1670] sm:$0xff]
    %v1374 = vld [vmem:[#allocation7 + $0x1678] sm:$0xff]
    %v1375 = vld [vmem:[#allocation7 + $0x1680] sm:$0xff]
    %v1376 = vld [vmem:[#allocation7 + $0x1688] sm:$0xff]
    %v1377 = vld [vmem:[#allocation7 + $0x1690] sm:$0xff]
    %v1378 = vld [vmem:[#allocation7 + $0x1698] sm:$0xff]
    %v1379 = vld [vmem:[#allocation7 + $0x16a0] sm:$0xff]
    %v1380 = vld [vmem:[#allocation7 + $0x16a8] sm:$0xff]
    %v1381 = vld [vmem:[#allocation7 + $0x16b0] sm:$0xff]
    %v1382 = vld [vmem:[#allocation7 + $0x16b8] sm:$0xff]
    %v1383 = vld [vmem:[#allocation7 + $0x16c0] sm:$0xff]
    %v1384 = vld [vmem:[#allocation7 + $0x16c8] sm:$0xff]
    %v1385 = vld [vmem:[#allocation7 + $0x16d0] sm:$0xff]
    %v1386 = vld [vmem:[#allocation7 + $0x16d8] sm:$0xff]
    %v1387 = vld [vmem:[#allocation7 + $0x16e0] sm:$0xff]
    %v1388 = vld [vmem:[#allocation7 + $0x16e8] sm:$0xff]
    %v1389 = vld [vmem:[#allocation7 + $0x16f0] sm:$0xff]
    %v1390 = vld [vmem:[#allocation7 + $0x16f8] sm:$0xff]
    %v1391 = vld [vmem:[#allocation7 + $0x1700] sm:$0xff]
    %v1392 = vld [vmem:[#allocation7 + $0x1708] sm:$0xff]
    %v1393 = vld [vmem:[#allocation7 + $0x1710] sm:$0xff]
    %v1394 = vld [vmem:[#allocation7 + $0x1718] sm:$0xff]
    %v1395 = vld [vmem:[#allocation7 + $0x1720] sm:$0xff]
    %v1396 = vld [vmem:[#allocation7 + $0x1728] sm:$0xff]
    %v1397 = vld [vmem:[#allocation7 + $0x1730] sm:$0xff]
    %v1398 = vld [vmem:[#allocation7 + $0x1738] sm:$0xff]
    %v1399 = vld [vmem:[#allocation7 + $0x1740] sm:$0xff]
    %v1400 = vld [vmem:[#allocation7 + $0x1748] sm:$0xff]
    %v1401 = vld [vmem:[#allocation7 + $0x1750] sm:$0xff]
    %v1402 = vld [vmem:[#allocation7 + $0x1758] sm:$0xff]
    %v1403 = vld [vmem:[#allocation7 + $0x1760] sm:$0xff]
    %v1404 = vld [vmem:[#allocation7 + $0x1768] sm:$0xff]
    %v1405 = vld [vmem:[#allocation7 + $0x1770] sm:$0xff]
    %v1406 = vld [vmem:[#allocation7 + $0x1778] sm:$0xff]
    %v1407 = vld [vmem:[#allocation7 + $0x1780] sm:$0xff]
    %v1408 = vld [vmem:[#allocation7 + $0x1788] sm:$0xff]
    %v1409 = vld [vmem:[#allocation7 + $0x1790] sm:$0xff]
    %v1410 = vld [vmem:[#allocation7 + $0x1798] sm:$0xff]
    %v1411 = vld [vmem:[#allocation7 + $0x17a0] sm:$0xff]
    %v1412 = vld [vmem:[#allocation7 + $0x17a8] sm:$0xff]
    %v1413 = vld [vmem:[#allocation7 + $0x17b0] sm:$0xff]
    %v1414 = vld [vmem:[#allocation7 + $0x17b8] sm:$0xff]
    %v1415 = vld [vmem:[#allocation7 + $0x17c0] sm:$0xff]
    %v1416 = vld [vmem:[#allocation7 + $0x17c8] sm:$0xff]
    %v1417 = vld [vmem:[#allocation7 + $0x17d0] sm:$0xff]
    %v1418 = vld [vmem:[#allocation7 + $0x17d8] sm:$0xff]
    %v1419 = vld [vmem:[#allocation7 + $0x17e0] sm:$0xff]
    %v1420 = vld [vmem:[#allocation7 + $0x17e8] sm:$0xff]
    %v1421 = vld [vmem:[#allocation7 + $0x17f0] sm:$0xff]
    %v1422 = vld [vmem:[#allocation7 + $0x17f8] sm:$0xff]
    %v1423 = vld [vmem:[#allocation7 + $0x1800] sm:$0xff]
    %v1424 = vld [vmem:[#allocation7 + $0x1808] sm:$0xff]
    %v1425 = vld [vmem:[#allocation7 + $0x1810] sm:$0xff]
    %v1426 = vld [vmem:[#allocation7 + $0x1818] sm:$0xff]
    %v1427 = vld [vmem:[#allocation7 + $0x1820] sm:$0xff]
    %v1428 = vld [vmem:[#allocation7 + $0x1828] sm:$0xff]
    %v1429 = vld [vmem:[#allocation7 + $0x1830] sm:$0xff]
    %v1430 = vld [vmem:[#allocation7 + $0x1838] sm:$0xff]
    %v1431 = vld [vmem:[#allocation7 + $0x1840] sm:$0xff]
    %v1432 = vld [vmem:[#allocation7 + $0x1848] sm:$0xff]
    %v1433 = vld [vmem:[#allocation7 + $0x1850] sm:$0xff]
    %v1434 = vld [vmem:[#allocation7 + $0x1858] sm:$0xff]
    %v1435 = vld [vmem:[#allocation7 + $0x1860] sm:$0xff]
    %v1436 = vld [vmem:[#allocation7 + $0x1868] sm:$0xff]
    %v1437 = vld [vmem:[#allocation7 + $0x1870] sm:$0xff]
    %v1438 = vld [vmem:[#allocation7 + $0x1878] sm:$0xff]
    %v1439 = vld [vmem:[#allocation7 + $0x1880] sm:$0xff]
    %v1440 = vld [vmem:[#allocation7 + $0x1888] sm:$0xff]
    %v1441 = vld [vmem:[#allocation7 + $0x1890] sm:$0xff]
    %v1442 = vld [vmem:[#allocation7 + $0x1898] sm:$0xff]
    %v1443 = vld [vmem:[#allocation7 + $0x18a0] sm:$0xff]
    %v1444 = vld [vmem:[#allocation7 + $0x18a8] sm:$0xff]
    %v1445 = vld [vmem:[#allocation7 + $0x18b0] sm:$0xff]
    %v1446 = vld [vmem:[#allocation7 + $0x18b8] sm:$0xff]
    %v1447 = vld [vmem:[#allocation7 + $0x18c0] sm:$0xff]
    %v1448 = vld [vmem:[#allocation7 + $0x18c8] sm:$0xff]
    %v1449 = vld [vmem:[#allocation7 + $0x18d0] sm:$0xff]
    %v1450 = vld [vmem:[#allocation7 + $0x18d8] sm:$0xff]
    %v1451 = vld [vmem:[#allocation7 + $0x18e0] sm:$0xff]
    %v1452 = vld [vmem:[#allocation7 + $0x18e8] sm:$0xff]
    %v1453 = vld [vmem:[#allocation7 + $0x18f0] sm:$0xff]
    %v1454 = vld [vmem:[#allocation7 + $0x18f8] sm:$0xff]
    %v1455 = vld [vmem:[#allocation7 + $0x1900] sm:$0xff]
    %v1456 = vld [vmem:[#allocation7 + $0x1908] sm:$0xff]
    %v1457 = vld [vmem:[#allocation7 + $0x1910] sm:$0xff]
    %v1458 = vld [vmem:[#allocation7 + $0x1918] sm:$0xff]
    %v1459 = vld [vmem:[#allocation7 + $0x1920] sm:$0xff]
    %v1460 = vld [vmem:[#allocation7 + $0x1928] sm:$0xff]
    %v1461 = vld [vmem:[#allocation7 + $0x1930] sm:$0xff]
    %v1462 = vld [vmem:[#allocation7 + $0x1938] sm:$0xff]
    %v1463 = vld [vmem:[#allocation7 + $0x1940] sm:$0xff]
    %v1464 = vld [vmem:[#allocation7 + $0x1948] sm:$0xff]
    %v1465 = vld [vmem:[#allocation7 + $0x1950] sm:$0xff]
    %v1466 = vld [vmem:[#allocation7 + $0x1958] sm:$0xff]
    %v1467 = vld [vmem:[#allocation7 + $0x1960] sm:$0xff]
    %v1468 = vld [vmem:[#allocation7 + $0x1968] sm:$0xff]
    %v1469 = vld [vmem:[#allocation7 + $0x1970] sm:$0xff]
    %v1470 = vld [vmem:[#allocation7 + $0x1978] sm:$0xff]
    %v1471 = vld [vmem:[#allocation7 + $0x1980] sm:$0xff]
    %v1472 = vld [vmem:[#allocation7 + $0x1988] sm:$0xff]
    %v1473 = vld [vmem:[#allocation7 + $0x1990] sm:$0xff]
    %v1474 = vld [vmem:[#allocation7 + $0x1998] sm:$0xff]
    %v1475 = vld [vmem:[#allocation7 + $0x19a0] sm:$0xff]
    %v1476 = vld [vmem:[#allocation7 + $0x19a8] sm:$0xff]
    %v1477 = vld [vmem:[#allocation7 + $0x19b0] sm:$0xff]
    %v1478 = vld [vmem:[#allocation7 + $0x19b8] sm:$0xff]
    %v1479 = vld [vmem:[#allocation7 + $0x19c0] sm:$0xff]
    %v1480 = vld [vmem:[#allocation7 + $0x19c8] sm:$0xff]
    %v1481 = vld [vmem:[#allocation7 + $0x19d0] sm:$0xff]
    %v1482 = vld [vmem:[#allocation7 + $0x19d8] sm:$0xff]
    %v1483 = vld [vmem:[#allocation7 + $0x19e0] sm:$0xff]
    %v1484 = vld [vmem:[#allocation7 + $0x19e8] sm:$0xff]
    %v1485 = vld [vmem:[#allocation7 + $0x19f0] sm:$0xff]
    %v1486 = vld [vmem:[#allocation7 + $0x19f8] sm:$0xff]
    %v1487 = vld [vmem:[#allocation7 + $0x1a00] sm:$0xff]
    %v1488 = vld [vmem:[#allocation7 + $0x1a08] sm:$0xff]
    %v1489 = vld [vmem:[#allocation7 + $0x1a10] sm:$0xff]
    %v1490 = vld [vmem:[#allocation7 + $0x1a18] sm:$0xff]
    %v1491 = vld [vmem:[#allocation7 + $0x1a20] sm:$0xff]
    %v1492 = vld [vmem:[#allocation7 + $0x1a28] sm:$0xff]
    %v1493 = vld [vmem:[#allocation7 + $0x1a30] sm:$0xff]
    %v1494 = vld [vmem:[#allocation7 + $0x1a38] sm:$0xff]
    %v1495 = vld [vmem:[#allocation7 + $0x1a40] sm:$0xff]
    %v1496 = vld [vmem:[#allocation7 + $0x1a48] sm:$0xff]
    %v1497 = vld [vmem:[#allocation7 + $0x1a50] sm:$0xff]
    %v1498 = vld [vmem:[#allocation7 + $0x1a58] sm:$0xff]
    %v1499 = vld [vmem:[#allocation7 + $0x1a60] sm:$0xff]
    %v1500 = vld [vmem:[#allocation7 + $0x1a68] sm:$0xff]
    %v1501 = vld [vmem:[#allocation7 + $0x1a70] sm:$0xff]
    %v1502 = vld [vmem:[#allocation7 + $0x1a78] sm:$0xff]
    %v1503 = vld [vmem:[#allocation7 + $0x1a80] sm:$0xff]
    %v1504 = vld [vmem:[#allocation7 + $0x1a88] sm:$0xff]
    %v1505 = vld [vmem:[#allocation7 + $0x1a90] sm:$0xff]
    %v1506 = vld [vmem:[#allocation7 + $0x1a98] sm:$0xff]
    %v1507 = vld [vmem:[#allocation7 + $0x1aa0] sm:$0xff]
    %v1508 = vld [vmem:[#allocation7 + $0x1aa8] sm:$0xff]
    %v1509 = vld [vmem:[#allocation7 + $0x1ab0] sm:$0xff]
    %v1510 = vld [vmem:[#allocation7 + $0x1ab8] sm:$0xff]
    %v1511 = vld [vmem:[#allocation7 + $0x1ac0] sm:$0xff]
    %v1512 = vld [vmem:[#allocation7 + $0x1ac8] sm:$0xff]
    %v1513 = vld [vmem:[#allocation7 + $0x1ad0] sm:$0xff]
    %v1514 = vld [vmem:[#allocation7 + $0x1ad8] sm:$0xff]
    %v1515 = vld [vmem:[#allocation7 + $0x1ae0] sm:$0xff]
    %v1516 = vld [vmem:[#allocation7 + $0x1ae8] sm:$0xff]
    %v1517 = vld [vmem:[#allocation7 + $0x1af0] sm:$0xff]
    %v1518 = vld [vmem:[#allocation7 + $0x1af8] sm:$0xff]
    %v1519 = vld [vmem:[#allocation7 + $0x1b00] sm:$0xff]
    %v1520 = vld [vmem:[#allocation7 + $0x1b08] sm:$0xff]
    %v1521 = vld [vmem:[#allocation7 + $0x1b10] sm:$0xff]
    %v1522 = vld [vmem:[#allocation7 + $0x1b18] sm:$0xff]
    %v1523 = vld [vmem:[#allocation7 + $0x1b20] sm:$0xff]
    %v1524 = vld [vmem:[#allocation7 + $0x1b28] sm:$0xff]
    %v1525 = vld [vmem:[#allocation7 + $0x1b30] sm:$0xff]
    %v1526 = vld [vmem:[#allocation7 + $0x1b38] sm:$0xff]
    %v1527 = vld [vmem:[#allocation7 + $0x1b40] sm:$0xff]
    %v1528 = vld [vmem:[#allocation7 + $0x1b48] sm:$0xff]
    %v1529 = vld [vmem:[#allocation7 + $0x1b50] sm:$0xff]
    %v1530 = vld [vmem:[#allocation7 + $0x1b58] sm:$0xff]
    %v1531 = vld [vmem:[#allocation7 + $0x1b60] sm:$0xff]
    %v1532 = vld [vmem:[#allocation7 + $0x1b68] sm:$0xff]
    %v1533 = vld [vmem:[#allocation7 + $0x1b70] sm:$0xff]
    %v1534 = vld [vmem:[#allocation7 + $0x1b78] sm:$0xff]
    %v1535 = vld [vmem:[#allocation7 + $0x1b80] sm:$0xff]
    %v1536 = vld [vmem:[#allocation7 + $0x1b88] sm:$0xff]
    %v1537 = vld [vmem:[#allocation7 + $0x1b90] sm:$0xff]
    %v1538 = vld [vmem:[#allocation7 + $0x1b98] sm:$0xff]
    %v1539 = vld [vmem:[#allocation7 + $0x1ba0] sm:$0xff]
    %v1540 = vld [vmem:[#allocation7 + $0x1ba8] sm:$0xff]
    %v1541 = vld [vmem:[#allocation7 + $0x1bb0] sm:$0xff]
    %v1542 = vld [vmem:[#allocation7 + $0x1bb8] sm:$0xff]
    %v1543 = vld [vmem:[#allocation7 + $0x1bc0] sm:$0xff]
    %v1544 = vld [vmem:[#allocation7 + $0x1bc8] sm:$0xff]
    %v1545 = vld [vmem:[#allocation7 + $0x1bd0] sm:$0xff]
    %v1546 = vld [vmem:[#allocation7 + $0x1bd8] sm:$0xff]
    %v1547 = vld [vmem:[#allocation7 + $0x1be0] sm:$0xff]
    %v1548 = vld [vmem:[#allocation7 + $0x1be8] sm:$0xff]
    %v1549 = vld [vmem:[#allocation7 + $0x1bf0] sm:$0xff]
    %v1550 = vld [vmem:[#allocation7 + $0x1bf8] sm:$0xff]
    %v1551 = vld [vmem:[#allocation7 + $0x1c00] sm:$0xff]
    %v1552 = vld [vmem:[#allocation7 + $0x1c08] sm:$0xff]
    %v1553 = vld [vmem:[#allocation7 + $0x1c10] sm:$0xff]
    %v1554 = vld [vmem:[#allocation7 + $0x1c18] sm:$0xff]
    %v1555 = vld [vmem:[#allocation7 + $0x1c20] sm:$0xff]
    %v1556 = vld [vmem:[#allocation7 + $0x1c28] sm:$0xff]
    %v1557 = vld [vmem:[#allocation7 + $0x1c30] sm:$0xff]
    %v1558 = vld [vmem:[#allocation7 + $0x1c38] sm:$0xff]
    %v1559 = vld [vmem:[#allocation7 + $0x1c40] sm:$0xff]
    %v1560 = vld [vmem:[#allocation7 + $0x1c48] sm:$0xff]
    %v1561 = vld [vmem:[#allocation7 + $0x1c50] sm:$0xff]
    %v1562 = vld [vmem:[#allocation7 + $0x1c58] sm:$0xff]
    %v1563 = vld [vmem:[#allocation7 + $0x1c60] sm:$0xff]
    %v1564 = vld [vmem:[#allocation7 + $0x1c68] sm:$0xff]
    %v1565 = vld [vmem:[#allocation7 + $0x1c70] sm:$0xff]
    %v1566 = vld [vmem:[#allocation7 + $0x1c78] sm:$0xff]
    %v1567 = vld [vmem:[#allocation7 + $0x1c80] sm:$0xff]
    %v1568 = vld [vmem:[#allocation7 + $0x1c88] sm:$0xff]
    %v1569 = vld [vmem:[#allocation7 + $0x1c90] sm:$0xff]
    %v1570 = vld [vmem:[#allocation7 + $0x1c98] sm:$0xff]
    %v1571 = vld [vmem:[#allocation7 + $0x1ca0] sm:$0xff]
    %v1572 = vld [vmem:[#allocation7 + $0x1ca8] sm:$0xff]
    %v1573 = vld [vmem:[#allocation7 + $0x1cb0] sm:$0xff]
    %v1574 = vld [vmem:[#allocation7 + $0x1cb8] sm:$0xff]
    %v1575 = vld [vmem:[#allocation7 + $0x1cc0] sm:$0xff]
    %v1576 = vld [vmem:[#allocation7 + $0x1cc8] sm:$0xff]
    %v1577 = vld [vmem:[#allocation7 + $0x1cd0] sm:$0xff]
    %v1578 = vld [vmem:[#allocation7 + $0x1cd8] sm:$0xff]
    %v1579 = vld [vmem:[#allocation7 + $0x1ce0] sm:$0xff]
    %v1580 = vld [vmem:[#allocation7 + $0x1ce8] sm:$0xff]
    %v1581 = vld [vmem:[#allocation7 + $0x1cf0] sm:$0xff]
    %v1582 = vld [vmem:[#allocation7 + $0x1cf8] sm:$0xff]
    %v1583 = vld [vmem:[#allocation7 + $0x1d00] sm:$0xff]
    %v1584 = vld [vmem:[#allocation7 + $0x1d08] sm:$0xff]
    %v1585 = vld [vmem:[#allocation7 + $0x1d10] sm:$0xff]
    %v1586 = vld [vmem:[#allocation7 + $0x1d18] sm:$0xff]
    %v1587 = vld [vmem:[#allocation7 + $0x1d20] sm:$0xff]
    %v1588 = vld [vmem:[#allocation7 + $0x1d28] sm:$0xff]
    %v1589 = vld [vmem:[#allocation7 + $0x1d30] sm:$0xff]
    %v1590 = vld [vmem:[#allocation7 + $0x1d38] sm:$0xff]
    %v1591 = vld [vmem:[#allocation7 + $0x1d40] sm:$0xff]
    %v1592 = vld [vmem:[#allocation7 + $0x1d48] sm:$0xff]
    %v1593 = vld [vmem:[#allocation7 + $0x1d50] sm:$0xff]
    %v1594 = vld [vmem:[#allocation7 + $0x1d58] sm:$0xff]
    %v1595 = vld [vmem:[#allocation7 + $0x1d60] sm:$0xff]
    %v1596 = vld [vmem:[#allocation7 + $0x1d68] sm:$0xff]
    %v1597 = vld [vmem:[#allocation7 + $0x1d70] sm:$0xff]
    %v1598 = vld [vmem:[#allocation7 + $0x1d78] sm:$0xff]
    %v1599 = vld [vmem:[#allocation7 + $0x1d80] sm:$0xff]
    %v1600 = vld [vmem:[#allocation7 + $0x1d88] sm:$0xff]
    %v1601 = vld [vmem:[#allocation7 + $0x1d90] sm:$0xff]
    %v1602 = vld [vmem:[#allocation7 + $0x1d98] sm:$0xff]
    %v1603 = vld [vmem:[#allocation7 + $0x1da0] sm:$0xff]
    %v1604 = vld [vmem:[#allocation7 + $0x1da8] sm:$0xff]
    %v1605 = vld [vmem:[#allocation7 + $0x1db0] sm:$0xff]
    %v1606 = vld [vmem:[#allocation7 + $0x1db8] sm:$0xff]
    %v1607 = vld [vmem:[#allocation7 + $0x1dc0] sm:$0xff]
    %v1608 = vld [vmem:[#allocation7 + $0x1dc8] sm:$0xff]
    %v1609 = vld [vmem:[#allocation7 + $0x1dd0] sm:$0xff]
    %v1610 = vld [vmem:[#allocation7 + $0x1dd8] sm:$0xff]
    %v1611 = vld [vmem:[#allocation7 + $0x1de0] sm:$0xff]
    %v1612 = vld [vmem:[#allocation7 + $0x1de8] sm:$0xff]
    %v1613 = vld [vmem:[#allocation7 + $0x1df0] sm:$0xff]
    %v1614 = vld [vmem:[#allocation7 + $0x1df8] sm:$0xff]
    %v1615 = vld [vmem:[#allocation7 + $0x1e00] sm:$0xff]
    %v1616 = vld [vmem:[#allocation7 + $0x1e08] sm:$0xff]
    %v1617 = vld [vmem:[#allocation7 + $0x1e10] sm:$0xff]
    %v1618 = vld [vmem:[#allocation7 + $0x1e18] sm:$0xff]
    %v1619 = vld [vmem:[#allocation7 + $0x1e20] sm:$0xff]
    %v1620 = vld [vmem:[#allocation7 + $0x1e28] sm:$0xff]
    %v1621 = vld [vmem:[#allocation7 + $0x1e30] sm:$0xff]
    %v1622 = vld [vmem:[#allocation7 + $0x1e38] sm:$0xff]
    %v1623 = vld [vmem:[#allocation7 + $0x1e40] sm:$0xff]
    %v1624 = vld [vmem:[#allocation7 + $0x1e48] sm:$0xff]
    %v1625 = vld [vmem:[#allocation7 + $0x1e50] sm:$0xff]
    %v1626 = vld [vmem:[#allocation7 + $0x1e58] sm:$0xff]
    %v1627 = vld [vmem:[#allocation7 + $0x1e60] sm:$0xff]
    %v1628 = vld [vmem:[#allocation7 + $0x1e68] sm:$0xff]
    %v1629 = vld [vmem:[#allocation7 + $0x1e70] sm:$0xff]
    %v1630 = vld [vmem:[#allocation7 + $0x1e78] sm:$0xff]
    %v1631 = vld [vmem:[#allocation7 + $0x1e80] sm:$0xff]
    %v1632 = vld [vmem:[#allocation7 + $0x1e88] sm:$0xff]
    %v1633 = vld [vmem:[#allocation7 + $0x1e90] sm:$0xff]
    %v1634 = vld [vmem:[#allocation7 + $0x1e98] sm:$0xff]
    %v1635 = vld [vmem:[#allocation7 + $0x1ea0] sm:$0xff]
    %v1636 = vld [vmem:[#allocation7 + $0x1ea8] sm:$0xff]
    %v1637 = vld [vmem:[#allocation7 + $0x1eb0] sm:$0xff]
    %v1638 = vld [vmem:[#allocation7 + $0x1eb8] sm:$0xff]
    %v1639 = vld [vmem:[#allocation7 + $0x1ec0] sm:$0xff]
    %v1640 = vld [vmem:[#allocation7 + $0x1ec8] sm:$0xff]
    %v1641 = vld [vmem:[#allocation7 + $0x1ed0] sm:$0xff]
    %v1642 = vld [vmem:[#allocation7 + $0x1ed8] sm:$0xff]
    %v1643 = vld [vmem:[#allocation7 + $0x1ee0] sm:$0xff]
    %v1644 = vld [vmem:[#allocation7 + $0x1ee8] sm:$0xff]
    %v1645 = vld [vmem:[#allocation7 + $0x1ef0] sm:$0xff]
    %v1646 = vld [vmem:[#allocation7 + $0x1ef8] sm:$0xff]
    %v1647 = vld [vmem:[#allocation7 + $0x1f00] sm:$0xff]
    %v1648 = vld [vmem:[#allocation7 + $0x1f08] sm:$0xff]
    %v1649 = vld [vmem:[#allocation7 + $0x1f10] sm:$0xff]
    %v1650 = vld [vmem:[#allocation7 + $0x1f18] sm:$0xff]
    %v1651 = vld [vmem:[#allocation7 + $0x1f20] sm:$0xff]
    %v1652 = vld [vmem:[#allocation7 + $0x1f28] sm:$0xff]
    %v1653 = vld [vmem:[#allocation7 + $0x1f30] sm:$0xff]
    %v1654 = vld [vmem:[#allocation7 + $0x1f38] sm:$0xff]
    %v1655 = vld [vmem:[#allocation7 + $0x1f40] sm:$0xff]
    %v1656 = vld [vmem:[#allocation7 + $0x1f48] sm:$0xff]
    %v1657 = vld [vmem:[#allocation7 + $0x1f50] sm:$0xff]
    %v1658 = vld [vmem:[#allocation7 + $0x1f58] sm:$0xff]
    %v1659 = vld [vmem:[#allocation7 + $0x1f60] sm:$0xff]
    %v1660 = vld [vmem:[#allocation7 + $0x1f68] sm:$0xff]
    %v1661 = vld [vmem:[#allocation7 + $0x1f70] sm:$0xff]
    %v1662 = vld [vmem:[#allocation7 + $0x1f78] sm:$0xff]
    %v1663 = vld [vmem:[#allocation7 + $0x1f80] sm:$0xff]
    %v1664 = vld [vmem:[#allocation7 + $0x1f88] sm:$0xff]
    %v1665 = vld [vmem:[#allocation7 + $0x1f90] sm:$0xff]
    %v1666 = vld [vmem:[#allocation7 + $0x1f98] sm:$0xff]
    %v1667 = vld [vmem:[#allocation7 + $0x1fa0] sm:$0xff]
    %v1668 = vld [vmem:[#allocation7 + $0x1fa8] sm:$0xff]
    %v1669 = vld [vmem:[#allocation7 + $0x1fb0] sm:$0xff]
    %v1670 = vld [vmem:[#allocation7 + $0x1fb8] sm:$0xff]
    %v1671 = vld [vmem:[#allocation7 + $0x1fc0] sm:$0xff]
    %v1672 = vld [vmem:[#allocation7 + $0x1fc8] sm:$0xff]
    %v1673 = vld [vmem:[#allocation7 + $0x1fd0] sm:$0xff]
    %v1674 = vld [vmem:[#allocation7 + $0x1fd8] sm:$0xff]
    %v1675 = vld [vmem:[#allocation7 + $0x1fe0] sm:$0xff]
    %v1676 = vld [vmem:[#allocation7 + $0x1fe8] sm:$0xff]
    %v1677 = vld [vmem:[#allocation7 + $0x1ff0] sm:$0xff]
    %v1678 = vld [vmem:[#allocation7 + $0x1ff8] sm:$0xff]
    %v1679 = vld [vmem:[#allocation7 + $0x2000] sm:$0xff]
    %v1680 = vld [vmem:[#allocation7 + $0x2008] sm:$0xff]
    %v1681 = vld [vmem:[#allocation7 + $0x2010] sm:$0xff]
    %v1682 = vld [vmem:[#allocation7 + $0x2018] sm:$0xff]
    %v1683 = vld [vmem:[#allocation7 + $0x2020] sm:$0xff]
    %v1684 = vld [vmem:[#allocation7 + $0x2028] sm:$0xff]
    %v1685 = vld [vmem:[#allocation7 + $0x2030] sm:$0xff]
    %v1686 = vld [vmem:[#allocation7 + $0x2038] sm:$0xff]
    %v1687 = vld [vmem:[#allocation7 + $0x2040] sm:$0xff]
    %v1688 = vld [vmem:[#allocation7 + $0x2048] sm:$0xff]
    %v1689 = vld [vmem:[#allocation7 + $0x2050] sm:$0xff]
    %v1690 = vld [vmem:[#allocation7 + $0x2058] sm:$0xff]
    %v1691 = vld [vmem:[#allocation7 + $0x2060] sm:$0xff]
    %v1692 = vld [vmem:[#allocation7 + $0x2068] sm:$0xff]
    %v1693 = vld [vmem:[#allocation7 + $0x2070] sm:$0xff]
    %v1694 = vld [vmem:[#allocation7 + $0x2078] sm:$0xff]
    %v1695 = vld [vmem:[#allocation7 + $0x2080] sm:$0xff]
    %v1696 = vld [vmem:[#allocation7 + $0x2088] sm:$0xff]
    %v1697 = vld [vmem:[#allocation7 + $0x2090] sm:$0xff]
    %v1698 = vld [vmem:[#allocation7 + $0x2098] sm:$0xff]
    %v1699 = vld [vmem:[#allocation7 + $0x20a0] sm:$0xff]
    %v1700 = vld [vmem:[#allocation7 + $0x20a8] sm:$0xff]
    %v1701 = vld [vmem:[#allocation7 + $0x20b0] sm:$0xff]
    %v1702 = vld [vmem:[#allocation7 + $0x20b8] sm:$0xff]
    %v1703 = vld [vmem:[#allocation7 + $0x20c0] sm:$0xff]
    %v1704 = vld [vmem:[#allocation7 + $0x20c8] sm:$0xff]
    %v1705 = vld [vmem:[#allocation7 + $0x20d0] sm:$0xff]
    %v1706 = vld [vmem:[#allocation7 + $0x20d8] sm:$0xff]
    %v1707 = vld [vmem:[#allocation7 + $0x20e0] sm:$0xff]
    %v1708 = vld [vmem:[#allocation7 + $0x20e8] sm:$0xff]
    %v1709 = vld [vmem:[#allocation7 + $0x20f0] sm:$0xff]
    %v1710 = vld [vmem:[#allocation7 + $0x20f8] sm:$0xff]
    %v1711 = vld [vmem:[#allocation7 + $0x2100] sm:$0xff]
    %v1712 = vld [vmem:[#allocation7 + $0x2108] sm:$0xff]
    %v1713 = vld [vmem:[#allocation7 + $0x2110] sm:$0xff]
    %v1714 = vld [vmem:[#allocation7 + $0x2118] sm:$0xff]
    %v1715 = vld [vmem:[#allocation7 + $0x2120] sm:$0xff]
    %v1716 = vld [vmem:[#allocation7 + $0x2128] sm:$0xff]
    %v1717 = vld [vmem:[#allocation7 + $0x2130] sm:$0xff]
    %v1718 = vld [vmem:[#allocation7 + $0x2138] sm:$0xff]
    %v1719 = vld [vmem:[#allocation7 + $0x2140] sm:$0xff]
    %v1720 = vld [vmem:[#allocation7 + $0x2148] sm:$0xff]
    %v1721 = vld [vmem:[#allocation7 + $0x2150] sm:$0xff]
    %v1722 = vld [vmem:[#allocation7 + $0x2158] sm:$0xff]
    %v1723 = vld [vmem:[#allocation7 + $0x2160] sm:$0xff]
    %v1724 = vld [vmem:[#allocation7 + $0x2168] sm:$0xff]
    %v1725 = vld [vmem:[#allocation7 + $0x2170] sm:$0xff]
    %v1726 = vld [vmem:[#allocation7 + $0x2178] sm:$0xff]
    %v1727 = vld [vmem:[#allocation7 + $0x2180] sm:$0xff]
    %v1728 = vld [vmem:[#allocation7 + $0x2188] sm:$0xff]
    %v1729 = vld [vmem:[#allocation7 + $0x2190] sm:$0xff]
    %v1730 = vld [vmem:[#allocation7 + $0x2198] sm:$0xff]
    %v1731 = vld [vmem:[#allocation7 + $0x21a0] sm:$0xff]
    %v1732 = vld [vmem:[#allocation7 + $0x21a8] sm:$0xff]
    %v1733 = vld [vmem:[#allocation7 + $0x21b0] sm:$0xff]
    %v1734 = vld [vmem:[#allocation7 + $0x21b8] sm:$0xff]
    %v1735 = vld [vmem:[#allocation7 + $0x21c0] sm:$0xff]
    %v1736 = vld [vmem:[#allocation7 + $0x21c8] sm:$0xff]
    %v1737 = vld [vmem:[#allocation7 + $0x21d0] sm:$0xff]
    %v1738 = vld [vmem:[#allocation7 + $0x21d8] sm:$0xff]
    %v1739 = vld [vmem:[#allocation7 + $0x21e0] sm:$0xff]
    %v1740 = vld [vmem:[#allocation7 + $0x21e8] sm:$0xff]
    %v1741 = vld [vmem:[#allocation7 + $0x21f0] sm:$0xff]
    %v1742 = vld [vmem:[#allocation7 + $0x21f8] sm:$0xff]
    %v1743 = vld [vmem:[#allocation7 + $0x2200] sm:$0xff]
    %v1744 = vld [vmem:[#allocation7 + $0x2208] sm:$0xff]
    %v1745 = vld [vmem:[#allocation7 + $0x2210] sm:$0xff]
    %v1746 = vld [vmem:[#allocation7 + $0x2218] sm:$0xff]
    %v1747 = vld [vmem:[#allocation7 + $0x2220] sm:$0xff]
    %v1748 = vld [vmem:[#allocation7 + $0x2228] sm:$0xff]
    %v1749 = vld [vmem:[#allocation7 + $0x2230] sm:$0xff]
    %v1750 = vld [vmem:[#allocation7 + $0x2238] sm:$0xff]
    %v1751 = vld [vmem:[#allocation7 + $0x2240] sm:$0xff]
    %v1752 = vld [vmem:[#allocation7 + $0x2248] sm:$0xff]
    %v1753 = vld [vmem:[#allocation7 + $0x2250] sm:$0xff]
    %v1754 = vld [vmem:[#allocation7 + $0x2258] sm:$0xff]
    %v1755 = vld [vmem:[#allocation7 + $0x2260] sm:$0xff]
    %v1756 = vld [vmem:[#allocation7 + $0x2268] sm:$0xff]
    %v1757 = vld [vmem:[#allocation7 + $0x2270] sm:$0xff]
    %v1758 = vld [vmem:[#allocation7 + $0x2278] sm:$0xff]
    %v1759 = vld [vmem:[#allocation7 + $0x2280] sm:$0xff]
    %v1760 = vld [vmem:[#allocation7 + $0x2288] sm:$0xff]
    %v1761 = vld [vmem:[#allocation7 + $0x2290] sm:$0xff]
    %v1762 = vld [vmem:[#allocation7 + $0x2298] sm:$0xff]
    %v1763 = vld [vmem:[#allocation7 + $0x22a0] sm:$0xff]
    %v1764 = vld [vmem:[#allocation7 + $0x22a8] sm:$0xff]
    %v1765 = vld [vmem:[#allocation7 + $0x22b0] sm:$0xff]
    %v1766 = vld [vmem:[#allocation7 + $0x22b8] sm:$0xff]
    %v1767 = vld [vmem:[#allocation7 + $0x22c0] sm:$0xff]
    %v1768 = vld [vmem:[#allocation7 + $0x22c8] sm:$0xff]
    %v1769 = vld [vmem:[#allocation7 + $0x22d0] sm:$0xff]
    %v1770 = vld [vmem:[#allocation7 + $0x22d8] sm:$0xff]
    %v1771 = vld [vmem:[#allocation7 + $0x22e0] sm:$0xff]
    %v1772 = vld [vmem:[#allocation7 + $0x22e8] sm:$0xff]
    %v1773 = vld [vmem:[#allocation7 + $0x22f0] sm:$0xff]
    %v1774 = vld [vmem:[#allocation7 + $0x22f8] sm:$0xff]
    %v1775 = vld [vmem:[#allocation7 + $0x2300] sm:$0xff]
    %v1776 = vld [vmem:[#allocation7 + $0x2308] sm:$0xff]
    %v1777 = vld [vmem:[#allocation7 + $0x2310] sm:$0xff]
    %v1778 = vld [vmem:[#allocation7 + $0x2318] sm:$0xff]
    %v1779 = vld [vmem:[#allocation7 + $0x2320] sm:$0xff]
    %v1780 = vld [vmem:[#allocation7 + $0x2328] sm:$0xff]
    %v1781 = vld [vmem:[#allocation7 + $0x2330] sm:$0xff]
    %v1782 = vld [vmem:[#allocation7 + $0x2338] sm:$0xff]
    %v1783 = vld [vmem:[#allocation7 + $0x2340] sm:$0xff]
    %v1784 = vld [vmem:[#allocation7 + $0x2348] sm:$0xff]
    %v1785 = vld [vmem:[#allocation7 + $0x2350] sm:$0xff]
    %v1786 = vld [vmem:[#allocation7 + $0x2358] sm:$0xff]
    %v1787 = vld [vmem:[#allocation7 + $0x2360] sm:$0xff]
    %v1788 = vld [vmem:[#allocation7 + $0x2368] sm:$0xff]
    %v1789 = vld [vmem:[#allocation7 + $0x2370] sm:$0xff]
    %v1790 = vld [vmem:[#allocation7 + $0x2378] sm:$0xff]
    %v1791 = vld [vmem:[#allocation7 + $0x2380] sm:$0xff]
    %v1792 = vld [vmem:[#allocation7 + $0x2388] sm:$0xff]
    %v1793 = vld [vmem:[#allocation7 + $0x2390] sm:$0xff]
    %v1794 = vld [vmem:[#allocation7 + $0x2398] sm:$0xff]
    %v1795 = vld [vmem:[#allocation7 + $0x23a0] sm:$0xff]
    %v1796 = vld [vmem:[#allocation7 + $0x23a8] sm:$0xff]
    %v1797 = vld [vmem:[#allocation7 + $0x23b0] sm:$0xff]
    %v1798 = vld [vmem:[#allocation7 + $0x23b8] sm:$0xff]
    %v1799 = vld [vmem:[#allocation7 + $0x23c0] sm:$0xff]
    %v1800 = vld [vmem:[#allocation7 + $0x23c8] sm:$0xff]
    %v1801 = vld [vmem:[#allocation7 + $0x23d0] sm:$0xff]
    %v1802 = vld [vmem:[#allocation7 + $0x23d8] sm:$0xff]
    %v1803 = vld [vmem:[#allocation7 + $0x23e0] sm:$0xff]
    %v1804 = vld [vmem:[#allocation7 + $0x23e8] sm:$0xff]
    %v1805 = vld [vmem:[#allocation7 + $0x23f0] sm:$0xff]
    %v1806 = vld [vmem:[#allocation7 + $0x23f8] sm:$0xff]
    %v1807 = vld [vmem:[#allocation8] sm:$0xff]
    %v1808 = vld [vmem:[#allocation8 + $0x8] sm:$0x1]
    %v1811 = vlaneseq
    %v1812 = vshrl.u32 %v1811, 7
    %v1813 = vsub.s32 0, %v1812
    %v1814 = vrot.slane %v1807, %v1813
    %v1815 = vlaneseq
    %v1816 = vshrl.u32 %v1815, 7
    %v1817 = vsub.s32 1, %v1816
    %v1818 = vrot.slane %v1807, %v1817
    %v1819 = vlaneseq
    %v1820 = vshrl.u32 %v1819, 7
    %v1821 = vsub.s32 2, %v1820
    %v1822 = vrot.slane %v1807, %v1821
    %v1823 = vlaneseq
    %v1824 = vshrl.u32 %v1823, 7
    %v1825 = vsub.s32 3, %v1824
    %v1826 = vrot.slane %v1807, %v1825
    %v1827 = vlaneseq
    %v1828 = vshrl.u32 %v1827, 7
    %v1829 = vsub.s32 4, %v1828
    %v1830 = vrot.slane %v1807, %v1829
    %v1831 = vlaneseq
    %v1832 = vshrl.u32 %v1831, 7
    %v1833 = vsub.s32 5, %v1832
    %v1834 = vrot.slane %v1807, %v1833
    %v1835 = vlaneseq
    %v1836 = vshrl.u32 %v1835, 7
    %v1837 = vsub.s32 6, %v1836
    %v1838 = vrot.slane %v1807, %v1837
    %v1839 = vlaneseq
    %v1840 = vshrl.u32 %v1839, 7
    %v1841 = vsub.s32 7, %v1840
    %v1842 = vrot.slane %v1807, %v1841
    %v1843 = vlaneseq
    %v1844 = vshrl.u32 %v1843, 7
    %v1845 = vsub.s32 0, %v1844
    %v1846 = vrot.slane %v1808, %v1845
    %1856 = vmatprep.subr.mxu0 %v656
    %1857 = vmatpush1.msra.mxu0 %v655
    %1858 = vmatprep.subr.mxu0 %v665
    %1859 = vmatpush1.msra.mxu0 %v664
    %1860 = vmatprep.subr.mxu0 %v674
    %1861 = vmatpush1.msra.mxu0 %v673
    %1862 = vmatprep.subr.mxu0 %v683
    %1863 = vmatpush1.msra.mxu0 %v682
    %1864 = vmatprep.subr.mxu0 %v692
    %1865 = vmatpush1.msra.mxu0 %v691
    %1866 = vmatprep.subr.mxu0 %v701
    %1867 = vmatpush1.msra.mxu0 %v700
    %1868 = vmatprep.subr.mxu0 %v710
    %1869 = vmatpush1.msra.mxu0 %v709
    %1870 = vmatprep.subr.mxu0 %v719
    %1871 = vmatpush1.msra.mxu0 %v718
    %1872 = vmatprep.subr.mxu0 %v728
    %1873 = vmatpush1.msra.mxu0 %v727
    %1874 = vmatprep.subr.mxu0 %v737
    %1875 = vmatpush1.msra.mxu0 %v736
    %1876 = vmatprep.subr.mxu0 %v746
    %1877 = vmatpush1.msra.mxu0 %v745
    %1878 = vmatprep.subr.mxu0 %v755
    %1879 = vmatpush1.msra.mxu0 %v754
    %1880 = vmatprep.subr.mxu0 %v764
    %1881 = vmatpush1.msra.mxu0 %v763
    %1882 = vmatprep.subr.mxu0 %v773
    %1883 = vmatpush1.msra.mxu0 %v772
    %1884 = vmatprep.subr.mxu0 %v782
    %1885 = vmatpush1.msra.mxu0 %v781
    %1886 = vmatprep.subr.mxu0 %v791
    %1887 = vmatpush1.msra.mxu0 %v790
    %1888 = vmatprep.subr.mxu0 %v800
    %1889 = vmatpush1.msra.mxu0 %v799
    %1890 = vmatprep.subr.mxu0 %v809
    %1891 = vmatpush1.msra.mxu0 %v808
    %1892 = vmatprep.subr.mxu0 %v818
    %1893 = vmatpush1.msra.mxu0 %v817
    %1894 = vmatprep.subr.mxu0 %v827
    %1895 = vmatpush1.msra.mxu0 %v826
    %1896 = vmatprep.subr.mxu0 %v836
    %1897 = vmatpush1.msra.mxu0 %v835
    %1898 = vmatprep.subr.mxu0 %v845
    %1899 = vmatpush1.msra.mxu0 %v844
    %1900 = vmatprep.subr.mxu0 %v854
    %1901 = vmatpush1.msra.mxu0 %v853
    %1902 = vmatprep.subr.mxu0 %v863
    %1903 = vmatpush1.msra.mxu0 %v862
    %1904 = vmatprep.subr.mxu0 %v872
    %1905 = vmatpush1.msra.mxu0 %v871
    %1906 = vmatprep.subr.mxu0 %v881
    %1907 = vmatpush1.msra.mxu0 %v880
    %1908 = vmatprep.subr.mxu0 %v890
    %1909 = vmatpush1.msra.mxu0 %v889
    %1910 = vmatprep.subr.mxu0 %v899
    %1911 = vmatpush1.msra.mxu0 %v898
    %1912 = vmatprep.subr.mxu0 %v908
    %1913 = vmatpush1.msra.mxu0 %v907
    %1914 = vmatprep.subr.mxu0 %v917
    %1915 = vmatpush1.msra.mxu0 %v916
    %1916 = vmatprep.subr.mxu0 %v926
    %1917 = vmatpush1.msra.mxu0 %v925
    %1918 = vmatprep.subr.mxu0 %v935
    %1919 = vmatpush1.msra.mxu0 %v934
    %1920 = vmatprep.mubr.f32.mxu0 %v648
    %1921 = vmatmul.mubr.f32.gmra.mrb[0].mxu0 %v647
    %v1922 = vpop.f32.mrb[0].mxu0
    %v1923 = vadd.f32 %v1814, %v1922
    %v1924 = vpop.f32.mrb[0].mxu0
    %v1925 = vadd.f32 %v1818, %v1924
    %1926 = vdwg.mxu0
    %1927 = vmatprep.subr.mxu0 %v944
    %1928 = vmatpush1.msra.mxu0 %v943
    %1929 = vmatprep.subr.mxu0 %v953
    %1930 = vmatpush1.msra.mxu0 %v952
    %1931 = vmatprep.subr.mxu0 %v962
    %1932 = vmatpush1.msra.mxu0 %v961
    %1933 = vmatprep.subr.mxu0 %v971
    %1934 = vmatpush1.msra.mxu0 %v970
    %1935 = vmatprep.subr.mxu0 %v980
    %1936 = vmatpush1.msra.mxu0 %v979
    %1937 = vmatprep.subr.mxu0 %v989
    %1938 = vmatpush1.msra.mxu0 %v988
    %1939 = vmatprep.subr.mxu0 %v998
    %1940 = vmatpush1.msra.mxu0 %v997
    %1941 = vmatprep.subr.mxu0 %v1007
    %1942 = vmatpush1.msra.mxu0 %v1006
    %1943 = vmatprep.subr.mxu0 %v1016
    %1944 = vmatpush1.msra.mxu0 %v1015
    %1945 = vmatprep.subr.mxu0 %v1025
    %1946 = vmatpush1.msra.mxu0 %v1024
    %1947 = vmatprep.subr.mxu0 %v1034
    %1948 = vmatpush1.msra.mxu0 %v1033
    %1949 = vmatprep.subr.mxu0 %v1043
    %1950 = vmatpush1.msra.mxu0 %v1042
    %1951 = vmatprep.subr.mxu0 %v1052
    %1952 = vmatpush1.msra.mxu0 %v1051
    %1953 = vmatprep.subr.mxu0 %v1061
    %1954 = vmatpush1.msra.mxu0 %v1060
    %1955 = vmatprep.subr.mxu0 %v1070
    %1956 = vmatpush1.msra.mxu0 %v1069
    %1957 = vmatprep.subr.mxu0 %v1079
    %1958 = vmatpush1.msra.mxu0 %v1078
    %1959 = vmatprep.subr.mxu0 %v1088
    %1960 = vmatpush1.msra.mxu0 %v1087
    %1961 = vmatprep.subr.mxu0 %v1097
    %1962 = vmatpush1.msra.mxu0 %v1096
    %1963 = vmatprep.subr.mxu0 %v1106
    %1964 = vmatpush1.msra.mxu0 %v1105
    %1965 = vmatprep.subr.mxu0 %v1115
    %1966 = vmatpush1.msra.mxu0 %v1114
    %1967 = vmatprep.subr.mxu0 %v1124
    %1968 = vmatpush1.msra.mxu0 %v1123
    %1969 = vmatprep.subr.mxu0 %v1133
    %1970 = vmatpush1.msra.mxu0 %v1132
    %1971 = vmatprep.subr.mxu0 %v1142
    %1972 = vmatpush1.msra.mxu0 %v1141
    %1973 = vmatprep.subr.mxu0 %v1151
    %1974 = vmatpush1.msra.mxu0 %v1150
    %1975 = vmatprep.subr.mxu0 %v1160
    %1976 = vmatpush1.msra.mxu0 %v1159
    %1977 = vmatprep.subr.mxu0 %v1169
    %1978 = vmatpush1.msra.mxu0 %v1168
    %1979 = vmatprep.subr.mxu0 %v1178
    %1980 = vmatpush1.msra.mxu0 %v1177
    %1981 = vmatprep.subr.mxu0 %v1187
    %1982 = vmatpush1.msra.mxu0 %v1186
    %1983 = vmatprep.subr.mxu0 %v1196
    %1984 = vmatpush1.msra.mxu0 %v1195
    %1985 = vmatprep.subr.mxu0 %v1205
    %1986 = vmatpush1.msra.mxu0 %v1204
    %1987 = vmatprep.subr.mxu0 %v1214
    %1988 = vmatpush1.msra.mxu0 %v1213
    %1989 = vmatprep.subr.mxu0 %v1223
    %1990 = vmatpush1.msra.mxu0 %v1222
    %1991 = vmatprep.mubr.f32.mxu0 %v650
    %1992 = vmatmul.mubr.f32.gmra.mrb[0].mxu0 %v649
    %v1993 = vpop.f32.mrb[0].mxu0
    %v1994 = vadd.f32 %v1923, %v1993
    %v1995 = vpop.f32.mrb[0].mxu0
    %v1996 = vadd.f32 %v1925, %v1995
    %1997 = vdwg.mxu0
    %1998 = vmatprep.subr.mxu0 %v1232
    %1999 = vmatpush1.msra.mxu0 %v1231
    %2000 = vmatprep.subr.mxu0 %v1241
    %2001 = vmatpush1.msra.mxu0 %v1240
    %2002 = vmatprep.subr.mxu0 %v1250
    %2003 = vmatpush1.msra.mxu0 %v1249
    %2004 = vmatprep.subr.mxu0 %v1259
    %2005 = vmatpush1.msra.mxu0 %v1258
    %2006 = vmatprep.subr.mxu0 %v1268
    %2007 = vmatpush1.msra.mxu0 %v1267
    %2008 = vmatprep.subr.mxu0 %v1277
    %2009 = vmatpush1.msra.mxu0 %v1276
    %2010 = vmatprep.subr.mxu0 %v1286
    %2011 = vmatpush1.msra.mxu0 %v1285
    %2012 = vmatprep.subr.mxu0 %v1295
    %2013 = vmatpush1.msra.mxu0 %v1294
    %2014 = vmatprep.subr.mxu0 %v1304
    %2015 = vmatpush1.msra.mxu0 %v1303
    %2016 = vmatprep.subr.mxu0 %v1313
    %2017 = vmatpush1.msra.mxu0 %v1312
    %2018 = vmatprep.subr.mxu0 %v1322
    %2019 = vmatpush1.msra.mxu0 %v1321
    %2020 = vmatprep.subr.mxu0 %v1331
    %2021 = vmatpush1.msra.mxu0 %v1330
    %2022 = vmatprep.subr.mxu0 %v1340
    %2023 = vmatpush1.msra.mxu0 %v1339
    %2024 = vmatprep.subr.mxu0 %v1349
    %2025 = vmatpush1.msra.mxu0 %v1348
    %2026 = vmatprep.subr.mxu0 %v1358
    %2027 = vmatpush1.msra.mxu0 %v1357
    %2028 = vmatprep.subr.mxu0 %v1367
    %2029 = vmatpush1.msra.mxu0 %v1366
    %2030 = vmatprep.subr.mxu0 %v1376
    %2031 = vmatpush1.msra.mxu0 %v1375
    %2032 = vmatprep.subr.mxu0 %v1385
    %2033 = vmatpush1.msra.mxu0 %v1384
    %2034 = vmatprep.subr.mxu0 %v1394
    %2035 = vmatpush1.msra.mxu0 %v1393
    %2036 = vmatprep.subr.mxu0 %v1403
    %2037 = vmatpush1.msra.mxu0 %v1402
    %2038 = vmatprep.subr.mxu0 %v1412
    %2039 = vmatpush1.msra.mxu0 %v1411
    %2040 = vmatprep.subr.mxu0 %v1421
    %2041 = vmatpush1.msra.mxu0 %v1420
    %2042 = vmatprep.subr.mxu0 %v1430
    %2043 = vmatpush1.msra.mxu0 %v1429
    %2044 = vmatprep.subr.mxu0 %v1439
    %2045 = vmatpush1.msra.mxu0 %v1438
    %2046 = vmatprep.subr.mxu0 %v1448
    %2047 = vmatpush1.msra.mxu0 %v1447
    %2048 = vmatprep.subr.mxu0 %v1457
    %2049 = vmatpush1.msra.mxu0 %v1456
    %2050 = vmatprep.subr.mxu0 %v1466
    %2051 = vmatpush1.msra.mxu0 %v1465
    %2052 = vmatprep.subr.mxu0 %v1475
    %2053 = vmatpush1.msra.mxu0 %v1474
    %2054 = vmatprep.subr.mxu0 %v1484
    %2055 = vmatpush1.msra.mxu0 %v1483
    %2056 = vmatprep.subr.mxu0 %v1493
    %2057 = vmatpush1.msra.mxu0 %v1492
    %2058 = vmatprep.subr.mxu0 %v1502
    %2059 = vmatpush1.msra.mxu0 %v1501
    %2060 = vmatprep.subr.mxu0 %v1511
    %2061 = vmatpush1.msra.mxu0 %v1510
    %2062 = vmatprep.mubr.f32.mxu0 %v652
    %2063 = vmatmul.mubr.f32.gmra.mrb[0].mxu0 %v651
    %v2064 = vpop.f32.mrb[0].mxu0
    %v2065 = vadd.f32 %v1994, %v2064
    %v2066 = vpop.f32.mrb[0].mxu0
    %v2067 = vadd.f32 %v1996, %v2066
    %2068 = vdwg.mxu0
    %2069 = vmatprep.subr.mxu0 %v1520
    %2070 = vmatpush1.msra.mxu0 %v1519
    %2071 = vmatprep.subr.mxu0 %v1529
    %2072 = vmatpush1.msra.mxu0 %v1528
    %2073 = vmatprep.subr.mxu0 %v1538
    %2074 = vmatpush1.msra.mxu0 %v1537
    %2075 = vmatprep.subr.mxu0 %v1547
    %2076 = vmatpush1.msra.mxu0 %v1546
    %2077 = vmatprep.subr.mxu0 %v1556
    %2078 = vmatpush1.msra.mxu0 %v1555
    %2079 = vmatprep.subr.mxu0 %v1565
    %2080 = vmatpush1.msra.mxu0 %v1564
    %2081 = vmatprep.subr.mxu0 %v1574
    %2082 = vmatpush1.msra.mxu0 %v1573
    %2083 = vmatprep.subr.mxu0 %v1583
    %2084 = vmatpush1.msra.mxu0 %v1582
    %2085 = vmatprep.subr.mxu0 %v1592
    %2086 = vmatpush1.msra.mxu0 %v1591
    %2087 = vmatprep.subr.mxu0 %v1601
    %2088 = vmatpush1.msra.mxu0 %v1600
    %2089 = vmatprep.subr.mxu0 %v1610
    %2090 = vmatpush1.msra.mxu0 %v1609
    %2091 = vmatprep.subr.mxu0 %v1619
    %2092 = vmatpush1.msra.mxu0 %v1618
    %2093 = vmatprep.subr.mxu0 %v1628
    %2094 = vmatpush1.msra.mxu0 %v1627
    %2095 = vmatprep.subr.mxu0 %v1637
    %2096 = vmatpush1.msra.mxu0 %v1636
    %2097 = vmatprep.subr.mxu0 %v1646
    %2098 = vmatpush1.msra.mxu0 %v1645
    %2099 = vmatprep.subr.mxu0 %v1655
    %2100 = vmatpush1.msra.mxu0 %v1654
    %2101 = vmatprep.subr.mxu0 %v1664
    %2102 = vmatpush1.msra.mxu0 %v1663
    %2103 = vmatprep.subr.mxu0 %v1673
    %2104 = vmatpush1.msra.mxu0 %v1672
    %2105 = vmatprep.subr.mxu0 %v1682
    %2106 = vmatpush1.msra.mxu0 %v1681
    %2107 = vmatprep.subr.mxu0 %v1691
    %2108 = vmatpush1.msra.mxu0 %v1690
    %2109 = vmatprep.subr.mxu0 %v1700
    %2110 = vmatpush1.msra.mxu0 %v1699
    %2111 = vmatprep.subr.mxu0 %v1709
    %2112 = vmatpush1.msra.mxu0 %v1708
    %2113 = vmatprep.subr.mxu0 %v1718
    %2114 = vmatpush1.msra.mxu0 %v1717
    %2115 = vmatprep.subr.mxu0 %v1727
    %2116 = vmatpush1.msra.mxu0 %v1726
    %2117 = vmatprep.subr.mxu0 %v1736
    %2118 = vmatpush1.msra.mxu0 %v1735
    %2119 = vmatprep.subr.mxu0 %v1745
    %2120 = vmatpush1.msra.mxu0 %v1744
    %2121 = vmatprep.subr.mxu0 %v1754
    %2122 = vmatpush1.msra.mxu0 %v1753
    %2123 = vmatprep.subr.mxu0 %v1763
    %2124 = vmatpush1.msra.mxu0 %v1762
    %2125 = vmatprep.subr.mxu0 %v1772
    %2126 = vmatpush1.msra.mxu0 %v1771
    %2127 = vmatprep.subr.mxu0 %v1781
    %2128 = vmatpush1.msra.mxu0 %v1780
    %2129 = vmatprep.subr.mxu0 %v1790
    %2130 = vmatpush1.msra.mxu0 %v1789
    %2131 = vmatprep.subr.mxu0 %v1799
    %2132 = vmatpush1.msra.mxu0 %v1798
    %2133 = vmatprep.mubr.f32.mxu0 %v654
    %2134 = vmatmul.mubr.f32.gmra.mrb[0].mxu0 %v653
    %v2135 = vpop.f32.mrb[0].mxu0
    %v2136 = vadd.f32 %v2065, %v2135
    %v2137 = vpop.f32.mrb[0].mxu0
    %v2138 = vadd.f32 %v2067, %v2137
    %2139 = vdwg.mxu0
    %2140 = vmatprep.subr.mxu0 %v658
    %2141 = vmatpush1.msra.mxu0 %v657
    %2142 = vmatprep.subr.mxu0 %v667
    %2143 = vmatpush1.msra.mxu0 %v666
    %2144 = vmatprep.subr.mxu0 %v676
    %2145 = vmatpush1.msra.mxu0 %v675
    %2146 = vmatprep.subr.mxu0 %v685
    %2147 = vmatpush1.msra.mxu0 %v684
    %2148 = vmatprep.subr.mxu0 %v694
    %2149 = vmatpush1.msra.mxu0 %v693
    %2150 = vmatprep.subr.mxu0 %v703
    %2151 = vmatpush1.msra.mxu0 %v702
    %2152 = vmatprep.subr.mxu0 %v712
    %2153 = vmatpush1.msra.mxu0 %v711
    %2154 = vmatprep.subr.mxu0 %v721
    %2155 = vmatpush1.msra.mxu0 %v720
    %2156 = vmatprep.subr.mxu0 %v730
    %2157 = vmatpush1.msra.mxu0 %v729
    %2158 = vmatprep.subr.mxu0 %v739
    %2159 = vmatpush1.msra.mxu0 %v738
    %2160 = vmatprep.subr.mxu0 %v748
    %2161 = vmatpush1.msra.mxu0 %v747
    %2162 = vmatprep.subr.mxu0 %v757
    %2163 = vmatpush1.msra.mxu0 %v756
    %2164 = vmatprep.subr.mxu0 %v766
    %2165 = vmatpush1.msra.mxu0 %v765
    %2166 = vmatprep.subr.mxu0 %v775
    %2167 = vmatpush1.msra.mxu0 %v774
    %2168 = vmatprep.subr.mxu0 %v784
    %2169 = vmatpush1.msra.mxu0 %v783
    %2170 = vmatprep.subr.mxu0 %v793
    %2171 = vmatpush1.msra.mxu0 %v792
    %2172 = vmatprep.subr.mxu0 %v802
    %2173 = vmatpush1.msra.mxu0 %v801
    %2174 = vmatprep.subr.mxu0 %v811
    %2175 = vmatpush1.msra.mxu0 %v810
    %2176 = vmatprep.subr.mxu0 %v820
    %2177 = vmatpush1.msra.mxu0 %v819
    %2178 = vmatprep.subr.mxu0 %v829
    %2179 = vmatpush1.msra.mxu0 %v828
    %2180 = vmatprep.subr.mxu0 %v838
    %2181 = vmatpush1.msra.mxu0 %v837
    %2182 = vmatprep.subr.mxu0 %v847
    %2183 = vmatpush1.msra.mxu0 %v846
    %2184 = vmatprep.subr.mxu0 %v856
    %2185 = vmatpush1.msra.mxu0 %v855
    %2186 = vmatprep.subr.mxu0 %v865
    %2187 = vmatpush1.msra.mxu0 %v864
    %2188 = vmatprep.subr.mxu0 %v874
    %2189 = vmatpush1.msra.mxu0 %v873
    %2190 = vmatprep.subr.mxu0 %v883
    %2191 = vmatpush1.msra.mxu0 %v882
    %2192 = vmatprep.subr.mxu0 %v892
    %2193 = vmatpush1.msra.mxu0 %v891
    %2194 = vmatprep.subr.mxu0 %v901
    %2195 = vmatpush1.msra.mxu0 %v900
    %2196 = vmatprep.subr.mxu0 %v910
    %2197 = vmatpush1.msra.mxu0 %v909
    %2198 = vmatprep.subr.mxu0 %v919
    %2199 = vmatpush1.msra.mxu0 %v918
    %2200 = vmatprep.subr.mxu0 %v928
    %2201 = vmatpush1.msra.mxu0 %v927
    %2202 = vmatprep.subr.mxu0 %v937
    %2203 = vmatpush1.msra.mxu0 %v936
    %2204 = vmatprep.mubr.f32.mxu0 %v648
    %2205 = vmatmul.mubr.f32.gmra.mrb[0].mxu0 %v647
    %v2206 = vpop.f32.mrb[0].mxu0
    %v2207 = vadd.f32 %v1822, %v2206
    %v2208 = vpop.f32.mrb[0].mxu0
    %v2209 = vadd.f32 %v1826, %v2208
    %2210 = vdwg.mxu0
    %2211 = vmatprep.subr.mxu0 %v946
    %2212 = vmatpush1.msra.mxu0 %v945
    %2213 = vmatprep.subr.mxu0 %v955
    %2214 = vmatpush1.msra.mxu0 %v954
    %2215 = vmatprep.subr.mxu0 %v964
    %2216 = vmatpush1.msra.mxu0 %v963
    %2217 = vmatprep.subr.mxu0 %v973
    %2218 = vmatpush1.msra.mxu0 %v972
    %2219 = vmatprep.subr.mxu0 %v982
    %2220 = vmatpush1.msra.mxu0 %v981
    %2221 = vmatprep.subr.mxu0 %v991
    %2222 = vmatpush1.msra.mxu0 %v990
    %2223 = vmatprep.subr.mxu0 %v1000
    %2224 = vmatpush1.msra.mxu0 %v999
    %2225 = vmatprep.subr.mxu0 %v1009
    %2226 = vmatpush1.msra.mxu0 %v1008
    %2227 = vmatprep.subr.mxu0 %v1018
    %2228 = vmatpush1.msra.mxu0 %v1017
    %2229 = vmatprep.subr.mxu0 %v1027
    %2230 = vmatpush1.msra.mxu0 %v1026
    %2231 = vmatprep.subr.mxu0 %v1036
    %2232 = vmatpush1.msra.mxu0 %v1035
    %2233 = vmatprep.subr.mxu0 %v1045
    %2234 = vmatpush1.msra.mxu0 %v1044
    %2235 = vmatprep.subr.mxu0 %v1054
    %2236 = vmatpush1.msra.mxu0 %v1053
    %2237 = vmatprep.subr.mxu0 %v1063
    %2238 = vmatpush1.msra.mxu0 %v1062
    %2239 = vmatprep.subr.mxu0 %v1072
    %2240 = vmatpush1.msra.mxu0 %v1071
    %2241 = vmatprep.subr.mxu0 %v1081
    %2242 = vmatpush1.msra.mxu0 %v1080
    %2243 = vmatprep.subr.mxu0 %v1090
    %2244 = vmatpush1.msra.mxu0 %v1089
    %2245 = vmatprep.subr.mxu0 %v1099
    %2246 = vmatpush1.msra.mxu0 %v1098
    %2247 = vmatprep.subr.mxu0 %v1108
    %2248 = vmatpush1.msra.mxu0 %v1107
    %2249 = vmatprep.subr.mxu0 %v1117
    %2250 = vmatpush1.msra.mxu0 %v1116
    %2251 = vmatprep.subr.mxu0 %v1126
    %2252 = vmatpush1.msra.mxu0 %v1125
    %2253 = vmatprep.subr.mxu0 %v1135
    %2254 = vmatpush1.msra.mxu0 %v1134
    %2255 = vmatprep.subr.mxu0 %v1144
    %2256 = vmatpush1.msra.mxu0 %v1143
    %2257 = vmatprep.subr.mxu0 %v1153
    %2258 = vmatpush1.msra.mxu0 %v1152
    %2259 = vmatprep.subr.mxu0 %v1162
    %2260 = vmatpush1.msra.mxu0 %v1161
    %2261 = vmatprep.subr.mxu0 %v1171
    %2262 = vmatpush1.msra.mxu0 %v1170
    %2263 = vmatprep.subr.mxu0 %v1180
    %2264 = vmatpush1.msra.mxu0 %v1179
    %2265 = vmatprep.subr.mxu0 %v1189
    %2266 = vmatpush1.msra.mxu0 %v1188
    %2267 = vmatprep.subr.mxu0 %v1198
    %2268 = vmatpush1.msra.mxu0 %v1197
    %2269 = vmatprep.subr.mxu0 %v1207
    %2270 = vmatpush1.msra.mxu0 %v1206
    %2271 = vmatprep.subr.mxu0 %v1216
    %2272 = vmatpush1.msra.mxu0 %v1215
    %2273 = vmatprep.subr.mxu0 %v1225
    %2274 = vmatpush1.msra.mxu0 %v1224
    %2275 = vmatprep.mubr.f32.mxu0 %v650
    %2276 = vmatmul.mubr.f32.gmra.mrb[0].mxu0 %v649
    %v2277 = vpop.f32.mrb[0].mxu0
    %v2278 = vadd.f32 %v2207, %v2277
    %v2279 = vpop.f32.mrb[0].mxu0
    %v2280 = vadd.f32 %v2209, %v2279
    %2281 = vdwg.mxu0
    %2282 = vmatprep.subr.mxu0 %v1234
    %2283 = vmatpush1.msra.mxu0 %v1233
    %2284 = vmatprep.subr.mxu0 %v1243
    %2285 = vmatpush1.msra.mxu0 %v1242
    %2286 = vmatprep.subr.mxu0 %v1252
    %2287 = vmatpush1.msra.mxu0 %v1251
    %2288 = vmatprep.subr.mxu0 %v1261
    %2289 = vmatpush1.msra.mxu0 %v1260
    %2290 = vmatprep.subr.mxu0 %v1270
    %2291 = vmatpush1.msra.mxu0 %v1269
    %2292 = vmatprep.subr.mxu0 %v1279
    %2293 = vmatpush1.msra.mxu0 %v1278
    %2294 = vmatprep.subr.mxu0 %v1288
    %2295 = vmatpush1.msra.mxu0 %v1287
    %2296 = vmatprep.subr.mxu0 %v1297
    %2297 = vmatpush1.msra.mxu0 %v1296
    %2298 = vmatprep.subr.mxu0 %v1306
    %2299 = vmatpush1.msra.mxu0 %v1305
    %2300 = vmatprep.subr.mxu0 %v1315
    %2301 = vmatpush1.msra.mxu0 %v1314
    %2302 = vmatprep.subr.mxu0 %v1324
    %2303 = vmatpush1.msra.mxu0 %v1323
    %2304 = vmatprep.subr.mxu0 %v1333
    %2305 = vmatpush1.msra.mxu0 %v1332
    %2306 = vmatprep.subr.mxu0 %v1342
    %2307 = vmatpush1.msra.mxu0 %v1341
    %2308 = vmatprep.subr.mxu0 %v1351
    %2309 = vmatpush1.msra.mxu0 %v1350
    %2310 = vmatprep.subr.mxu0 %v1360
    %2311 = vmatpush1.msra.mxu0 %v1359
    %2312 = vmatprep.subr.mxu0 %v1369
    %2313 = vmatpush1.msra.mxu0 %v1368
    %2314 = vmatprep.subr.mxu0 %v1378
    %2315 = vmatpush1.msra.mxu0 %v1377
    %2316 = vmatprep.subr.mxu0 %v1387
    %2317 = vmatpush1.msra.mxu0 %v1386
    %2318 = vmatprep.subr.mxu0 %v1396
    %2319 = vmatpush1.msra.mxu0 %v1395
    %2320 = vmatprep.subr.mxu0 %v1405
    %2321 = vmatpush1.msra.mxu0 %v1404
    %2322 = vmatprep.subr.mxu0 %v1414
    %2323 = vmatpush1.msra.mxu0 %v1413
    %2324 = vmatprep.subr.mxu0 %v1423
    %2325 = vmatpush1.msra.mxu0 %v1422
    %2326 = vmatprep.subr.mxu0 %v1432
    %2327 = vmatpush1.msra.mxu0 %v1431
    %2328 = vmatprep.subr.mxu0 %v1441
    %2329 = vmatpush1.msra.mxu0 %v1440
    %2330 = vmatprep.subr.mxu0 %v1450
    %2331 = vmatpush1.msra.mxu0 %v1449
    %2332 = vmatprep.subr.mxu0 %v1459
    %2333 = vmatpush1.msra.mxu0 %v1458
    %2334 = vmatprep.subr.mxu0 %v1468
    %2335 = vmatpush1.msra.mxu0 %v1467
    %2336 = vmatprep.subr.mxu0 %v1477
    %2337 = vmatpush1.msra.mxu0 %v1476
    %2338 = vmatprep.subr.mxu0 %v1486
    %2339 = vmatpush1.msra.mxu0 %v1485
    %2340 = vmatprep.subr.mxu0 %v1495
    %2341 = vmatpush1.msra.mxu0 %v1494
    %2342 = vmatprep.subr.mxu0 %v1504
    %2343 = vmatpush1.msra.mxu0 %v1503
    %2344 = vmatprep.subr.mxu0 %v1513
    %2345 = vmatpush1.msra.mxu0 %v1512
    %2346 = vmatprep.mubr.f32.mxu0 %v652
    %2347 = vmatmul.mubr.f32.gmra.mrb[0].mxu0 %v651
    %v2348 = vpop.f32.mrb[0].mxu0
    %v2349 = vadd.f32 %v2278, %v2348
    %v2350 = vpop.f32.mrb[0].mxu0
    %v2351 = vadd.f32 %v2280, %v2350
    %2352 = vdwg.mxu0
    %2353 = vmatprep.subr.mxu0 %v1522
    %2354 = vmatpush1.msra.mxu0 %v1521
    %2355 = vmatprep.subr.mxu0 %v1531
    %2356 = vmatpush1.msra.mxu0 %v1530
    %2357 = vmatprep.subr.mxu0 %v1540
    %2358 = vmatpush1.msra.mxu0 %v1539
    %2359 = vmatprep.subr.mxu0 %v1549
    %2360 = vmatpush1.msra.mxu0 %v1548
    %2361 = vmatprep.subr.mxu0 %v1558
    %2362 = vmatpush1.msra.mxu0 %v1557
    %2363 = vmatprep.subr.mxu0 %v1567
    %2364 = vmatpush1.msra.mxu0 %v1566
    %2365 = vmatprep.subr.mxu0 %v1576
    %2366 = vmatpush1.msra.mxu0 %v1575
    %2367 = vmatprep.subr.mxu0 %v1585
    %2368 = vmatpush1.msra.mxu0 %v1584
    %2369 = vmatprep.subr.mxu0 %v1594
    %2370 = vmatpush1.msra.mxu0 %v1593
    %2371 = vmatprep.subr.mxu0 %v1603
    %2372 = vmatpush1.msra.mxu0 %v1602
    %2373 = vmatprep.subr.mxu0 %v1612
    %2374 = vmatpush1.msra.mxu0 %v1611
    %2375 = vmatprep.subr.mxu0 %v1621
    %2376 = vmatpush1.msra.mxu0 %v1620
    %2377 = vmatprep.subr.mxu0 %v1630
    %2378 = vmatpush1.msra.mxu0 %v1629
    %2379 = vmatprep.subr.mxu0 %v1639
    %2380 = vmatpush1.msra.mxu0 %v1638
    %2381 = vmatprep.subr.mxu0 %v1648
    %2382 = vmatpush1.msra.mxu0 %v1647
    %2383 = vmatprep.subr.mxu0 %v1657
    %2384 = vmatpush1.msra.mxu0 %v1656
    %2385 = vmatprep.subr.mxu0 %v1666
    %2386 = vmatpush1.msra.mxu0 %v1665
    %2387 = vmatprep.subr.mxu0 %v1675
    %2388 = vmatpush1.msra.mxu0 %v1674
    %2389 = vmatprep.subr.mxu0 %v1684
    %2390 = vmatpush1.msra.mxu0 %v1683
    %2391 = vmatprep.subr.mxu0 %v1693
    %2392 = vmatpush1.msra.mxu0 %v1692
    %2393 = vmatprep.subr.mxu0 %v1702
    %2394 = vmatpush1.msra.mxu0 %v1701
    %2395 = vmatprep.subr.mxu0 %v1711
    %2396 = vmatpush1.msra.mxu0 %v1710
    %2397 = vmatprep.subr.mxu0 %v1720
    %2398 = vmatpush1.msra.mxu0 %v1719
    %2399 = vmatprep.subr.mxu0 %v1729
    %2400 = vmatpush1.msra.mxu0 %v1728
    %2401 = vmatprep.subr.mxu0 %v1738
    %2402 = vmatpush1.msra.mxu0 %v1737
    %2403 = vmatprep.subr.mxu0 %v1747
    %2404 = vmatpush1.msra.mxu0 %v1746
    %2405 = vmatprep.subr.mxu0 %v1756
    %2406 = vmatpush1.msra.mxu0 %v1755
    %2407 = vmatprep.subr.mxu0 %v1765
    %2408 = vmatpush1.msra.mxu0 %v1764
    %2409 = vmatprep.subr.mxu0 %v1774
    %2410 = vmatpush1.msra.mxu0 %v1773
    %2411 = vmatprep.subr.mxu0 %v1783
    %2412 = vmatpush1.msra.mxu0 %v1782
    %2413 = vmatprep.subr.mxu0 %v1792
    %2414 = vmatpush1.msra.mxu0 %v1791
    %2415 = vmatprep.subr.mxu0 %v1801
    %2416 = vmatpush1.msra.mxu0 %v1800
    %2417 = vmatprep.mubr.f32.mxu0 %v654
    %2418 = vmatmul.mubr.f32.gmra.mrb[0].mxu0 %v653
    %v2419 = vpop.f32.mrb[0].mxu0
    %v2420 = vadd.f32 %v2349, %v2419
    %v2421 = vpop.f32.mrb[0].mxu0
    %v2422 = vadd.f32 %v2351, %v2421
    %2423 = vdwg.mxu0
    %2424 = vmatprep.subr.mxu0 %v660
    %2425 = vmatpush1.msra.mxu0 %v659
    %2426 = vmatprep.subr.mxu0 %v669
    %2427 = vmatpush1.msra.mxu0 %v668
    %2428 = vmatprep.subr.mxu0 %v678
    %2429 = vmatpush1.msra.mxu0 %v677
    %2430 = vmatprep.subr.mxu0 %v687
    %2431 = vmatpush1.msra.mxu0 %v686
    %2432 = vmatprep.subr.mxu0 %v696
    %2433 = vmatpush1.msra.mxu0 %v695
    %2434 = vmatprep.subr.mxu0 %v705
    %2435 = vmatpush1.msra.mxu0 %v704
    %2436 = vmatprep.subr.mxu0 %v714
    %2437 = vmatpush1.msra.mxu0 %v713
    %2438 = vmatprep.subr.mxu0 %v723
    %2439 = vmatpush1.msra.mxu0 %v722
    %2440 = vmatprep.subr.mxu0 %v732
    %2441 = vmatpush1.msra.mxu0 %v731
    %2442 = vmatprep.subr.mxu0 %v741
    %2443 = vmatpush1.msra.mxu0 %v740
    %2444 = vmatprep.subr.mxu0 %v750
    %2445 = vmatpush1.msra.mxu0 %v749
    %2446 = vmatprep.subr.mxu0 %v759
    %2447 = vmatpush1.msra.mxu0 %v758
    %2448 = vmatprep.subr.mxu0 %v768
    %2449 = vmatpush1.msra.mxu0 %v767
    %2450 = vmatprep.subr.mxu0 %v777
    %2451 = vmatpush1.msra.mxu0 %v776
    %2452 = vmatprep.subr.mxu0 %v786
    %2453 = vmatpush1.msra.mxu0 %v785
    %2454 = vmatprep.subr.mxu0 %v795
    %2455 = vmatpush1.msra.mxu0 %v794
    %2456 = vmatprep.subr.mxu0 %v804
    %2457 = vmatpush1.msra.mxu0 %v803
    %2458 = vmatprep.subr.mxu0 %v813
    %2459 = vmatpush1.msra.mxu0 %v812
    %2460 = vmatprep.subr.mxu0 %v822
    %2461 = vmatpush1.msra.mxu0 %v821
    %2462 = vmatprep.subr.mxu0 %v831
    %2463 = vmatpush1.msra.mxu0 %v830
    %2464 = vmatprep.subr.mxu0 %v840
    %2465 = vmatpush1.msra.mxu0 %v839
    %2466 = vmatprep.subr.mxu0 %v849
    %2467 = vmatpush1.msra.mxu0 %v848
    %2468 = vmatprep.subr.mxu0 %v858
    %2469 = vmatpush1.msra.mxu0 %v857
    %2470 = vmatprep.subr.mxu0 %v867
    %2471 = vmatpush1.msra.mxu0 %v866
    %2472 = vmatprep.subr.mxu0 %v876
    %2473 = vmatpush1.msra.mxu0 %v875
    %2474 = vmatprep.subr.mxu0 %v885
    %2475 = vmatpush1.msra.mxu0 %v884
    %2476 = vmatprep.subr.mxu0 %v894
    %2477 = vmatpush1.msra.mxu0 %v893
    %2478 = vmatprep.subr.mxu0 %v903
    %2479 = vmatpush1.msra.mxu0 %v902
    %2480 = vmatprep.subr.mxu0 %v912
    %2481 = vmatpush1.msra.mxu0 %v911
    %2482 = vmatprep.subr.mxu0 %v921
    %2483 = vmatpush1.msra.mxu0 %v920
    %2484 = vmatprep.subr.mxu0 %v930
    %2485 = vmatpush1.msra.mxu0 %v929
    %2486 = vmatprep.subr.mxu0 %v939
    %2487 = vmatpush1.msra.mxu0 %v938
    %2488 = vmatprep.mubr.f32.mxu0 %v648
    %2489 = vmatmul.mubr.f32.gmra.mrb[0].mxu0 %v647
    %v2490 = vpop.f32.mrb[0].mxu0
    %v2491 = vadd.f32 %v1830, %v2490
    %v2492 = vpop.f32.mrb[0].mxu0
    %v2493 = vadd.f32 %v1834, %v2492
    %2494 = vdwg.mxu0
    %2495 = vmatprep.subr.mxu0 %v948
    %2496 = vmatpush1.msra.mxu0 %v947
    %2497 = vmatprep.subr.mxu0 %v957
    %2498 = vmatpush1.msra.mxu0 %v956
    %2499 = vmatprep.subr.mxu0 %v966
    %2500 = vmatpush1.msra.mxu0 %v965
    %2501 = vmatprep.subr.mxu0 %v975
    %2502 = vmatpush1.msra.mxu0 %v974
    %2503 = vmatprep.subr.mxu0 %v984
    %2504 = vmatpush1.msra.mxu0 %v983
    %2505 = vmatprep.subr.mxu0 %v993
    %2506 = vmatpush1.msra.mxu0 %v992
    %2507 = vmatprep.subr.mxu0 %v1002
    %2508 = vmatpush1.msra.mxu0 %v1001
    %2509 = vmatprep.subr.mxu0 %v1011
    %2510 = vmatpush1.msra.mxu0 %v1010
    %2511 = vmatprep.subr.mxu0 %v1020
    %2512 = vmatpush1.msra.mxu0 %v1019
    %2513 = vmatprep.subr.mxu0 %v1029
    %2514 = vmatpush1.msra.mxu0 %v1028
    %2515 = vmatprep.subr.mxu0 %v1038
    %2516 = vmatpush1.msra.mxu0 %v1037
    %2517 = vmatprep.subr.mxu0 %v1047
    %2518 = vmatpush1.msra.mxu0 %v1046
    %2519 = vmatprep.subr.mxu0 %v1056
    %2520 = vmatpush1.msra.mxu0 %v1055
    %2521 = vmatprep.subr.mxu0 %v1065
    %2522 = vmatpush1.msra.mxu0 %v1064
    %2523 = vmatprep.subr.mxu0 %v1074
    %2524 = vmatpush1.msra.mxu0 %v1073
    %2525 = vmatprep.subr.mxu0 %v1083
    %2526 = vmatpush1.msra.mxu0 %v1082
    %2527 = vmatprep.subr.mxu0 %v1092
    %2528 = vmatpush1.msra.mxu0 %v1091
    %2529 = vmatprep.subr.mxu0 %v1101
    %2530 = vmatpush1.msra.mxu0 %v1100
    %2531 = vmatprep.subr.mxu0 %v1110
    %2532 = vmatpush1.msra.mxu0 %v1109
    %2533 = vmatprep.subr.mxu0 %v1119
    %2534 = vmatpush1.msra.mxu0 %v1118
    %2535 = vmatprep.subr.mxu0 %v1128
    %2536 = vmatpush1.msra.mxu0 %v1127
    %2537 = vmatprep.subr.mxu0 %v1137
    %2538 = vmatpush1.msra.mxu0 %v1136
    %2539 = vmatprep.subr.mxu0 %v1146
    %2540 = vmatpush1.msra.mxu0 %v1145
    %2541 = vmatprep.subr.mxu0 %v1155
    %2542 = vmatpush1.msra.mxu0 %v1154
    %2543 = vmatprep.subr.mxu0 %v1164
    %2544 = vmatpush1.msra.mxu0 %v1163
    %2545 = vmatprep.subr.mxu0 %v1173
    %2546 = vmatpush1.msra.mxu0 %v1172
    %2547 = vmatprep.subr.mxu0 %v1182
    %2548 = vmatpush1.msra.mxu0 %v1181
    %2549 = vmatprep.subr.mxu0 %v1191
    %2550 = vmatpush1.msra.mxu0 %v1190
    %2551 = vmatprep.subr.mxu0 %v1200
    %2552 = vmatpush1.msra.mxu0 %v1199
    %2553 = vmatprep.subr.mxu0 %v1209
    %2554 = vmatpush1.msra.mxu0 %v1208
    %2555 = vmatprep.subr.mxu0 %v1218
    %2556 = vmatpush1.msra.mxu0 %v1217
    %2557 = vmatprep.subr.mxu0 %v1227
    %2558 = vmatpush1.msra.mxu0 %v1226
    %2559 = vmatprep.mubr.f32.mxu0 %v650
    %2560 = vmatmul.mubr.f32.gmra.mrb[0].mxu0 %v649
    %v2561 = vpop.f32.mrb[0].mxu0
    %v2562 = vadd.f32 %v2491, %v2561
    %v2563 = vpop.f32.mrb[0].mxu0
    %v2564 = vadd.f32 %v2493, %v2563
    %2565 = vdwg.mxu0
    %2566 = vmatprep.subr.mxu0 %v1236
    %2567 = vmatpush1.msra.mxu0 %v1235
    %2568 = vmatprep.subr.mxu0 %v1245
    %2569 = vmatpush1.msra.mxu0 %v1244
    %2570 = vmatprep.subr.mxu0 %v1254
    %2571 = vmatpush1.msra.mxu0 %v1253
    %2572 = vmatprep.subr.mxu0 %v1263
    %2573 = vmatpush1.msra.mxu0 %v1262
    %2574 = vmatprep.subr.mxu0 %v1272
    %2575 = vmatpush1.msra.mxu0 %v1271
    %2576 = vmatprep.subr.mxu0 %v1281
    %2577 = vmatpush1.msra.mxu0 %v1280
    %2578 = vmatprep.subr.mxu0 %v1290
    %2579 = vmatpush1.msra.mxu0 %v1289
    %2580 = vmatprep.subr.mxu0 %v1299
    %2581 = vmatpush1.msra.mxu0 %v1298
    %2582 = vmatprep.subr.mxu0 %v1308
    %2583 = vmatpush1.msra.mxu0 %v1307
    %2584 = vmatprep.subr.mxu0 %v1317
    %2585 = vmatpush1.msra.mxu0 %v1316
    %2586 = vmatprep.subr.mxu0 %v1326
    %2587 = vmatpush1.msra.mxu0 %v1325
    %2588 = vmatprep.subr.mxu0 %v1335
    %2589 = vmatpush1.msra.mxu0 %v1334
    %2590 = vmatprep.subr.mxu0 %v1344
    %2591 = vmatpush1.msra.mxu0 %v1343
    %2592 = vmatprep.subr.mxu0 %v1353
    %2593 = vmatpush1.msra.mxu0 %v1352
    %2594 = vmatprep.subr.mxu0 %v1362
    %2595 = vmatpush1.msra.mxu0 %v1361
    %2596 = vmatprep.subr.mxu0 %v1371
    %2597 = vmatpush1.msra.mxu0 %v1370
    %2598 = vmatprep.subr.mxu0 %v1380
    %2599 = vmatpush1.msra.mxu0 %v1379
    %2600 = vmatprep.subr.mxu0 %v1389
    %2601 = vmatpush1.msra.mxu0 %v1388
    %2602 = vmatprep.subr.mxu0 %v1398
    %2603 = vmatpush1.msra.mxu0 %v1397
    %2604 = vmatprep.subr.mxu0 %v1407
    %2605 = vmatpush1.msra.mxu0 %v1406
    %2606 = vmatprep.subr.mxu0 %v1416
    %2607 = vmatpush1.msra.mxu0 %v1415
    %2608 = vmatprep.subr.mxu0 %v1425
    %2609 = vmatpush1.msra.mxu0 %v1424
    %2610 = vmatprep.subr.mxu0 %v1434
    %2611 = vmatpush1.msra.mxu0 %v1433
    %2612 = vmatprep.subr.mxu0 %v1443
    %2613 = vmatpush1.msra.mxu0 %v1442
    %2614 = vmatprep.subr.mxu0 %v1452
    %2615 = vmatpush1.msra.mxu0 %v1451
    %2616 = vmatprep.subr.mxu0 %v1461
    %2617 = vmatpush1.msra.mxu0 %v1460
    %2618 = vmatprep.subr.mxu0 %v1470
    %2619 = vmatpush1.msra.mxu0 %v1469
    %2620 = vmatprep.subr.mxu0 %v1479
    %2621 = vmatpush1.msra.mxu0 %v1478
    %2622 = vmatprep.subr.mxu0 %v1488
    %2623 = vmatpush1.msra.mxu0 %v1487
    %2624 = vmatprep.subr.mxu0 %v1497
    %2625 = vmatpush1.msra.mxu0 %v1496
    %2626 = vmatprep.subr.mxu0 %v1506
    %2627 = vmatpush1.msra.mxu0 %v1505
    %2628 = vmatprep.subr.mxu0 %v1515
    %2629 = vmatpush1.msra.mxu0 %v1514
    %2630 = vmatprep.mubr.f32.mxu0 %v652
    %2631 = vmatmul.mubr.f32.gmra.mrb[0].mxu0 %v651
    %v2632 = vpop.f32.mrb[0].mxu0
    %v2633 = vadd.f32 %v2562, %v2632
    %v2634 = vpop.f32.mrb[0].mxu0
    %v2635 = vadd.f32 %v2564, %v2634
    %2636 = vdwg.mxu0
    %2637 = vmatprep.subr.mxu0 %v1524
    %2638 = vmatpush1.msra.mxu0 %v1523
    %2639 = vmatprep.subr.mxu0 %v1533
    %2640 = vmatpush1.msra.mxu0 %v1532
    %2641 = vmatprep.subr.mxu0 %v1542
    %2642 = vmatpush1.msra.mxu0 %v1541
    %2643 = vmatprep.subr.mxu0 %v1551
    %2644 = vmatpush1.msra.mxu0 %v1550
    %2645 = vmatprep.subr.mxu0 %v1560
    %2646 = vmatpush1.msra.mxu0 %v1559
    %2647 = vmatprep.subr.mxu0 %v1569
    %2648 = vmatpush1.msra.mxu0 %v1568
    %2649 = vmatprep.subr.mxu0 %v1578
    %2650 = vmatpush1.msra.mxu0 %v1577
    %2651 = vmatprep.subr.mxu0 %v1587
    %2652 = vmatpush1.msra.mxu0 %v1586
    %2653 = vmatprep.subr.mxu0 %v1596
    %2654 = vmatpush1.msra.mxu0 %v1595
    %2655 = vmatprep.subr.mxu0 %v1605
    %2656 = vmatpush1.msra.mxu0 %v1604
    %2657 = vmatprep.subr.mxu0 %v1614
    %2658 = vmatpush1.msra.mxu0 %v1613
    %2659 = vmatprep.subr.mxu0 %v1623
    %2660 = vmatpush1.msra.mxu0 %v1622
    %2661 = vmatprep.subr.mxu0 %v1632
    %2662 = vmatpush1.msra.mxu0 %v1631
    %2663 = vmatprep.subr.mxu0 %v1641
    %2664 = vmatpush1.msra.mxu0 %v1640
    %2665 = vmatprep.subr.mxu0 %v1650
    %2666 = vmatpush1.msra.mxu0 %v1649
    %2667 = vmatprep.subr.mxu0 %v1659
    %2668 = vmatpush1.msra.mxu0 %v1658
    %2669 = vmatprep.subr.mxu0 %v1668
    %2670 = vmatpush1.msra.mxu0 %v1667
    %2671 = vmatprep.subr.mxu0 %v1677
    %2672 = vmatpush1.msra.mxu0 %v1676
    %2673 = vmatprep.subr.mxu0 %v1686
    %2674 = vmatpush1.msra.mxu0 %v1685
    %2675 = vmatprep.subr.mxu0 %v1695
    %2676 = vmatpush1.msra.mxu0 %v1694
    %2677 = vmatprep.subr.mxu0 %v1704
    %2678 = vmatpush1.msra.mxu0 %v1703
    %2679 = vmatprep.subr.mxu0 %v1713
    %2680 = vmatpush1.msra.mxu0 %v1712
    %2681 = vmatprep.subr.mxu0 %v1722
    %2682 = vmatpush1.msra.mxu0 %v1721
    %2683 = vmatprep.subr.mxu0 %v1731
    %2684 = vmatpush1.msra.mxu0 %v1730
    %2685 = vmatprep.subr.mxu0 %v1740
    %2686 = vmatpush1.msra.mxu0 %v1739
    %2687 = vmatprep.subr.mxu0 %v1749
    %2688 = vmatpush1.msra.mxu0 %v1748
    %2689 = vmatprep.subr.mxu0 %v1758
    %2690 = vmatpush1.msra.mxu0 %v1757
    %2691 = vmatprep.subr.mxu0 %v1767
    %2692 = vmatpush1.msra.mxu0 %v1766
    %2693 = vmatprep.subr.mxu0 %v1776
    %2694 = vmatpush1.msra.mxu0 %v1775
    %2695 = vmatprep.subr.mxu0 %v1785
    %2696 = vmatpush1.msra.mxu0 %v1784
    %2697 = vmatprep.subr.mxu0 %v1794
    %2698 = vmatpush1.msra.mxu0 %v1793
    %2699 = vmatprep.subr.mxu0 %v1803
    %2700 = vmatpush1.msra.mxu0 %v1802
    %2701 = vmatprep.mubr.f32.mxu0 %v654
    %2702 = vmatmul.mubr.f32.gmra.mrb[0].mxu0 %v653
    %v2703 = vpop.f32.mrb[0].mxu0
    %v2704 = vadd.f32 %v2633, %v2703
    %v2705 = vpop.f32.mrb[0].mxu0
    %v2706 = vadd.f32 %v2635, %v2705
    %2707 = vdwg.mxu0
    %2708 = vmatprep.subr.mxu0 %v662
    %2709 = vmatpush1.msra.mxu0 %v661
    %2710 = vmatprep.subr.mxu0 %v671
    %2711 = vmatpush1.msra.mxu0 %v670
    %2712 = vmatprep.subr.mxu0 %v680
    %2713 = vmatpush1.msra.mxu0 %v679
    %2714 = vmatprep.subr.mxu0 %v689
    %2715 = vmatpush1.msra.mxu0 %v688
    %2716 = vmatprep.subr.mxu0 %v698
    %2717 = vmatpush1.msra.mxu0 %v697
    %2718 = vmatprep.subr.mxu0 %v707
    %2719 = vmatpush1.msra.mxu0 %v706
    %2720 = vmatprep.subr.mxu0 %v716
    %2721 = vmatpush1.msra.mxu0 %v715
    %2722 = vmatprep.subr.mxu0 %v725
    %2723 = vmatpush1.msra.mxu0 %v724
    %2724 = vmatprep.subr.mxu0 %v734
    %2725 = vmatpush1.msra.mxu0 %v733
    %2726 = vmatprep.subr.mxu0 %v743
    %2727 = vmatpush1.msra.mxu0 %v742
    %2728 = vmatprep.subr.mxu0 %v752
    %2729 = vmatpush1.msra.mxu0 %v751
    %2730 = vmatprep.subr.mxu0 %v761
    %2731 = vmatpush1.msra.mxu0 %v760
    %2732 = vmatprep.subr.mxu0 %v770
    %2733 = vmatpush1.msra.mxu0 %v769
    %2734 = vmatprep.subr.mxu0 %v779
    %2735 = vmatpush1.msra.mxu0 %v778
    %2736 = vmatprep.subr.mxu0 %v788
    %2737 = vmatpush1.msra.mxu0 %v787
    %2738 = vmatprep.subr.mxu0 %v797
    %2739 = vmatpush1.msra.mxu0 %v796
    %2740 = vmatprep.subr.mxu0 %v806
    %2741 = vmatpush1.msra.mxu0 %v805
    %2742 = vmatprep.subr.mxu0 %v815
    %2743 = vmatpush1.msra.mxu0 %v814
    %2744 = vmatprep.subr.mxu0 %v824
    %2745 = vmatpush1.msra.mxu0 %v823
    %2746 = vmatprep.subr.mxu0 %v833
    %2747 = vmatpush1.msra.mxu0 %v832
    %2748 = vmatprep.subr.mxu0 %v842
    %2749 = vmatpush1.msra.mxu0 %v841
    %2750 = vmatprep.subr.mxu0 %v851
    %2751 = vmatpush1.msra.mxu0 %v850
    %2752 = vmatprep.subr.mxu0 %v860
    %2753 = vmatpush1.msra.mxu0 %v859
    %2754 = vmatprep.subr.mxu0 %v869
    %2755 = vmatpush1.msra.mxu0 %v868
    %2756 = vmatprep.subr.mxu0 %v878
    %2757 = vmatpush1.msra.mxu0 %v877
    %2758 = vmatprep.subr.mxu0 %v887
    %2759 = vmatpush1.msra.mxu0 %v886
    %2760 = vmatprep.subr.mxu0 %v896
    %2761 = vmatpush1.msra.mxu0 %v895
    %2762 = vmatprep.subr.mxu0 %v905
    %2763 = vmatpush1.msra.mxu0 %v904
    %2764 = vmatprep.subr.mxu0 %v914
    %2765 = vmatpush1.msra.mxu0 %v913
    %2766 = vmatprep.subr.mxu0 %v923
    %2767 = vmatpush1.msra.mxu0 %v922
    %2768 = vmatprep.subr.mxu0 %v932
    %2769 = vmatpush1.msra.mxu0 %v931
    %2770 = vmatprep.subr.mxu0 %v941
    %2771 = vmatpush1.msra.mxu0 %v940
    %2772 = vmatprep.mubr.f32.mxu0 %v648
    %2773 = vmatmul.mubr.f32.gmra.mrb[0].mxu0 %v647
    %v2774 = vpop.f32.mrb[0].mxu0
    %v2775 = vadd.f32 %v1838, %v2774
    %v2776 = vpop.f32.mrb[0].mxu0
    %v2777 = vadd.f32 %v1842, %v2776
    %2778 = vdwg.mxu0
    %2779 = vmatprep.subr.mxu0 %v950
    %2780 = vmatpush1.msra.mxu0 %v949
    %2781 = vmatprep.subr.mxu0 %v959
    %2782 = vmatpush1.msra.mxu0 %v958
    %2783 = vmatprep.subr.mxu0 %v968
    %2784 = vmatpush1.msra.mxu0 %v967
    %2785 = vmatprep.subr.mxu0 %v977
    %2786 = vmatpush1.msra.mxu0 %v976
    %2787 = vmatprep.subr.mxu0 %v986
    %2788 = vmatpush1.msra.mxu0 %v985
    %2789 = vmatprep.subr.mxu0 %v995
    %2790 = vmatpush1.msra.mxu0 %v994
    %2791 = vmatprep.subr.mxu0 %v1004
    %2792 = vmatpush1.msra.mxu0 %v1003
    %2793 = vmatprep.subr.mxu0 %v1013
    %2794 = vmatpush1.msra.mxu0 %v1012
    %2795 = vmatprep.subr.mxu0 %v1022
    %2796 = vmatpush1.msra.mxu0 %v1021
    %2797 = vmatprep.subr.mxu0 %v1031
    %2798 = vmatpush1.msra.mxu0 %v1030
    %2799 = vmatprep.subr.mxu0 %v1040
    %2800 = vmatpush1.msra.mxu0 %v1039
    %2801 = vmatprep.subr.mxu0 %v1049
    %2802 = vmatpush1.msra.mxu0 %v1048
    %2803 = vmatprep.subr.mxu0 %v1058
    %2804 = vmatpush1.msra.mxu0 %v1057
    %2805 = vmatprep.subr.mxu0 %v1067
    %2806 = vmatpush1.msra.mxu0 %v1066
    %2807 = vmatprep.subr.mxu0 %v1076
    %2808 = vmatpush1.msra.mxu0 %v1075
    %2809 = vmatprep.subr.mxu0 %v1085
    %2810 = vmatpush1.msra.mxu0 %v1084
    %2811 = vmatprep.subr.mxu0 %v1094
    %2812 = vmatpush1.msra.mxu0 %v1093
    %2813 = vmatprep.subr.mxu0 %v1103
    %2814 = vmatpush1.msra.mxu0 %v1102
    %2815 = vmatprep.subr.mxu0 %v1112
    %2816 = vmatpush1.msra.mxu0 %v1111
    %2817 = vmatprep.subr.mxu0 %v1121
    %2818 = vmatpush1.msra.mxu0 %v1120
    %2819 = vmatprep.subr.mxu0 %v1130
    %2820 = vmatpush1.msra.mxu0 %v1129
    %2821 = vmatprep.subr.mxu0 %v1139
    %2822 = vmatpush1.msra.mxu0 %v1138
    %2823 = vmatprep.subr.mxu0 %v1148
    %2824 = vmatpush1.msra.mxu0 %v1147
    %2825 = vmatprep.subr.mxu0 %v1157
    %2826 = vmatpush1.msra.mxu0 %v1156
    %2827 = vmatprep.subr.mxu0 %v1166
    %2828 = vmatpush1.msra.mxu0 %v1165
    %2829 = vmatprep.subr.mxu0 %v1175
    %2830 = vmatpush1.msra.mxu0 %v1174
    %2831 = vmatprep.subr.mxu0 %v1184
    %2832 = vmatpush1.msra.mxu0 %v1183
    %2833 = vmatprep.subr.mxu0 %v1193
    %2834 = vmatpush1.msra.mxu0 %v1192
    %2835 = vmatprep.subr.mxu0 %v1202
    %2836 = vmatpush1.msra.mxu0 %v1201
    %2837 = vmatprep.subr.mxu0 %v1211
    %2838 = vmatpush1.msra.mxu0 %v1210
    %2839 = vmatprep.subr.mxu0 %v1220
    %2840 = vmatpush1.msra.mxu0 %v1219
    %2841 = vmatprep.subr.mxu0 %v1229
    %2842 = vmatpush1.msra.mxu0 %v1228
    %2843 = vmatprep.mubr.f32.mxu0 %v650
    %2844 = vmatmul.mubr.f32.gmra.mrb[0].mxu0 %v649
    %v2845 = vpop.f32.mrb[0].mxu0
    %v2846 = vadd.f32 %v2775, %v2845
    %v2847 = vpop.f32.mrb[0].mxu0
    %v2848 = vadd.f32 %v2777, %v2847
    %2849 = vdwg.mxu0
    %2850 = vmatprep.subr.mxu0 %v1238
    %2851 = vmatpush1.msra.mxu0 %v1237
    %2852 = vmatprep.subr.mxu0 %v1247
    %2853 = vmatpush1.msra.mxu0 %v1246
    %2854 = vmatprep.subr.mxu0 %v1256
    %2855 = vmatpush1.msra.mxu0 %v1255
    %2856 = vmatprep.subr.mxu0 %v1265
    %2857 = vmatpush1.msra.mxu0 %v1264
    %2858 = vmatprep.subr.mxu0 %v1274
    %2859 = vmatpush1.msra.mxu0 %v1273
    %2860 = vmatprep.subr.mxu0 %v1283
    %2861 = vmatpush1.msra.mxu0 %v1282
    %2862 = vmatprep.subr.mxu0 %v1292
    %2863 = vmatpush1.msra.mxu0 %v1291
    %2864 = vmatprep.subr.mxu0 %v1301
    %2865 = vmatpush1.msra.mxu0 %v1300
    %2866 = vmatprep.subr.mxu0 %v1310
    %2867 = vmatpush1.msra.mxu0 %v1309
    %2868 = vmatprep.subr.mxu0 %v1319
    %2869 = vmatpush1.msra.mxu0 %v1318
    %2870 = vmatprep.subr.mxu0 %v1328
    %2871 = vmatpush1.msra.mxu0 %v1327
    %2872 = vmatprep.subr.mxu0 %v1337
    %2873 = vmatpush1.msra.mxu0 %v1336
    %2874 = vmatprep.subr.mxu0 %v1346
    %2875 = vmatpush1.msra.mxu0 %v1345
    %2876 = vmatprep.subr.mxu0 %v1355
    %2877 = vmatpush1.msra.mxu0 %v1354
    %2878 = vmatprep.subr.mxu0 %v1364
    %2879 = vmatpush1.msra.mxu0 %v1363
    %2880 = vmatprep.subr.mxu0 %v1373
    %2881 = vmatpush1.msra.mxu0 %v1372
    %2882 = vmatprep.subr.mxu0 %v1382
    %2883 = vmatpush1.msra.mxu0 %v1381
    %2884 = vmatprep.subr.mxu0 %v1391
    %2885 = vmatpush1.msra.mxu0 %v1390
    %2886 = vmatprep.subr.mxu0 %v1400
    %2887 = vmatpush1.msra.mxu0 %v1399
    %2888 = vmatprep.subr.mxu0 %v1409
    %2889 = vmatpush1.msra.mxu0 %v1408
    %2890 = vmatprep.subr.mxu0 %v1418
    %2891 = vmatpush1.msra.mxu0 %v1417
    %2892 = vmatprep.subr.mxu0 %v1427
    %2893 = vmatpush1.msra.mxu0 %v1426
    %2894 = vmatprep.subr.mxu0 %v1436
    %2895 = vmatpush1.msra.mxu0 %v1435
    %2896 = vmatprep.subr.mxu0 %v1445
    %2897 = vmatpush1.msra.mxu0 %v1444
    %2898 = vmatprep.subr.mxu0 %v1454
    %2899 = vmatpush1.msra.mxu0 %v1453
    %2900 = vmatprep.subr.mxu0 %v1463
    %2901 = vmatpush1.msra.mxu0 %v1462
    %2902 = vmatprep.subr.mxu0 %v1472
    %2903 = vmatpush1.msra.mxu0 %v1471
    %2904 = vmatprep.subr.mxu0 %v1481
    %2905 = vmatpush1.msra.mxu0 %v1480
    %2906 = vmatprep.subr.mxu0 %v1490
    %2907 = vmatpush1.msra.mxu0 %v1489
    %2908 = vmatprep.subr.mxu0 %v1499
    %2909 = vmatpush1.msra.mxu0 %v1498
    %2910 = vmatprep.subr.mxu0 %v1508
    %2911 = vmatpush1.msra.mxu0 %v1507
    %2912 = vmatprep.subr.mxu0 %v1517
    %2913 = vmatpush1.msra.mxu0 %v1516
    %2914 = vmatprep.mubr.f32.mxu0 %v652
    %2915 = vmatmul.mubr.f32.gmra.mrb[0].mxu0 %v651
    %v2916 = vpop.f32.mrb[0].mxu0
    %v2917 = vadd.f32 %v2846, %v2916
    %v2918 = vpop.f32.mrb[0].mxu0
    %v2919 = vadd.f32 %v2848, %v2918
    %2920 = vdwg.mxu0
    %2921 = vmatprep.subr.mxu0 %v1526
    %2922 = vmatpush1.msra.mxu0 %v1525
    %2923 = vmatprep.subr.mxu0 %v1535
    %2924 = vmatpush1.msra.mxu0 %v1534
    %2925 = vmatprep.subr.mxu0 %v1544
    %2926 = vmatpush1.msra.mxu0 %v1543
    %2927 = vmatprep.subr.mxu0 %v1553
    %2928 = vmatpush1.msra.mxu0 %v1552
    %2929 = vmatprep.subr.mxu0 %v1562
    %2930 = vmatpush1.msra.mxu0 %v1561
    %2931 = vmatprep.subr.mxu0 %v1571
    %2932 = vmatpush1.msra.mxu0 %v1570
    %2933 = vmatprep.subr.mxu0 %v1580
    %2934 = vmatpush1.msra.mxu0 %v1579
    %2935 = vmatprep.subr.mxu0 %v1589
    %2936 = vmatpush1.msra.mxu0 %v1588
    %2937 = vmatprep.subr.mxu0 %v1598
    %2938 = vmatpush1.msra.mxu0 %v1597
    %2939 = vmatprep.subr.mxu0 %v1607
    %2940 = vmatpush1.msra.mxu0 %v1606
    %2941 = vmatprep.subr.mxu0 %v1616
    %2942 = vmatpush1.msra.mxu0 %v1615
    %2943 = vmatprep.subr.mxu0 %v1625
    %2944 = vmatpush1.msra.mxu0 %v1624
    %2945 = vmatprep.subr.mxu0 %v1634
    %2946 = vmatpush1.msra.mxu0 %v1633
    %2947 = vmatprep.subr.mxu0 %v1643
    %2948 = vmatpush1.msra.mxu0 %v1642
    %2949 = vmatprep.subr.mxu0 %v1652
    %2950 = vmatpush1.msra.mxu0 %v1651
    %2951 = vmatprep.subr.mxu0 %v1661
    %2952 = vmatpush1.msra.mxu0 %v1660
    %2953 = vmatprep.subr.mxu0 %v1670
    %2954 = vmatpush1.msra.mxu0 %v1669
    %2955 = vmatprep.subr.mxu0 %v1679
    %2956 = vmatpush1.msra.mxu0 %v1678
    %2957 = vmatprep.subr.mxu0 %v1688
    %2958 = vmatpush1.msra.mxu0 %v1687
    %2959 = vmatprep.subr.mxu0 %v1697
    %2960 = vmatpush1.msra.mxu0 %v1696
    %2961 = vmatprep.subr.mxu0 %v1706
    %2962 = vmatpush1.msra.mxu0 %v1705
    %2963 = vmatprep.subr.mxu0 %v1715
    %2964 = vmatpush1.msra.mxu0 %v1714
    %2965 = vmatprep.subr.mxu0 %v1724
    %2966 = vmatpush1.msra.mxu0 %v1723
    %2967 = vmatprep.subr.mxu0 %v1733
    %2968 = vmatpush1.msra.mxu0 %v1732
    %2969 = vmatprep.subr.mxu0 %v1742
    %2970 = vmatpush1.msra.mxu0 %v1741
    %2971 = vmatprep.subr.mxu0 %v1751
    %2972 = vmatpush1.msra.mxu0 %v1750
    %2973 = vmatprep.subr.mxu0 %v1760
    %2974 = vmatpush1.msra.mxu0 %v1759
    %2975 = vmatprep.subr.mxu0 %v1769
    %2976 = vmatpush1.msra.mxu0 %v1768
    %2977 = vmatprep.subr.mxu0 %v1778
    %2978 = vmatpush1.msra.mxu0 %v1777
    %2979 = vmatprep.subr.mxu0 %v1787
    %2980 = vmatpush1.msra.mxu0 %v1786
    %2981 = vmatprep.subr.mxu0 %v1796
    %2982 = vmatpush1.msra.mxu0 %v1795
    %2983 = vmatprep.subr.mxu0 %v1805
    %2984 = vmatpush1.msra.mxu0 %v1804
    %2985 = vmatprep.mubr.f32.mxu0 %v654
    %2986 = vmatmul.mubr.f32.gmra.mrb[0].mxu0 %v653
    %v2987 = vpop.f32.mrb[0].mxu0
    %v2988 = vadd.f32 %v2917, %v2987
    %v2989 = vpop.f32.mrb[0].mxu0
    %v2990 = vadd.f32 %v2919, %v2989
    %2991 = vdwg.mxu0
    %2992 = vmatprep.subr.mxu0 0.0
    %2993 = vmatpush1.msra.mxu0 %v663
    %2994 = vmatprep.subr.mxu0 0.0
    %2995 = vmatpush1.msra.mxu0 %v672
    %2996 = vmatprep.subr.mxu0 0.0
    %2997 = vmatpush1.msra.mxu0 %v681
    %2998 = vmatprep.subr.mxu0 0.0
    %2999 = vmatpush1.msra.mxu0 %v690
    %3000 = vmatprep.subr.mxu0 0.0
    %3001 = vmatpush1.msra.mxu0 %v699
    %3002 = vmatprep.subr.mxu0 0.0
    %3003 = vmatpush1.msra.mxu0 %v708
    %3004 = vmatprep.subr.mxu0 0.0
    %3005 = vmatpush1.msra.mxu0 %v717
    %3006 = vmatprep.subr.mxu0 0.0
    %3007 = vmatpush1.msra.mxu0 %v726
    %3008 = vmatprep.subr.mxu0 0.0
    %3009 = vmatpush1.msra.mxu0 %v735
    %3010 = vmatprep.subr.mxu0 0.0
    %3011 = vmatpush1.msra.mxu0 %v744
    %3012 = vmatprep.subr.mxu0 0.0
    %3013 = vmatpush1.msra.mxu0 %v753
    %3014 = vmatprep.subr.mxu0 0.0
    %3015 = vmatpush1.msra.mxu0 %v762
    %3016 = vmatprep.subr.mxu0 0.0
    %3017 = vmatpush1.msra.mxu0 %v771
    %3018 = vmatprep.subr.mxu0 0.0
    %3019 = vmatpush1.msra.mxu0 %v780
    %3020 = vmatprep.subr.mxu0 0.0
    %3021 = vmatpush1.msra.mxu0 %v789
    %3022 = vmatprep.subr.mxu0 0.0
    %3023 = vmatpush1.msra.mxu0 %v798
    %3024 = vmatprep.subr.mxu0 0.0
    %3025 = vmatpush1.msra.mxu0 %v807
    %3026 = vmatprep.subr.mxu0 0.0
    %3027 = vmatpush1.msra.mxu0 %v816
    %3028 = vmatprep.subr.mxu0 0.0
    %3029 = vmatpush1.msra.mxu0 %v825
    %3030 = vmatprep.subr.mxu0 0.0
    %3031 = vmatpush1.msra.mxu0 %v834
    %3032 = vmatprep.subr.mxu0 0.0
    %3033 = vmatpush1.msra.mxu0 %v843
    %3034 = vmatprep.subr.mxu0 0.0
    %3035 = vmatpush1.msra.mxu0 %v852
    %3036 = vmatprep.subr.mxu0 0.0
    %3037 = vmatpush1.msra.mxu0 %v861
    %3038 = vmatprep.subr.mxu0 0.0
    %3039 = vmatpush1.msra.mxu0 %v870
    %3040 = vmatprep.subr.mxu0 0.0
    %3041 = vmatpush1.msra.mxu0 %v879
    %3042 = vmatprep.subr.mxu0 0.0
    %3043 = vmatpush1.msra.mxu0 %v888
    %3044 = vmatprep.subr.mxu0 0.0
    %3045 = vmatpush1.msra.mxu0 %v897
    %3046 = vmatprep.subr.mxu0 0.0
    %3047 = vmatpush1.msra.mxu0 %v906
    %3048 = vmatprep.subr.mxu0 0.0
    %3049 = vmatpush1.msra.mxu0 %v915
    %3050 = vmatprep.subr.mxu0 0.0
    %3051 = vmatpush1.msra.mxu0 %v924
    %3052 = vmatprep.subr.mxu0 0.0
    %3053 = vmatpush1.msra.mxu0 %v933
    %3054 = vmatprep.subr.mxu0 0.0
    %3055 = vmatpush1.msra.mxu0 %v942
    %3056 = vmatprep.mubr.f32.mxu0 %v648
    %3057 = vmatmul.mubr.f32.gmra.mrb[0].mxu0 %v647
    %v3058 = vpop.f32.mrb[0].mxu0
    %v3059 = vadd.f32 %v1846, %v3058
    %v3060 = vpop.f32.mrb[0].mxu0
    %3061 = vdwg.mxu0
    %3062 = vmatprep.subr.mxu0 0.0
    %3063 = vmatpush1.msra.mxu0 %v951
    %3064 = vmatprep.subr.mxu0 0.0
    %3065 = vmatpush1.msra.mxu0 %v960
    %3066 = vmatprep.subr.mxu0 0.0
    %3067 = vmatpush1.msra.mxu0 %v969
    %3068 = vmatprep.subr.mxu0 0.0
    %3069 = vmatpush1.msra.mxu0 %v978
    %3070 = vmatprep.subr.mxu0 0.0
    %3071 = vmatpush1.msra.mxu0 %v987
    %3072 = vmatprep.subr.mxu0 0.0
    %3073 = vmatpush1.msra.mxu0 %v996
    %3074 = vmatprep.subr.mxu0 0.0
    %3075 = vmatpush1.msra.mxu0 %v1005
    %3076 = vmatprep.subr.mxu0 0.0
    %3077 = vmatpush1.msra.mxu0 %v1014
    %3078 = vmatprep.subr.mxu0 0.0
    %3079 = vmatpush1.msra.mxu0 %v1023
    %3080 = vmatprep.subr.mxu0 0.0
    %3081 = vmatpush1.msra.mxu0 %v1032
    %3082 = vmatprep.subr.mxu0 0.0
    %3083 = vmatpush1.msra.mxu0 %v1041
    %3084 = vmatprep.subr.mxu0 0.0
    %3085 = vmatpush1.msra.mxu0 %v1050
    %3086 = vmatprep.subr.mxu0 0.0
    %3087 = vmatpush1.msra.mxu0 %v1059
    %3088 = vmatprep.subr.mxu0 0.0
    %3089 = vmatpush1.msra.mxu0 %v1068
    %3090 = vmatprep.subr.mxu0 0.0
    %3091 = vmatpush1.msra.mxu0 %v1077
    %3092 = vmatprep.subr.mxu0 0.0
    %3093 = vmatpush1.msra.mxu0 %v1086
    %3094 = vmatprep.subr.mxu0 0.0
    %3095 = vmatpush1.msra.mxu0 %v1095
    %3096 = vmatprep.subr.mxu0 0.0
    %3097 = vmatpush1.msra.mxu0 %v1104
    %3098 = vmatprep.subr.mxu0 0.0
    %3099 = vmatpush1.msra.mxu0 %v1113
    %3100 = vmatprep.subr.mxu0 0.0
    %3101 = vmatpush1.msra.mxu0 %v1122
    %3102 = vmatprep.subr.mxu0 0.0
    %3103 = vmatpush1.msra.mxu0 %v1131
    %3104 = vmatprep.subr.mxu0 0.0
    %3105 = vmatpush1.msra.mxu0 %v1140
    %3106 = vmatprep.subr.mxu0 0.0
    %3107 = vmatpush1.msra.mxu0 %v1149
    %3108 = vmatprep.subr.mxu0 0.0
    %3109 = vmatpush1.msra.mxu0 %v1158
    %3110 = vmatprep.subr.mxu0 0.0
    %3111 = vmatpush1.msra.mxu0 %v1167
    %3112 = vmatprep.subr.mxu0 0.0
    %3113 = vmatpush1.msra.mxu0 %v1176
    %3114 = vmatprep.subr.mxu0 0.0
    %3115 = vmatpush1.msra.mxu0 %v1185
    %3116 = vmatprep.subr.mxu0 0.0
    %3117 = vmatpush1.msra.mxu0 %v1194
    %3118 = vmatprep.subr.mxu0 0.0
    %3119 = vmatpush1.msra.mxu0 %v1203
    %3120 = vmatprep.subr.mxu0 0.0
    %3121 = vmatpush1.msra.mxu0 %v1212
    %3122 = vmatprep.subr.mxu0 0.0
    %3123 = vmatpush1.msra.mxu0 %v1221
    %3124 = vmatprep.subr.mxu0 0.0
    %3125 = vmatpush1.msra.mxu0 %v1230
    %3126 = vmatprep.mubr.f32.mxu0 %v650
    %3127 = vmatmul.mubr.f32.gmra.mrb[0].mxu0 %v649
    %v3128 = vpop.f32.mrb[0].mxu0
    %v3129 = vadd.f32 %v3059, %v3128
    %v3130 = vpop.f32.mrb[0].mxu0
    %3131 = vdwg.mxu0
    %3132 = vmatprep.subr.mxu0 0.0
    %3133 = vmatpush1.msra.mxu0 %v1239
    %3134 = vmatprep.subr.mxu0 0.0
    %3135 = vmatpush1.msra.mxu0 %v1248
    %3136 = vmatprep.subr.mxu0 0.0
    %3137 = vmatpush1.msra.mxu0 %v1257
    %3138 = vmatprep.subr.mxu0 0.0
    %3139 = vmatpush1.msra.mxu0 %v1266
    %3140 = vmatprep.subr.mxu0 0.0
    %3141 = vmatpush1.msra.mxu0 %v1275
    %3142 = vmatprep.subr.mxu0 0.0
    %3143 = vmatpush1.msra.mxu0 %v1284
    %3144 = vmatprep.subr.mxu0 0.0
    %3145 = vmatpush1.msra.mxu0 %v1293
    %3146 = vmatprep.subr.mxu0 0.0
    %3147 = vmatpush1.msra.mxu0 %v1302
    %3148 = vmatprep.subr.mxu0 0.0
    %3149 = vmatpush1.msra.mxu0 %v1311
    %3150 = vmatprep.subr.mxu0 0.0
    %3151 = vmatpush1.msra.mxu0 %v1320
    %3152 = vmatprep.subr.mxu0 0.0
    %3153 = vmatpush1.msra.mxu0 %v1329
    %3154 = vmatprep.subr.mxu0 0.0
    %3155 = vmatpush1.msra.mxu0 %v1338
    %3156 = vmatprep.subr.mxu0 0.0
    %3157 = vmatpush1.msra.mxu0 %v1347
    %3158 = vmatprep.subr.mxu0 0.0
    %3159 = vmatpush1.msra.mxu0 %v1356
    %3160 = vmatprep.subr.mxu0 0.0
    %3161 = vmatpush1.msra.mxu0 %v1365
    %3162 = vmatprep.subr.mxu0 0.0
    %3163 = vmatpush1.msra.mxu0 %v1374
    %3164 = vmatprep.subr.mxu0 0.0
    %3165 = vmatpush1.msra.mxu0 %v1383
    %3166 = vmatprep.subr.mxu0 0.0
    %3167 = vmatpush1.msra.mxu0 %v1392
    %3168 = vmatprep.subr.mxu0 0.0
    %3169 = vmatpush1.msra.mxu0 %v1401
    %3170 = vmatprep.subr.mxu0 0.0
    %3171 = vmatpush1.msra.mxu0 %v1410
    %3172 = vmatprep.subr.mxu0 0.0
    %3173 = vmatpush1.msra.mxu0 %v1419
    %3174 = vmatprep.subr.mxu0 0.0
    %3175 = vmatpush1.msra.mxu0 %v1428
    %3176 = vmatprep.subr.mxu0 0.0
    %3177 = vmatpush1.msra.mxu0 %v1437
    %3178 = vmatprep.subr.mxu0 0.0
    %3179 = vmatpush1.msra.mxu0 %v1446
    %3180 = vmatprep.subr.mxu0 0.0
    %3181 = vmatpush1.msra.mxu0 %v1455
    %3182 = vmatprep.subr.mxu0 0.0
    %3183 = vmatpush1.msra.mxu0 %v1464
    %3184 = vmatprep.subr.mxu0 0.0
    %3185 = vmatpush1.msra.mxu0 %v1473
    %3186 = vmatprep.subr.mxu0 0.0
    %3187 = vmatpush1.msra.mxu0 %v1482
    %3188 = vmatprep.subr.mxu0 0.0
    %3189 = vmatpush1.msra.mxu0 %v1491
    %3190 = vmatprep.subr.mxu0 0.0
    %3191 = vmatpush1.msra.mxu0 %v1500
    %3192 = vmatprep.subr.mxu0 0.0
    %3193 = vmatpush1.msra.mxu0 %v1509
    %3194 = vmatprep.subr.mxu0 0.0
    %3195 = vmatpush1.msra.mxu0 %v1518
    %3196 = vmatprep.mubr.f32.mxu0 %v652
    %3197 = vmatmul.mubr.f32.gmra.mrb[0].mxu0 %v651
    %v3198 = vpop.f32.mrb[0].mxu0
    %v3199 = vadd.f32 %v3129, %v3198
    %v3200 = vpop.f32.mrb[0].mxu0
    %3201 = vdwg.mxu0
    %3202 = vmatprep.subr.mxu0 0.0
    %3203 = vmatpush1.msra.mxu0 %v1527
    %3204 = vmatprep.subr.mxu0 0.0
    %3205 = vmatpush1.msra.mxu0 %v1536
    %3206 = vmatprep.subr.mxu0 0.0
    %3207 = vmatpush1.msra.mxu0 %v1545
    %3208 = vmatprep.subr.mxu0 0.0
    %3209 = vmatpush1.msra.mxu0 %v1554
    %3210 = vmatprep.subr.mxu0 0.0
    %3211 = vmatpush1.msra.mxu0 %v1563
    %3212 = vmatprep.subr.mxu0 0.0
    %3213 = vmatpush1.msra.mxu0 %v1572
    %3214 = vmatprep.subr.mxu0 0.0
    %3215 = vmatpush1.msra.mxu0 %v1581
    %3216 = vmatprep.subr.mxu0 0.0
    %3217 = vmatpush1.msra.mxu0 %v1590
    %3218 = vmatprep.subr.mxu0 0.0
    %3219 = vmatpush1.msra.mxu0 %v1599
    %3220 = vmatprep.subr.mxu0 0.0
    %3221 = vmatpush1.msra.mxu0 %v1608
    %3222 = vmatprep.subr.mxu0 0.0
    %3223 = vmatpush1.msra.mxu0 %v1617
    %3224 = vmatprep.subr.mxu0 0.0
    %3225 = vmatpush1.msra.mxu0 %v1626
    %3226 = vmatprep.subr.mxu0 0.0
    %3227 = vmatpush1.msra.mxu0 %v1635
    %3228 = vmatprep.subr.mxu0 0.0
    %3229 = vmatpush1.msra.mxu0 %v1644
    %3230 = vmatprep.subr.mxu0 0.0
    %3231 = vmatpush1.msra.mxu0 %v1653
    %3232 = vmatprep.subr.mxu0 0.0
    %3233 = vmatpush1.msra.mxu0 %v1662
    %3234 = vmatprep.subr.mxu0 0.0
    %3235 = vmatpush1.msra.mxu0 %v1671
    %3236 = vmatprep.subr.mxu0 0.0
    %3237 = vmatpush1.msra.mxu0 %v1680
    %3238 = vmatprep.subr.mxu0 0.0
    %3239 = vmatpush1.msra.mxu0 %v1689
    %3240 = vmatprep.subr.mxu0 0.0
    %3241 = vmatpush1.msra.mxu0 %v1698
    %3242 = vmatprep.subr.mxu0 0.0
    %3243 = vmatpush1.msra.mxu0 %v1707
    %3244 = vmatprep.subr.mxu0 0.0
    %3245 = vmatpush1.msra.mxu0 %v1716
    %3246 = vmatprep.subr.mxu0 0.0
    %3247 = vmatpush1.msra.mxu0 %v1725
    %3248 = vmatprep.subr.mxu0 0.0
    %3249 = vmatpush1.msra.mxu0 %v1734
    %3250 = vmatprep.subr.mxu0 0.0
    %3251 = vmatpush1.msra.mxu0 %v1743
    %3252 = vmatprep.subr.mxu0 0.0
    %3253 = vmatpush1.msra.mxu0 %v1752
    %3254 = vmatprep.subr.mxu0 0.0
    %3255 = vmatpush1.msra.mxu0 %v1761
    %3256 = vmatprep.subr.mxu0 0.0
    %3257 = vmatpush1.msra.mxu0 %v1770
    %3258 = vmatprep.subr.mxu0 0.0
    %3259 = vmatpush1.msra.mxu0 %v1779
    %3260 = vmatprep.subr.mxu0 0.0
    %3261 = vmatpush1.msra.mxu0 %v1788
    %3262 = vmatprep.subr.mxu0 0.0
    %3263 = vmatpush1.msra.mxu0 %v1797
    %3264 = vmatprep.subr.mxu0 0.0
    %3265 = vmatpush1.msra.mxu0 %v1806
    %3266 = vmatprep.mubr.f32.mxu0 %v654
    %3267 = vmatmul.mubr.f32.gmra.mrb[0].mxu0 %v653
    %v3268 = vpop.f32.mrb[0].mxu0
    %v3269 = vadd.f32 %v3199, %v3268
    %v3270 = vpop.f32.mrb[0].mxu0
    %3271 = vdwg.mxu0
    %v3272 = vmax.f32 %v2136, 0.0
    %v3273 = vmax.f32 %v2138, 0.0
    %v3274 = vmax.f32 %v2420, 0.0
    %v3275 = vmax.f32 %v2422, 0.0
    %v3276 = vmax.f32 %v2704, 0.0
    %v3277 = vmax.f32 %v2706, 0.0
    %v3278 = vmax.f32 %v2988, 0.0
    %v3279 = vmax.f32 %v2990, 0.0
    %v3280 = vmax.f32 %v3269, 0.0
    %v3281 = vld [vmem:[%s5] sm:$0xff]
    %v3282 = vld [vmem:[%s5 + $0x8] sm:$0xff]
    %v3283 = vld [vmem:[%s5 + $0x10] sm:$0xff]
    %v3284 = vld [vmem:[%s5 + $0x18] sm:$0xff]
    %v3285 = vld [vmem:[%s5 + $0x20] sm:$0xff]
    %v3286 = vld [vmem:[%s5 + $0x28] sm:$0xff]
    %v3287 = vld [vmem:[%s5 + $0x30] sm:$0xff]
    %v3288 = vld [vmem:[%s5 + $0x38] sm:$0xff]
    %v3289 = vld [vmem:[%s5 + $0x40] sm:$0xff]
    %v3290 = vld [vmem:[%s5 + $0x48] sm:$0xff]
    %v3291 = vld [vmem:[%s5 + $0x50] sm:$0xff]
    %v3292 = vld [vmem:[%s5 + $0x58] sm:$0xff]
    %v3293 = vld [vmem:[%s5 + $0x60] sm:$0xff]
    %v3294 = vld [vmem:[%s5 + $0x68] sm:$0xff]
    %v3295 = vld [vmem:[%s5 + $0x70] sm:$0xff]
    %v3296 = vld [vmem:[%s5 + $0x78] sm:$0xff]
    %v3297 = vld [vmem:[%s5 + $0x80] sm:$0xff]
    %v3298 = vld [vmem:[%s5 + $0x88] sm:$0xff]
    %v3299 = vld [vmem:[%s5 + $0x90] sm:$0xff]
    %v3300 = vld [vmem:[%s5 + $0x98] sm:$0xff]
    %v3301 = vld [vmem:[%s5 + $0xa0] sm:$0xff]
    %v3302 = vld [vmem:[%s5 + $0xa8] sm:$0xff]
    %v3303 = vld [vmem:[%s5 + $0xb0] sm:$0xff]
    %v3304 = vld [vmem:[%s5 + $0xb8] sm:$0xff]
    %v3305 = vld [vmem:[%s5 + $0xc0] sm:$0xff]
    %v3306 = vld [vmem:[%s5 + $0xc8] sm:$0xff]
    %v3307 = vld [vmem:[%s5 + $0xd0] sm:$0xff]
    %v3308 = vld [vmem:[%s5 + $0xd8] sm:$0xff]
    %v3309 = vld [vmem:[%s5 + $0xe0] sm:$0xff]
    %v3310 = vld [vmem:[%s5 + $0xe8] sm:$0xff]
    %v3311 = vld [vmem:[%s5 + $0xf0] sm:$0xff]
    %v3312 = vld [vmem:[%s5 + $0xf8] sm:$0xff]
    %v3313 = vld [vmem:[%s5 + $0x100] sm:$0xff]
    %v3314 = vld [vmem:[%s5 + $0x108] sm:$0xff]
    %v3315 = vld [vmem:[%s5 + $0x110] sm:$0xff]
    %v3316 = vld [vmem:[%s5 + $0x118] sm:$0xff]
    %v3317 = vld [vmem:[%s5 + $0x120] sm:$0xff]
    %v3318 = vld [vmem:[%s5 + $0x128] sm:$0xff]
    %v3319 = vld [vmem:[%s5 + $0x130] sm:$0xff]
    %v3320 = vld [vmem:[%s5 + $0x138] sm:$0xff]
    %v3321 = vld [vmem:[%s5 + $0x140] sm:$0xff]
    %v3322 = vld [vmem:[%s5 + $0x148] sm:$0xff]
    %v3323 = vld [vmem:[%s5 + $0x150] sm:$0xff]
    %v3324 = vld [vmem:[%s5 + $0x158] sm:$0xff]
    %v3325 = vld [vmem:[%s5 + $0x160] sm:$0xff]
    %v3326 = vld [vmem:[%s5 + $0x168] sm:$0xff]
    %v3327 = vld [vmem:[%s5 + $0x170] sm:$0xff]
    %v3328 = vld [vmem:[%s5 + $0x178] sm:$0xff]
    %v3329 = vld [vmem:[%s5 + $0x180] sm:$0xff]
    %v3330 = vld [vmem:[%s5 + $0x188] sm:$0xff]
    %v3331 = vld [vmem:[%s5 + $0x190] sm:$0xff]
    %v3332 = vld [vmem:[%s5 + $0x198] sm:$0xff]
    %v3333 = vld [vmem:[%s5 + $0x1a0] sm:$0xff]
    %v3334 = vld [vmem:[%s5 + $0x1a8] sm:$0xff]
    %v3335 = vld [vmem:[%s5 + $0x1b0] sm:$0xff]
    %v3336 = vld [vmem:[%s5 + $0x1b8] sm:$0xff]
    %v3337 = vld [vmem:[%s5 + $0x1c0] sm:$0xff]
    %v3338 = vld [vmem:[%s5 + $0x1c8] sm:$0xff]
    %v3339 = vld [vmem:[%s5 + $0x1d0] sm:$0xff]
    %v3340 = vld [vmem:[%s5 + $0x1d8] sm:$0xff]
    %v3341 = vld [vmem:[%s5 + $0x1e0] sm:$0xff]
    %v3342 = vld [vmem:[%s5 + $0x1e8] sm:$0xff]
    %v3343 = vld [vmem:[%s5 + $0x1f0] sm:$0xff]
    %v3344 = vld [vmem:[%s5 + $0x1f8] sm:$0xff]
    %v3345 = vld [vmem:[%s5 + $0x200] sm:$0xff]
    %v3346 = vld [vmem:[%s5 + $0x208] sm:$0xff]
    %v3347 = vld [vmem:[%s5 + $0x210] sm:$0xff]
    %v3348 = vld [vmem:[%s5 + $0x218] sm:$0xff]
    %v3349 = vld [vmem:[%s5 + $0x220] sm:$0xff]
    %v3350 = vld [vmem:[%s5 + $0x228] sm:$0xff]
    %v3351 = vld [vmem:[%s5 + $0x230] sm:$0xff]
    %v3352 = vld [vmem:[%s5 + $0x238] sm:$0xff]
    %v3353 = vld [vmem:[%s5 + $0x240] sm:$0xff]
    %v3354 = vld [vmem:[%s5 + $0x248] sm:$0xff]
    %v3355 = vld [vmem:[%s5 + $0x250] sm:$0xff]
    %v3356 = vld [vmem:[%s5 + $0x258] sm:$0xff]
    %v3357 = vld [vmem:[%s5 + $0x260] sm:$0xff]
    %v3358 = vld [vmem:[%s5 + $0x268] sm:$0xff]
    %v3359 = vld [vmem:[%s5 + $0x270] sm:$0xff]
    %v3360 = vld [vmem:[%s5 + $0x278] sm:$0xff]
    %v3361 = vld [vmem:[%s5 + $0x280] sm:$0xff]
    %v3362 = vld [vmem:[%s5 + $0x288] sm:$0xff]
    %v3363 = vld [vmem:[%s5 + $0x290] sm:$0xff]
    %v3364 = vld [vmem:[%s5 + $0x298] sm:$0xff]
    %v3365 = vld [vmem:[%s5 + $0x2a0] sm:$0xff]
    %v3366 = vld [vmem:[%s5 + $0x2a8] sm:$0xff]
    %v3367 = vld [vmem:[%s5 + $0x2b0] sm:$0xff]
    %v3368 = vld [vmem:[%s5 + $0x2b8] sm:$0xff]
    %v3369 = vld [vmem:[%s5 + $0x2c0] sm:$0xff]
    %v3370 = vld [vmem:[%s5 + $0x2c8] sm:$0xff]
    %v3371 = vld [vmem:[%s5 + $0x2d0] sm:$0xff]
    %v3372 = vld [vmem:[%s5 + $0x2d8] sm:$0xff]
    %v3373 = vld [vmem:[%s5 + $0x2e0] sm:$0xff]
    %v3374 = vld [vmem:[%s5 + $0x2e8] sm:$0xff]
    %v3375 = vld [vmem:[%s5 + $0x2f0] sm:$0xff]
    %v3376 = vld [vmem:[%s5 + $0x2f8] sm:$0xff]
    %v3377 = vld [vmem:[%s5 + $0x300] sm:$0xff]
    %v3378 = vld [vmem:[%s5 + $0x308] sm:$0xff]
    %v3379 = vld [vmem:[%s5 + $0x310] sm:$0xff]
    %v3380 = vld [vmem:[%s5 + $0x318] sm:$0xff]
    %v3381 = vld [vmem:[%s5 + $0x320] sm:$0xff]
    %v3382 = vld [vmem:[%s5 + $0x328] sm:$0xff]
    %v3383 = vld [vmem:[%s5 + $0x330] sm:$0xff]
    %v3384 = vld [vmem:[%s5 + $0x338] sm:$0xff]
    %v3385 = vld [vmem:[%s5 + $0x340] sm:$0xff]
    %v3386 = vld [vmem:[%s5 + $0x348] sm:$0xff]
    %v3387 = vld [vmem:[%s5 + $0x350] sm:$0xff]
    %v3388 = vld [vmem:[%s5 + $0x358] sm:$0xff]
    %v3389 = vld [vmem:[%s5 + $0x360] sm:$0xff]
    %v3390 = vld [vmem:[%s5 + $0x368] sm:$0xff]
    %v3391 = vld [vmem:[%s5 + $0x370] sm:$0xff]
    %v3392 = vld [vmem:[%s5 + $0x378] sm:$0xff]
    %v3393 = vld [vmem:[%s5 + $0x380] sm:$0xff]
    %v3394 = vld [vmem:[%s5 + $0x388] sm:$0xff]
    %v3395 = vld [vmem:[%s5 + $0x390] sm:$0xff]
    %v3396 = vld [vmem:[%s5 + $0x398] sm:$0xff]
    %v3397 = vld [vmem:[%s5 + $0x3a0] sm:$0xff]
    %v3398 = vld [vmem:[%s5 + $0x3a8] sm:$0xff]
    %v3399 = vld [vmem:[%s5 + $0x3b0] sm:$0xff]
    %v3400 = vld [vmem:[%s5 + $0x3b8] sm:$0xff]
    %v3401 = vld [vmem:[%s5 + $0x3c0] sm:$0xff]
    %v3402 = vld [vmem:[%s5 + $0x3c8] sm:$0xff]
    %v3403 = vld [vmem:[%s5 + $0x3d0] sm:$0xff]
    %v3404 = vld [vmem:[%s5 + $0x3d8] sm:$0xff]
    %v3405 = vld [vmem:[%s5 + $0x3e0] sm:$0xff]
    %v3406 = vld [vmem:[%s5 + $0x3e8] sm:$0xff]
    %v3407 = vld [vmem:[%s5 + $0x3f0] sm:$0xff]
    %v3408 = vld [vmem:[%s5 + $0x3f8] sm:$0xff]
    %v3409 = vld [vmem:[%s5 + $0x400] sm:$0xff]
    %v3410 = vld [vmem:[%s5 + $0x408] sm:$0xff]
    %v3411 = vld [vmem:[%s5 + $0x410] sm:$0xff]
    %v3412 = vld [vmem:[%s5 + $0x418] sm:$0xff]
    %v3413 = vld [vmem:[%s5 + $0x420] sm:$0xff]
    %v3414 = vld [vmem:[%s5 + $0x428] sm:$0xff]
    %v3415 = vld [vmem:[%s5 + $0x430] sm:$0xff]
    %v3416 = vld [vmem:[%s5 + $0x438] sm:$0xff]
    %v3417 = vld [vmem:[%s5 + $0x440] sm:$0xff]
    %v3418 = vld [vmem:[%s5 + $0x448] sm:$0xff]
    %v3419 = vld [vmem:[%s5 + $0x450] sm:$0xff]
    %v3420 = vld [vmem:[%s5 + $0x458] sm:$0xff]
    %v3421 = vld [vmem:[%s5 + $0x460] sm:$0xff]
    %v3422 = vld [vmem:[%s5 + $0x468] sm:$0xff]
    %v3423 = vld [vmem:[%s5 + $0x470] sm:$0xff]
    %v3424 = vld [vmem:[%s5 + $0x478] sm:$0xff]
    %v3425 = vld [vmem:[#allocation10] sm:$0x1]
    %v3427 = vlaneseq
    %v3428 = vshrl.u32 %v3427, 7
    %v3429 = vsub.s32 0, %v3428
    %v3430 = vrot.slane %v3425, %v3429
    %3432 = vmatprep.subr.mxu0 0.0
    %3433 = vmatpush1.msra.mxu0 %v3281
    %3434 = vmatprep.subr.mxu0 0.0
    %3435 = vmatpush1.msra.mxu0 %v3282
    %3436 = vmatprep.subr.mxu0 0.0
    %3437 = vmatpush1.msra.mxu0 %v3283
    %3438 = vmatprep.subr.mxu0 0.0
    %3439 = vmatpush1.msra.mxu0 %v3284
    %3440 = vmatprep.subr.mxu0 0.0
    %3441 = vmatpush1.msra.mxu0 %v3285
    %3442 = vmatprep.subr.mxu0 0.0
    %3443 = vmatpush1.msra.mxu0 %v3286
    %3444 = vmatprep.subr.mxu0 0.0
    %3445 = vmatpush1.msra.mxu0 %v3287
    %3446 = vmatprep.subr.mxu0 0.0
    %3447 = vmatpush1.msra.mxu0 %v3288
    %3448 = vmatprep.subr.mxu0 0.0
    %3449 = vmatpush1.msra.mxu0 %v3289
    %3450 = vmatprep.subr.mxu0 0.0
    %3451 = vmatpush1.msra.mxu0 %v3290
    %3452 = vmatprep.subr.mxu0 0.0
    %3453 = vmatpush1.msra.mxu0 %v3291
    %3454 = vmatprep.subr.mxu0 0.0
    %3455 = vmatpush1.msra.mxu0 %v3292
    %3456 = vmatprep.subr.mxu0 0.0
    %3457 = vmatpush1.msra.mxu0 %v3293
    %3458 = vmatprep.subr.mxu0 0.0
    %3459 = vmatpush1.msra.mxu0 %v3294
    %3460 = vmatprep.subr.mxu0 0.0
    %3461 = vmatpush1.msra.mxu0 %v3295
    %3462 = vmatprep.subr.mxu0 0.0
    %3463 = vmatpush1.msra.mxu0 %v3296
    %3464 = vmatprep.subr.mxu0 0.0
    %3465 = vmatpush1.msra.mxu0 %v3297
    %3466 = vmatprep.subr.mxu0 0.0
    %3467 = vmatpush1.msra.mxu0 %v3298
    %3468 = vmatprep.subr.mxu0 0.0
    %3469 = vmatpush1.msra.mxu0 %v3299
    %3470 = vmatprep.subr.mxu0 0.0
    %3471 = vmatpush1.msra.mxu0 %v3300
    %3472 = vmatprep.subr.mxu0 0.0
    %3473 = vmatpush1.msra.mxu0 %v3301
    %3474 = vmatprep.subr.mxu0 0.0
    %3475 = vmatpush1.msra.mxu0 %v3302
    %3476 = vmatprep.subr.mxu0 0.0
    %3477 = vmatpush1.msra.mxu0 %v3303
    %3478 = vmatprep.subr.mxu0 0.0
    %3479 = vmatpush1.msra.mxu0 %v3304
    %3480 = vmatprep.subr.mxu0 0.0
    %3481 = vmatpush1.msra.mxu0 %v3305
    %3482 = vmatprep.subr.mxu0 0.0
    %3483 = vmatpush1.msra.mxu0 %v3306
    %3484 = vmatprep.subr.mxu0 0.0
    %3485 = vmatpush1.msra.mxu0 %v3307
    %3486 = vmatprep.subr.mxu0 0.0
    %3487 = vmatpush1.msra.mxu0 %v3308
    %3488 = vmatprep.subr.mxu0 0.0
    %3489 = vmatpush1.msra.mxu0 %v3309
    %3490 = vmatprep.subr.mxu0 0.0
    %3491 = vmatpush1.msra.mxu0 %v3310
    %3492 = vmatprep.subr.mxu0 0.0
    %3493 = vmatpush1.msra.mxu0 %v3311
    %3494 = vmatprep.subr.mxu0 0.0
    %3495 = vmatpush1.msra.mxu0 %v3312
    %3496 = vmatprep.mubr.f32.mxu0 %v3273
    %3497 = vmatmul.mubr.f32.gmra.mrb[0].mxu0 %v3272
    %v3498 = vpop.f32.mrb[0].mxu0
    %v3499 = vadd.f32 %v3430, %v3498
    %v3500 = vpop.f32.mrb[0].mxu0
    %3501 = vdwg.mxu0
    %3502 = vmatprep.subr.mxu0 0.0
    %3503 = vmatpush1.msra.mxu0 %v3313
    %3504 = vmatprep.subr.mxu0 0.0
    %3505 = vmatpush1.msra.mxu0 %v3314
    %3506 = vmatprep.subr.mxu0 0.0
    %3507 = vmatpush1.msra.mxu0 %v3315
    %3508 = vmatprep.subr.mxu0 0.0
    %3509 = vmatpush1.msra.mxu0 %v3316
    %3510 = vmatprep.subr.mxu0 0.0
    %3511 = vmatpush1.msra.mxu0 %v3317
    %3512 = vmatprep.subr.mxu0 0.0
    %3513 = vmatpush1.msra.mxu0 %v3318
    %3514 = vmatprep.subr.mxu0 0.0
    %3515 = vmatpush1.msra.mxu0 %v3319
    %3516 = vmatprep.subr.mxu0 0.0
    %3517 = vmatpush1.msra.mxu0 %v3320
    %3518 = vmatprep.subr.mxu0 0.0
    %3519 = vmatpush1.msra.mxu0 %v3321
    %3520 = vmatprep.subr.mxu0 0.0
    %3521 = vmatpush1.msra.mxu0 %v3322
    %3522 = vmatprep.subr.mxu0 0.0
    %3523 = vmatpush1.msra.mxu0 %v3323
    %3524 = vmatprep.subr.mxu0 0.0
    %3525 = vmatpush1.msra.mxu0 %v3324
    %3526 = vmatprep.subr.mxu0 0.0
    %3527 = vmatpush1.msra.mxu0 %v3325
    %3528 = vmatprep.subr.mxu0 0.0
    %3529 = vmatpush1.msra.mxu0 %v3326
    %3530 = vmatprep.subr.mxu0 0.0
    %3531 = vmatpush1.msra.mxu0 %v3327
    %3532 = vmatprep.subr.mxu0 0.0
    %3533 = vmatpush1.msra.mxu0 %v3328
    %3534 = vmatprep.subr.mxu0 0.0
    %3535 = vmatpush1.msra.mxu0 %v3329
    %3536 = vmatprep.subr.mxu0 0.0
    %3537 = vmatpush1.msra.mxu0 %v3330
    %3538 = vmatprep.subr.mxu0 0.0
    %3539 = vmatpush1.msra.mxu0 %v3331
    %3540 = vmatprep.subr.mxu0 0.0
    %3541 = vmatpush1.msra.mxu0 %v3332
    %3542 = vmatprep.subr.mxu0 0.0
    %3543 = vmatpush1.msra.mxu0 %v3333
    %3544 = vmatprep.subr.mxu0 0.0
    %3545 = vmatpush1.msra.mxu0 %v3334
    %3546 = vmatprep.subr.mxu0 0.0
    %3547 = vmatpush1.msra.mxu0 %v3335
    %3548 = vmatprep.subr.mxu0 0.0
    %3549 = vmatpush1.msra.mxu0 %v3336
    %3550 = vmatprep.subr.mxu0 0.0
    %3551 = vmatpush1.msra.mxu0 %v3337
    %3552 = vmatprep.subr.mxu0 0.0
    %3553 = vmatpush1.msra.mxu0 %v3338
    %3554 = vmatprep.subr.mxu0 0.0
    %3555 = vmatpush1.msra.mxu0 %v3339
    %3556 = vmatprep.subr.mxu0 0.0
    %3557 = vmatpush1.msra.mxu0 %v3340
    %3558 = vmatprep.subr.mxu0 0.0
    %3559 = vmatpush1.msra.mxu0 %v3341
    %3560 = vmatprep.subr.mxu0 0.0
    %3561 = vmatpush1.msra.mxu0 %v3342
    %3562 = vmatprep.subr.mxu0 0.0
    %3563 = vmatpush1.msra.mxu0 %v3343
    %3564 = vmatprep.subr.mxu0 0.0
    %3565 = vmatpush1.msra.mxu0 %v3344
    %3566 = vmatprep.mubr.f32.mxu0 %v3275
    %3567 = vmatmul.mubr.f32.gmra.mrb[0].mxu0 %v3274
    %v3568 = vpop.f32.mrb[0].mxu0
    %v3569 = vadd.f32 %v3499, %v3568
    %v3570 = vpop.f32.mrb[0].mxu0
    %3571 = vdwg.mxu0
    %3572 = vmatprep.subr.mxu0 0.0
    %3573 = vmatpush1.msra.mxu0 %v3345
    %3574 = vmatprep.subr.mxu0 0.0
    %3575 = vmatpush1.msra.mxu0 %v3346
    %3576 = vmatprep.subr.mxu0 0.0
    %3577 = vmatpush1.msra.mxu0 %v3347
    %3578 = vmatprep.subr.mxu0 0.0
    %3579 = vmatpush1.msra.mxu0 %v3348
    %3580 = vmatprep.subr.mxu0 0.0
    %3581 = vmatpush1.msra.mxu0 %v3349
    %3582 = vmatprep.subr.mxu0 0.0
    %3583 = vmatpush1.msra.mxu0 %v3350
    %3584 = vmatprep.subr.mxu0 0.0
    %3585 = vmatpush1.msra.mxu0 %v3351
    %3586 = vmatprep.subr.mxu0 0.0
    %3587 = vmatpush1.msra.mxu0 %v3352
    %3588 = vmatprep.subr.mxu0 0.0
    %3589 = vmatpush1.msra.mxu0 %v3353
    %3590 = vmatprep.subr.mxu0 0.0
    %3591 = vmatpush1.msra.mxu0 %v3354
    %3592 = vmatprep.subr.mxu0 0.0
    %3593 = vmatpush1.msra.mxu0 %v3355
    %3594 = vmatprep.subr.mxu0 0.0
    %3595 = vmatpush1.msra.mxu0 %v3356
    %3596 = vmatprep.subr.mxu0 0.0
    %3597 = vmatpush1.msra.mxu0 %v3357
    %3598 = vmatprep.subr.mxu0 0.0
    %3599 = vmatpush1.msra.mxu0 %v3358
    %3600 = vmatprep.subr.mxu0 0.0
    %3601 = vmatpush1.msra.mxu0 %v3359
    %3602 = vmatprep.subr.mxu0 0.0
    %3603 = vmatpush1.msra.mxu0 %v3360
    %3604 = vmatprep.subr.mxu0 0.0
    %3605 = vmatpush1.msra.mxu0 %v3361
    %3606 = vmatprep.subr.mxu0 0.0
    %3607 = vmatpush1.msra.mxu0 %v3362
    %3608 = vmatprep.subr.mxu0 0.0
    %3609 = vmatpush1.msra.mxu0 %v3363
    %3610 = vmatprep.subr.mxu0 0.0
    %3611 = vmatpush1.msra.mxu0 %v3364
    %3612 = vmatprep.subr.mxu0 0.0
    %3613 = vmatpush1.msra.mxu0 %v3365
    %3614 = vmatprep.subr.mxu0 0.0
    %3615 = vmatpush1.msra.mxu0 %v3366
    %3616 = vmatprep.subr.mxu0 0.0
    %3617 = vmatpush1.msra.mxu0 %v3367
    %3618 = vmatprep.subr.mxu0 0.0
    %3619 = vmatpush1.msra.mxu0 %v3368
    %3620 = vmatprep.subr.mxu0 0.0
    %3621 = vmatpush1.msra.mxu0 %v3369
    %3622 = vmatprep.subr.mxu0 0.0
    %3623 = vmatpush1.msra.mxu0 %v3370
    %3624 = vmatprep.subr.mxu0 0.0
    %3625 = vmatpush1.msra.mxu0 %v3371
    %3626 = vmatprep.subr.mxu0 0.0
    %3627 = vmatpush1.msra.mxu0 %v3372
    %3628 = vmatprep.subr.mxu0 0.0
    %3629 = vmatpush1.msra.mxu0 %v3373
    %3630 = vmatprep.subr.mxu0 0.0
    %3631 = vmatpush1.msra.mxu0 %v3374
    %3632 = vmatprep.subr.mxu0 0.0
    %3633 = vmatpush1.msra.mxu0 %v3375
    %3634 = vmatprep.subr.mxu0 0.0
    %3635 = vmatpush1.msra.mxu0 %v3376
    %3636 = vmatprep.mubr.f32.mxu0 %v3277
    %3637 = vmatmul.mubr.f32.gmra.mrb[0].mxu0 %v3276
    %v3638 = vpop.f32.mrb[0].mxu0
    %v3639 = vadd.f32 %v3569, %v3638
    %v3640 = vpop.f32.mrb[0].mxu0
    %3641 = vdwg.mxu0
    %3642 = vmatprep.subr.mxu0 0.0
    %3643 = vmatpush1.msra.mxu0 %v3377
    %3644 = vmatprep.subr.mxu0 0.0
    %3645 = vmatpush1.msra.mxu0 %v3378
    %3646 = vmatprep.subr.mxu0 0.0
    %3647 = vmatpush1.msra.mxu0 %v3379
    %3648 = vmatprep.subr.mxu0 0.0
    %3649 = vmatpush1.msra.mxu0 %v3380
    %3650 = vmatprep.subr.mxu0 0.0
    %3651 = vmatpush1.msra.mxu0 %v3381
    %3652 = vmatprep.subr.mxu0 0.0
    %3653 = vmatpush1.msra.mxu0 %v3382
    %3654 = vmatprep.subr.mxu0 0.0
    %3655 = vmatpush1.msra.mxu0 %v3383
    %3656 = vmatprep.subr.mxu0 0.0
    %3657 = vmatpush1.msra.mxu0 %v3384
    %3658 = vmatprep.subr.mxu0 0.0
    %3659 = vmatpush1.msra.mxu0 %v3385
    %3660 = vmatprep.subr.mxu0 0.0
    %3661 = vmatpush1.msra.mxu0 %v3386
    %3662 = vmatprep.subr.mxu0 0.0
    %3663 = vmatpush1.msra.mxu0 %v3387
    %3664 = vmatprep.subr.mxu0 0.0
    %3665 = vmatpush1.msra.mxu0 %v3388
    %3666 = vmatprep.subr.mxu0 0.0
    %3667 = vmatpush1.msra.mxu0 %v3389
    %3668 = vmatprep.subr.mxu0 0.0
    %3669 = vmatpush1.msra.mxu0 %v3390
    %3670 = vmatprep.subr.mxu0 0.0
    %3671 = vmatpush1.msra.mxu0 %v3391
    %3672 = vmatprep.subr.mxu0 0.0
    %3673 = vmatpush1.msra.mxu0 %v3392
    %3674 = vmatprep.subr.mxu0 0.0
    %3675 = vmatpush1.msra.mxu0 %v3393
    %3676 = vmatprep.subr.mxu0 0.0
    %3677 = vmatpush1.msra.mxu0 %v3394
    %3678 = vmatprep.subr.mxu0 0.0
    %3679 = vmatpush1.msra.mxu0 %v3395
    %3680 = vmatprep.subr.mxu0 0.0
    %3681 = vmatpush1.msra.mxu0 %v3396
    %3682 = vmatprep.subr.mxu0 0.0
    %3683 = vmatpush1.msra.mxu0 %v3397
    %3684 = vmatprep.subr.mxu0 0.0
    %3685 = vmatpush1.msra.mxu0 %v3398
    %3686 = vmatprep.subr.mxu0 0.0
    %3687 = vmatpush1.msra.mxu0 %v3399
    %3688 = vmatprep.subr.mxu0 0.0
    %3689 = vmatpush1.msra.mxu0 %v3400
    %3690 = vmatprep.subr.mxu0 0.0
    %3691 = vmatpush1.msra.mxu0 %v3401
    %3692 = vmatprep.subr.mxu0 0.0
    %3693 = vmatpush1.msra.mxu0 %v3402
    %3694 = vmatprep.subr.mxu0 0.0
    %3695 = vmatpush1.msra.mxu0 %v3403
    %3696 = vmatprep.subr.mxu0 0.0
    %3697 = vmatpush1.msra.mxu0 %v3404
    %3698 = vmatprep.subr.mxu0 0.0
    %3699 = vmatpush1.msra.mxu0 %v3405
    %3700 = vmatprep.subr.mxu0 0.0
    %3701 = vmatpush1.msra.mxu0 %v3406
    %3702 = vmatprep.subr.mxu0 0.0
    %3703 = vmatpush1.msra.mxu0 %v3407
    %3704 = vmatprep.subr.mxu0 0.0
    %3705 = vmatpush1.msra.mxu0 %v3408
    %3706 = vmatprep.mubr.f32.mxu0 %v3279
    %3707 = vmatmul.mubr.f32.gmra.mrb[0].mxu0 %v3278
    %v3708 = vpop.f32.mrb[0].mxu0
    %v3709 = vadd.f32 %v3639, %v3708
    %v3710 = vpop.f32.mrb[0].mxu0
    %3711 = vdwg.mxu0
    %3712 = vmatprep.subr.mxu0 0.0
    %3713 = vmatpush1.msra.mxu0 %v3409
    %3714 = vmatprep.subr.mxu0 0.0
    %3715 = vmatpush1.msra.mxu0 %v3410
    %3716 = vmatprep.subr.mxu0 0.0
    %3717 = vmatpush1.msra.mxu0 %v3411
    %3718 = vmatprep.subr.mxu0 0.0
    %3719 = vmatpush1.msra.mxu0 %v3412
    %3720 = vmatprep.subr.mxu0 0.0
    %3721 = vmatpush1.msra.mxu0 %v3413
    %3722 = vmatprep.subr.mxu0 0.0
    %3723 = vmatpush1.msra.mxu0 %v3414
    %3724 = vmatprep.subr.mxu0 0.0
    %3725 = vmatpush1.msra.mxu0 %v3415
    %3726 = vmatprep.subr.mxu0 0.0
    %3727 = vmatpush1.msra.mxu0 %v3416
    %3728 = vmatprep.subr.mxu0 0.0
    %3729 = vmatpush1.msra.mxu0 %v3417
    %3730 = vmatprep.subr.mxu0 0.0
    %3731 = vmatpush1.msra.mxu0 %v3418
    %3732 = vmatprep.subr.mxu0 0.0
    %3733 = vmatpush1.msra.mxu0 %v3419
    %3734 = vmatprep.subr.mxu0 0.0
    %3735 = vmatpush1.msra.mxu0 %v3420
    %3736 = vmatprep.subr.mxu0 0.0
    %3737 = vmatpush1.msra.mxu0 %v3421
    %3738 = vmatprep.subr.mxu0 0.0
    %3739 = vmatpush1.msra.mxu0 %v3422
    %3740 = vmatprep.subr.mxu0 0.0
    %3741 = vmatpush1.msra.mxu0 %v3423
    %3742 = vmatprep.subr.mxu0 0.0
    %3743 = vmatpush1.msra.mxu0 %v3424
    %3744 = vmatprep.subr.mxu0 0.0
    %3745 = vmatpush1.msra.mxu0 0.0
    %3746 = vmatprep.subr.mxu0 0.0
    %3747 = vmatpush1.msra.mxu0 0.0
    %3748 = vmatprep.subr.mxu0 0.0
    %3749 = vmatpush1.msra.mxu0 0.0
    %3750 = vmatprep.subr.mxu0 0.0
    %3751 = vmatpush1.msra.mxu0 0.0
    %3752 = vmatprep.subr.mxu0 0.0
    %3753 = vmatpush1.msra.mxu0 0.0
    %3754 = vmatprep.subr.mxu0 0.0
    %3755 = vmatpush1.msra.mxu0 0.0
    %3756 = vmatprep.subr.mxu0 0.0
    %3757 = vmatpush1.msra.mxu0 0.0
    %3758 = vmatprep.subr.mxu0 0.0
    %3759 = vmatpush1.msra.mxu0 0.0
    %3760 = vmatprep.subr.mxu0 0.0
    %3761 = vmatpush1.msra.mxu0 0.0
    %3762 = vmatprep.subr.mxu0 0.0
    %3763 = vmatpush1.msra.mxu0 0.0
    %3764 = vmatprep.subr.mxu0 0.0
    %3765 = vmatpush1.msra.mxu0 0.0
    %3766 = vmatprep.subr.mxu0 0.0
    %3767 = vmatpush1.msra.mxu0 0.0
    %3768 = vmatprep.subr.mxu0 0.0
    %3769 = vmatpush1.msra.mxu0 0.0
    %3770 = vmatprep.subr.mxu0 0.0
    %3771 = vmatpush1.msra.mxu0 0.0
    %3772 = vmatprep.subr.mxu0 0.0
    %3773 = vmatpush1.msra.mxu0 0.0
    %3774 = vmatprep.subr.mxu0 0.0
    %3775 = vmatpush1.msra.mxu0 0.0
    %3776 = vmatprep.mubr.f32.mxu0 0.0
    %3777 = vmatmul.mubr.f32.gmra.mrb[0].mxu0 %v3280
    %v3778 = vpop.f32.mrb[0].mxu0
    %v3779 = vadd.f32 %v3709, %v3778
    %v3780 = vpop.f32.mrb[0].mxu0
    %3781 = vdwg.mxu0
    %v3782 = vmax.f32 %v3779, 0.0
    %v3783 = vld [vmem:[%s7] sm:$0xff]
    %v3784 = vld [vmem:[%s7 + $0x8] sm:$0xff]
    %v3785 = vld [vmem:[%s7 + $0x10] sm:$0xff]
    %v3786 = vld [vmem:[%s7 + $0x18] sm:$0xff]
    %v3787 = vld [vmem:[%s7 + $0x20] sm:$0xff]
    %v3788 = vld [vmem:[%s7 + $0x28] sm:$0xff]
    %v3789 = vld [vmem:[%s7 + $0x30] sm:$0xff]
    %v3790 = vld [vmem:[%s7 + $0x38] sm:$0xff]
    %v3791 = vld [vmem:[#allocation11] sm:$0x1]
    %v3793 = vlaneseq
    %v3794 = vshrl.u32 %v3793, 7
    %v3795 = vsub.s32 0, %v3794
    %v3796 = vrot.slane %v3791, %v3795
    %vm3798 = vcmask 523264
    %v3800 = vsel %vm3798, %v3782, 0
    %3802 = vmatprep.subr.mxu0 0.0
    %3803 = vmatpush1.msra.mxu0 %v3783
    %3804 = vmatprep.subr.mxu0 0.0
    %3805 = vmatpush1.msra.mxu0 %v3784
    %3806 = vmatprep.subr.mxu0 0.0
    %3807 = vmatpush1.msra.mxu0 %v3785
    %3808 = vmatprep.subr.mxu0 0.0
    %3809 = vmatpush1.msra.mxu0 %v3786
    %3810 = vmatprep.subr.mxu0 0.0
    %3811 = vmatpush1.msra.mxu0 %v3787
    %3812 = vmatprep.subr.mxu0 0.0
    %3813 = vmatpush1.msra.mxu0 %v3788
    %3814 = vmatprep.subr.mxu0 0.0
    %3815 = vmatpush1.msra.mxu0 %v3789
    %3816 = vmatprep.subr.mxu0 0.0
    %3817 = vmatpush1.msra.mxu0 %v3790
    %3818 = vmatprep.subr.mxu0 0.0
    %3819 = vmatpush1.msra.mxu0 0.0
    %3820 = vmatprep.subr.mxu0 0.0
    %3821 = vmatpush1.msra.mxu0 0.0
    %3822 = vmatprep.subr.mxu0 0.0
    %3823 = vmatpush1.msra.mxu0 0.0
    %3824 = vmatprep.subr.mxu0 0.0
    %3825 = vmatpush1.msra.mxu0 0.0
    %3826 = vmatprep.subr.mxu0 0.0
    %3827 = vmatpush1.msra.mxu0 0.0
    %3828 = vmatprep.subr.mxu0 0.0
    %3829 = vmatpush1.msra.mxu0 0.0
    %3830 = vmatprep.subr.mxu0 0.0
    %3831 = vmatpush1.msra.mxu0 0.0
    %3832 = vmatprep.subr.mxu0 0.0
    %3833 = vmatpush1.msra.mxu0 0.0
    %3834 = vmatprep.subr.mxu0 0.0
    %3835 = vmatpush1.msra.mxu0 0.0
    %3836 = vmatprep.subr.mxu0 0.0
    %3837 = vmatpush1.msra.mxu0 0.0
    %3838 = vmatprep.subr.mxu0 0.0
    %3839 = vmatpush1.msra.mxu0 0.0
    %3840 = vmatprep.subr.mxu0 0.0
    %3841 = vmatpush1.msra.mxu0 0.0
    %3842 = vmatprep.subr.mxu0 0.0
    %3843 = vmatpush1.msra.mxu0 0.0
    %3844 = vmatprep.subr.mxu0 0.0
    %3845 = vmatpush1.msra.mxu0 0.0
    %3846 = vmatprep.subr.mxu0 0.0
    %3847 = vmatpush1.msra.mxu0 0.0
    %3848 = vmatprep.subr.mxu0 0.0
    %3849 = vmatpush1.msra.mxu0 0.0
    %3850 = vmatprep.subr.mxu0 0.0
    %3851 = vmatpush1.msra.mxu0 0.0
    %3852 = vmatprep.subr.mxu0 0.0
    %3853 = vmatpush1.msra.mxu0 0.0
    %3854 = vmatprep.subr.mxu0 0.0
    %3855 = vmatpush1.msra.mxu0 0.0
    %3856 = vmatprep.subr.mxu0 0.0
    %3857 = vmatpush1.msra.mxu0 0.0
    %3858 = vmatprep.subr.mxu0 0.0
    %3859 = vmatpush1.msra.mxu0 0.0
    %3860 = vmatprep.subr.mxu0 0.0
    %3861 = vmatpush1.msra.mxu0 0.0
    %3862 = vmatprep.subr.mxu0 0.0
    %3863 = vmatpush1.msra.mxu0 0.0
    %3864 = vmatprep.subr.mxu0 0.0
    %3865 = vmatpush1.msra.mxu0 0.0
    %3866 = vmatprep.mubr.f32.mxu0 0.0
    %3867 = vmatmul.mubr.f32.gmra.mrb[0].mxu0 %v3800
    %v3868 = vpop.f32.mrb[0].mxu0
    %v3869 = vadd.f32 %v3796, %v3868
    %v3870 = vpop.f32.mrb[0].mxu0
    %3871 = vdwg.mxu0
    %vm3872 = vcmask 25600
    %3873 = vst.msk [vmem:[#allocation13] sm:$0x3] %vm3872, %v3869
    // Predicated region
    $region62: #{dqn_forward.1} parent=1 // pred_check
      _
    $region63: #{dqn_forward.1} parent=1 // pred_check_branch
      %3875 = sbr.rel (0) target = $region65
    $region64: #{dqn_forward.1} parent=1 // pred_region
      %s3877 = ssub.s32 32, 32
      %3878 = vsyncadd [#allocation4], %s3877
      %s3880 = sshll.u32 [#allocation13], 4
      %s3881 = int_to_ptr.vmem [resolvable:$true] %s3880
      %3883 = dma.vmem_to_hbm [thread:$0]  %s3881, 32, %s9, [#allocation4]
    $region65: #{dqn_forward.1} parent=1 // pred_fallthru
      _
    // Predicated region
    $region66: #{dqn_forward.1} parent=1 // pred_check
      _
    $region67: #{dqn_forward.1} parent=1 // pred_check_branch
      %3885 = sbr.rel (0) target = $region69
    $region68: #{dqn_forward.1} parent=1 // pred_region
      %3886 = dma.done [#allocation4], 32
    $region69: #{dqn_forward.1} parent=1 // pred_fallthru
      _
    %3887 = vsyncpa [#allocation3], 1
    %3888 = vsyncpa [#allocation6], 1
    %3889 = vsyncpa [#allocation9], 1
    %3890 = vsyncpa [#allocation12], 1
    %3891 = vsyncpa [#allocation4], 1

</llo_original>
